<compile_context>
chip_gen: v7x
topology: tpu7x:2x2x1
jax: 0.10.0
libtpu: 0.0.40
codegen_flags: <defaults>
</compile_context>

<pallas_src>
import jax
import jax.numpy as jnp
import numpy as np
from jax.experimental import pallas as pl
from jax.experimental.pallas import tpu as pltpu


# --------------------------------------------------------------------------- #
# Single-pass kernel: one batch element's whole (C, D, H*W) slab in VMEM.
# --------------------------------------------------------------------------- #
def _pe_single_kernel(x_ref, wd_ref, mhw_ref, ewh_ref, vhw_ref,
                      w1_ref, b1_ref, w2_ref, b2_ref, out_ref, fmap_ref):
    """x_ref: (1, C, D, HW) -> out_ref: (1, C, D, HW), fmap_ref: (1, 1, D, HW).

    wd_ref : (D, 1)       D_squeeze weights
    mhw_ref: (HW, W+H)    [M_H | M_W] squeeze matrices over fused h*W+w axis
    ewh_ref: (W+H, HW)    [E_W ; E_H] broadcast-back matrices
    vhw_ref: (1, HW)      vHW[h*W+w] = wH[h] * wW[w]
    w1/b1  : (Cr, C)/(Cr, 1)  first 1x1x1 conv (bias = effective, see wrapper)
    w2/b2  : (C, Cr)/(C, 1)   second 1x1x1 conv
    """
    f32 = jnp.float32
    C, D, HW = x_ref.shape[1], x_ref.shape[2], x_ref.shape[3]

    x = x_ref[0].astype(f32)                                        # (C, D, HW)
    wd = wd_ref[...].astype(f32)                                    # (D, 1)

    # D-squeeze (VPU mul + sublane reduce): sum_d wD[d] * x         -> (C, HW)
    xd = jnp.sum(x * wd[None, :, :], axis=1)
    # W- and H-squeeze in ONE MXU dot (contraction over the fused lane axis).
    swh = jnp.dot(xd, mhw_ref[...], preferred_element_type=f32)     # (C, W+H)
    # Broadcast both projections back onto the fused lane axis (one dot).
    sp = jnp.dot(swh, ewh_ref[...], preferred_element_type=f32)     # (C, HW)

    # D-projection varies per depth slice: sum_{hw} wH[h]*wW[w]*x[c,d,hw].
    sd = jnp.sum(x * vhw_ref[...][None, :, :], axis=2)              # (C, D)

    # final[c,d,hw] = sp[c,hw] + sd[c,d]   (squeeze biases folded into b1_eff)
    final = (sp[:, None, :] + sd[:, :, None]).reshape(C, D * HW)

    # Excite bottleneck: two MXU dots with f32 accumulation over the full slab.
    z1 = jnp.maximum(
        jnp.dot(w1_ref[...], final, preferred_element_type=f32) + b1_ref[...], 0.0)
    gate = jax.nn.sigmoid(
        jnp.dot(w2_ref[...], z1, preferred_element_type=f32) + b2_ref[...])

    out_ref[0] = (x * gate.reshape(C, D, HW)).astype(out_ref.dtype)
    fmap_ref[0] = jnp.sum(x * x, axis=0, keepdims=True).astype(fmap_ref.dtype)


# --------------------------------------------------------------------------- #
# Two-pass fallback (large D): pass 1 = stats (+ fmap), pass 2 = apply.
# --------------------------------------------------------------------------- #
def _pe_stats_kernel(x_ref, wd_ref, mhw_ref, swh_ref, fmap_ref, acc_ref):
    """Per (batch, depth-tile): accumulate raw [W | H] projections, emit fmap.

    x_ref   : (1, C, TD, HW)
    wd_ref  : (TD, 1)        D_squeeze weights for this depth tile
    mhw_ref : (HW, W+H)      [M_H | M_W]
    swh_ref : (1, C, W+H)    resident output block (same block for every t)
    fmap_ref: (1, 1, TD, HW) sum_c x^2 for this tile (gate-independent)
    acc_ref : (C, W+H)       f32 VMEM accumulator
    """
    f32 = jnp.float32
    t = pl.program_id(1)

    @pl.when(t == 0)
    def _():
        acc_ref[...] = jnp.zeros_like(acc_ref)

    x = x_ref[0].astype(f32)                                        # (C, TD, HW)
    wd = wd_ref[...].astype(f32)                                    # (TD, 1)
    xd = jnp.sum(x * wd[None, :, :], axis=1)                        # (C, HW)
    acc_ref[...] += jnp.dot(xd, mhw_ref[...], preferred_element_type=f32)
    swh_ref[0] = acc_ref[...]

    fmap_ref[0] = jnp.sum(x * x, axis=0, keepdims=True).astype(fmap_ref.dtype)


def _pe_apply_kernel(x_ref, sp_ref, vhw_ref, w1_ref, b1_ref, w2_ref, b2_ref,
                     out_ref):
    """Per (batch, depth-tile): rebuild `final` for the WHOLE tile, excite, gate.

    x_ref : (1, C, TD, HW)
    sp_ref: (1, C, HW)   precomputed sq_w/sq_h broadcast (biases in b1_eff)
    vhw_ref: (1, HW)
    """
    f32 = jnp.float32
    C, TD, HW = x_ref.shape[1], x_ref.shape[2], x_ref.shape[3]

    x = x_ref[0].astype(f32)                                        # (C, TD, HW)
    sp = sp_ref[0]                                                  # (C, HW)
    sd = jnp.sum(x * vhw_ref[...][None, :, :], axis=2)              # (C, TD)

    final = (sp[:, None, :] + sd[:, :, None]).reshape(C, TD * HW)
    z1 = jnp.maximum(
        jnp.dot(w1_ref[...], final, preferred_element_type=f32) + b1_ref[...], 0.0)
    gate = jax.nn.sigmoid(
        jnp.dot(w2_ref[...], z1, preferred_element_type=f32) + b2_ref[...])
    out_ref[0] = (x * gate.reshape(C, TD, HW)).astype(out_ref.dtype)


def _choose_td(D, per_d_f32_bytes, budget_bytes):
    """Largest depth tile that divides D, is a multiple of 8 (or == D), and keeps
    the f32 x tile within budget.  Falls back to the smallest valid tile."""
    cands = [td for td in range(8, D, 8) if D % td == 0]
    cands.append(D)
    fitting = [td for td in cands if td * per_d_f32_bytes <= budget_bytes]
    return max(fitting) if fitting else min(cands)


def project_excite(x, params, *, force_two_pass=False, d_tile=None,
                   single_pass_slab_limit_bytes=3 * 1024 * 1024,
                   tile_budget_bytes=2 * 1024 * 1024):
    """Forward pass of ProjectExciteLayer.

    x: (B, C, D, H, W).  params mirror the PyTorch module:
      wD (D,), bD ()  <- D_squeeze (Conv3d(D,1,1)) weight/bias
      wH (H,), bH ()  <- H_squeeze
      wW (W,), bW ()  <- W_squeeze
      w1 (Cr, C), b1 (Cr,) <- convModule[0]  (Conv3d(C, Cr, 1))
      w2 (C, Cr), b2 (C,)  <- convModule[2]  (Conv3d(Cr, C, 1))
    Returns (output_tensor, feature_mapping) like the PyTorch module.
    """
    B, C, D, H, W = x.shape
    HW = H * W
    Cr = params["w1"].shape[0]
    f32 = jnp.float32

    wD = params["wD"].astype(f32).reshape(D, 1)
    wH = params["wH"].astype(f32)
    wW = params["wW"].astype(f32)
    bD = params["bD"].astype(f32)
    bH = params["bH"].astype(f32)
    bW = params["bW"].astype(f32)
    w1 = params["w1"].astype(f32)
    w2 = params["w2"].astype(f32)

    eye_w = jnp.eye(W, dtype=f32)
    eye_h = jnp.eye(H, dtype=f32)
    # Squeeze matrices over the fused (h*W + w) lane axis, concatenated so both
    # W- and H-squeeze ride ONE MXU dot.
    m_h = (wH[:, None, None] * eye_w[None, :, :]).reshape(HW, W)    # wH[h]*d(w,w')
    m_w = (eye_h[:, None, :] * wW[None, :, None]).reshape(HW, H)    # wW[w]*d(h,h')
    m_hw = jnp.concatenate([m_h, m_w], axis=1)                      # (HW, W+H)
    # Broadcast-back matrices, concatenated.
    e_w = jnp.tile(eye_w, (1, H))                                   # (W, HW)
    e_h = jnp.repeat(eye_h, W, axis=1)                              # (H, HW)
    e_wh = jnp.concatenate([e_w, e_h], axis=0)                      # (W+H, HW)
    v_hw = (wH[:, None] * wW[None, :]).reshape(1, HW)               # wH[h]*wW[w]

    # All squeeze biases are constant over (c,d,h,w):
    #   final_true = final_raw + k,
    #   k = (bD*sum(wH)+bH) + (bD*sum(wW)+bW) + (bH*sum(wW)+bW)
    # Fold k into the first excite bias (per output channel r: + k*sum_c w1[r,c]).
    k = (bD * jnp.sum(wH) + bH) + (bD * jnp.sum(wW) + bW) + (bH * jnp.sum(wW) + bW)
    b1_eff = (params["b1"].astype(f32) + k * jnp.sum(w1, axis=1)).reshape(Cr, 1)
    b2 = params["b2"].astype(f32).reshape(C, 1)

    # Lane-dense view: fuse H and W (free reshape) so block last dims are H*W.
    xf = x.reshape(B, C, D, HW)

    slab_f32_bytes = C * D * HW * 4
    use_single = (not force_two_pass) and slab_f32_bytes <= single_pass_slab_limit_bytes

    if use_single:
        # ---- single pass: x read from HBM once, everything on the slab -----
        out_f, fmap_f = pl.pallas_call(
            _pe_single_kernel,
            out_shape=(
                jax.ShapeDtypeStruct((B, C, D, HW), x.dtype),
                jax.ShapeDtypeStruct((B, 1, D, HW), x.dtype),
            ),
            grid_spec=pltpu.PrefetchScalarGridSpec(
                num_scalar_prefetch=0,
                grid=(B,),
                in_specs=[
                    pl.BlockSpec((1, C, D, HW), lambda b: (b, 0, 0, 0)),   # x slab
                    pl.BlockSpec((D, 1), lambda b: (0, 0)),                # wD
                    pl.BlockSpec((HW, W + H), lambda b: (0, 0)),           # [M_H|M_W]
                    pl.BlockSpec((W + H, HW), lambda b: (0, 0)),           # [E_W;E_H]
                    pl.BlockSpec((1, HW), lambda b: (0, 0)),               # vHW
                    pl.BlockSpec((Cr, C), lambda b: (0, 0)),               # w1
                    pl.BlockSpec((Cr, 1), lambda b: (0, 0)),               # b1_eff
                    pl.BlockSpec((C, Cr), lambda b: (0, 0)),               # w2
                    pl.BlockSpec((C, 1), lambda b: (0, 0)),                # b2
                ],
                out_specs=[
                    pl.BlockSpec((1, C, D, HW), lambda b: (b, 0, 0, 0)),
                    pl.BlockSpec((1, 1, D, HW), lambda b: (b, 0, 0, 0)),
                ],
            ),
            compiler_params=pltpu.CompilerParams(
                dimension_semantics=("parallel",),
                vmem_limit_bytes=32 * 1024 * 1024,
            ),
        )(xf, wD, m_hw, e_wh, v_hw, w1, b1_eff, w2, b2)
        return out_f.reshape(B, C, D, H, W), fmap_f.reshape(B, 1, D, H, W)

    # ---- two-pass fallback (per-batch slab too big for VMEM) ---------------
    per_d_f32_bytes = C * HW * 4
    TD = d_tile if d_tile is not None else _choose_td(D, per_d_f32_bytes,
                                                      tile_budget_bytes)
    assert D % TD == 0, "d_tile must divide D"
    n_dt = D // TD

    # pass 1 (stats): in-kernel accumulation of raw [W|H] projections + fmap.
    swh, fmap_f = pl.pallas_call(
        _pe_stats_kernel,
        out_shape=(
            jax.ShapeDtypeStruct((B, C, W + H), f32),
            jax.ShapeDtypeStruct((B, 1, D, HW), x.dtype),
        ),
        grid_spec=pltpu.PrefetchScalarGridSpec(
            num_scalar_prefetch=0,
            grid=(B, n_dt),
            in_specs=[
                pl.BlockSpec((1, C, TD, HW), lambda b, t: (b, 0, t, 0)),   # x tile
                pl.BlockSpec((TD, 1), lambda b, t: (t, 0)),                # wD tile
                pl.BlockSpec((HW, W + H), lambda b, t: (0, 0)),            # [M_H|M_W]
            ],
            out_specs=[
                pl.BlockSpec((1, C, W + H), lambda b, t: (b, 0, 0)),       # resident
                pl.BlockSpec((1, 1, TD, HW), lambda b, t: (b, 0, t, 0)),
            ],
            scratch_shapes=[pltpu.VMEM((C, W + H), f32)],
        ),
        compiler_params=pltpu.CompilerParams(
            dimension_semantics=("parallel", "arbitrary"),
            vmem_limit_bytes=32 * 1024 * 1024,
        ),
    )(xf, wD, m_hw)

    # sp[b, c, h*W + w] = sq_w[b,c,w] + sq_h[b,c,h]  (biases folded into b1_eff).
    sq_w = swh[:, :, :W]
    sq_h = swh[:, :, W:]
    sp = (sq_h[:, :, :, None] + sq_w[:, :, None, :]).reshape(B, C, HW)

    # pass 2 (apply): whole-tile vectorized excite + gate, one lane-dense store.
    out_f = pl.pallas_call(
        _pe_apply_kernel,
        out_shape=jax.ShapeDtypeStruct((B, C, D, HW), x.dtype),
        grid_spec=pltpu.PrefetchScalarGridSpec(
            num_scalar_prefetch=0,
            grid=(B, n_dt),
            in_specs=[
                pl.BlockSpec((1, C, TD, HW), lambda b, t: (b, 0, t, 0)),   # x tile
                pl.BlockSpec((1, C, HW), lambda b, t: (b, 0, 0)),          # sp
                pl.BlockSpec((1, HW), lambda b, t: (0, 0)),                # vHW
                pl.BlockSpec((Cr, C), lambda b, t: (0, 0)),                # w1
                pl.BlockSpec((Cr, 1), lambda b, t: (0, 0)),                # b1_eff
                pl.BlockSpec((C, Cr), lambda b, t: (0, 0)),                # w2
                pl.BlockSpec((C, 1), lambda b, t: (0, 0)),                 # b2
            ],
            out_specs=pl.BlockSpec((1, C, TD, HW), lambda b, t: (b, 0, t, 0)),
        ),
        compiler_params=pltpu.CompilerParams(
            dimension_semantics=("parallel", "parallel"),
            vmem_limit_bytes=32 * 1024 * 1024,
        ),
    )(xf, sp, v_hw, w1, b1_eff, w2, b2)

    return out_f.reshape(B, C, D, H, W), fmap_f.reshape(B, 1, D, H, W)


def ref_forward(x, p):
    """Pure-JAX reference following the PyTorch permute/conv sequence."""
    P = jax.lax.Precision.HIGHEST
    wD, bD = p["wD"], p["bD"]
    wH, bH = p["wH"], p["bH"]
    wW, bW = p["wW"], p["bW"]
    w1, b1, w2, b2 = p["w1"], p["b1"], p["w2"], p["b2"]

    s1d = jnp.einsum("bcdhw,d->bchw", x, wD, precision=P) + bD      # D_squeeze
    sq_w = jnp.einsum("bchw,h->bcw", s1d, wH, precision=P) + bH     # (B, C, W)
    sq_h = jnp.einsum("bchw,w->bch", s1d, wW, precision=P) + bW     # (B, C, H)
    tmp = jnp.einsum("bcdhw,h->bcdw", x, wH, precision=P) + bH
    sq_d = jnp.einsum("bcdw,w->bcd", tmp, wW, precision=P) + bW     # (B, C, D)

    final = (sq_w[:, :, None, None, :] + sq_h[:, :, None, :, None]
             + sq_d[:, :, :, None, None])                           # (B,C,D,H,W)
    z1 = jax.nn.relu(jnp.einsum("rc,bcdhw->brdhw", w1, final, precision=P)
                     + b1[None, :, None, None, None])
    gate = jax.nn.sigmoid(jnp.einsum("cr,brdhw->bcdhw", w2, z1, precision=P)
                          + b2[None, :, None, None, None])
    return x * gate, jnp.sum(x * x, axis=1, keepdims=True)


if __name__ == "__main__":
    B, C, D, H, W = 2, 16, 16, 8, 16      # H*W = 128 -> one full lane row
    reduction_ratio = 2
    Cr = C // reduction_ratio

    key = jax.random.PRNGKey(0)
    ks = jax.random.split(key, 11)
    params = {
        "wD": 0.3 * jax.random.normal(ks[0], (D,), jnp.float32),
        "bD": 0.1 * jax.random.normal(ks[1], (), jnp.float32),
        "wH": 0.3 * jax.random.normal(ks[2], (H,), jnp.float32),
        "bH": 0.1 * jax.random.normal(ks[3], (), jnp.float32),
        "wW": 0.3 * jax.random.normal(ks[4], (W,), jnp.float32),
        "bW": 0.1 * jax.random.normal(ks[5], (), jnp.float32),
        "w1": 0.5 * jax.random.normal(ks[6], (Cr, C), jnp.float32),
        "b1": 0.1 * jax.random.normal(ks[7], (Cr,), jnp.float32),
        "w2": 0.5 * jax.random.normal(ks[8], (C, Cr), jnp.float32),
        "b2": 0.1 * jax.random.normal(ks[9], (C,), jnp.float32),
    }
    x = jax.random.normal(ks[10], (B, C, D, H, W), jnp.float32)

    ref_out, ref_fmap = ref_forward(x, params)

    # Default path: single-pass kernel (per-batch slab fits VMEM budget).
    out, fmap = project_excite(x, params)
    out = jax.block_until_ready(out)
    fmap = jax.block_until_ready(fmap)
    np.testing.assert_allclose(np.asarray(out), np.asarray(ref_out),
                               rtol=2e-5, atol=2e-5)
    np.testing.assert_allclose(np.asarray(fmap), np.asarray(ref_fmap),
                               rtol=2e-5, atol=2e-5)

    # Also exercise the tiled two-pass fallback (forced, 2 depth tiles).
    out2, fmap2 = project_excite(x, params, force_two_pass=True, d_tile=8)
    out2 = jax.block_until_ready(out2)
    fmap2 = jax.block_until_ready(fmap2)
    np.testing.assert_allclose(np.asarray(out2), np.asarray(ref_out),
                               rtol=2e-5, atol=2e-5)
    np.testing.assert_allclose(np.asarray(fmap2), np.asarray(ref_fmap),
                               rtol=2e-5, atol=2e-5)

    print("KERNEL_OK")
</pallas_src>

<mosaic_0001>
module attributes {stable_mosaic.version = 11 : i64} {
  func.func @_pe_single_kernel(%arg0: i32, %arg1: memref<1x16x16x128xf32, #tpu.memory_space<vmem>>, %arg2: memref<16x1xf32, #tpu.memory_space<vmem>>, %arg3: memref<128x24xf32, #tpu.memory_space<vmem>>, %arg4: memref<24x128xf32, #tpu.memory_space<vmem>>, %arg5: memref<1x128xf32, #tpu.memory_space<vmem>>, %arg6: memref<8x16xf32, #tpu.memory_space<vmem>>, %arg7: memref<8x1xf32, #tpu.memory_space<vmem>>, %arg8: memref<16x8xf32, #tpu.memory_space<vmem>>, %arg9: memref<16x1xf32, #tpu.memory_space<vmem>>, %arg10: memref<1x16x16x128xf32, #tpu.memory_space<vmem>>, %arg11: memref<1x1x16x128xf32, #tpu.memory_space<vmem>>) attributes {dimension_semantics = [#tpu.dimension_semantics<parallel>], iteration_bounds = array<i64: 2>, scalar_prefetch = 0 : i64, scratch_operands = 0 : i64, tpu.core_type = #tpu.core_type<tc>, window_params = [{transform_indices = @transform_0, window_bounds = array<i64: 1, 16, 16, 128>}, {pipeline_mode = #tpu.pipeline_mode<synchronous>, transform_indices = @transform_1, window_bounds = array<i64: 16, 1>}, {pipeline_mode = #tpu.pipeline_mode<synchronous>, transform_indices = @transform_2, window_bounds = array<i64: 128, 24>}, {pipeline_mode = #tpu.pipeline_mode<synchronous>, transform_indices = @transform_3, window_bounds = array<i64: 24, 128>}, {pipeline_mode = #tpu.pipeline_mode<synchronous>, transform_indices = @transform_4, window_bounds = array<i64: 1, 128>}, {pipeline_mode = #tpu.pipeline_mode<synchronous>, transform_indices = @transform_5, window_bounds = array<i64: 8, 16>}, {pipeline_mode = #tpu.pipeline_mode<synchronous>, transform_indices = @transform_6, window_bounds = array<i64: 8, 1>}, {pipeline_mode = #tpu.pipeline_mode<synchronous>, transform_indices = @transform_7, window_bounds = array<i64: 16, 8>}, {pipeline_mode = #tpu.pipeline_mode<synchronous>, transform_indices = @transform_8, window_bounds = array<i64: 16, 1>}, {transform_indices = @transform_9, window_bounds = array<i64: 1, 16, 16, 128>}, {transform_indices = @transform_10, window_bounds = array<i64: 1, 1, 16, 128>}]} {
    %c0 = arith.constant 0 : index
    %c0_0 = arith.constant 0 : index
    %c0_1 = arith.constant 0 : index
    %c0_2 = arith.constant 0 : index
    %0 = vector.load %arg1[%c0, %c0_0, %c0_1, %c0_2] : memref<1x16x16x128xf32, #tpu.memory_space<vmem>>, vector<1x16x16x128xf32>
    %1 = vector.shape_cast %0 : vector<1x16x16x128xf32> to vector<16x16x128xf32>
    %c0_3 = arith.constant 0 : index
    %c0_4 = arith.constant 0 : index
    %2 = vector.load %arg2[%c0_3, %c0_4] : memref<16x1xf32, #tpu.memory_space<vmem>>, vector<16x1xf32>
    %3 = vector.shape_cast %2 : vector<16x1xf32> to vector<1x16x1xf32>
    %4 = vector.broadcast %3 : vector<1x16x1xf32> to vector<16x16x128xf32>
    %5 = arith.mulf %1, %4 : vector<16x16x128xf32>
    %cst = arith.constant dense<0.000000e+00> : vector<16x128xf32>
    %6 = vector.multi_reduction <add>, %5, %cst [1] : vector<16x16x128xf32> to vector<16x128xf32>
    %c0_5 = arith.constant 0 : index
    %c0_6 = arith.constant 0 : index
    %7 = vector.load %arg3[%c0_5, %c0_6] : memref<128x24xf32, #tpu.memory_space<vmem>>, vector<128x24xf32>
    %cst_7 = arith.constant dense<0.000000e+00> : vector<16x24xf32>
    %8 = tpu.matmul %6, %7, %cst_7 {dimension_numbers = #tpu.dot_dimension_numbers<[1], [0], [0], [1], [0, 0, 1, 1], [], []>} : vector<16x128xf32>, vector<128x24xf32>, vector<16x24xf32> -> vector<16x24xf32>
    %c0_8 = arith.constant 0 : index
    %c0_9 = arith.constant 0 : index
    %9 = vector.load %arg4[%c0_8, %c0_9] : memref<24x128xf32, #tpu.memory_space<vmem>>, vector<24x128xf32>
    %cst_10 = arith.constant dense<0.000000e+00> : vector<16x128xf32>
    %10 = tpu.matmul %8, %9, %cst_10 {dimension_numbers = #tpu.dot_dimension_numbers<[1], [0], [0], [1], [0, 0, 1, 1], [], []>} : vector<16x24xf32>, vector<24x128xf32>, vector<16x128xf32> -> vector<16x128xf32>
    %c0_11 = arith.constant 0 : index
    %c0_12 = arith.constant 0 : index
    %11 = vector.load %arg5[%c0_11, %c0_12] : memref<1x128xf32, #tpu.memory_space<vmem>>, vector<1x128xf32>
    %12 = vector.shape_cast %11 : vector<1x128xf32> to vector<1x1x128xf32>
    %13 = vector.broadcast %12 : vector<1x1x128xf32> to vector<16x16x128xf32>
    %14 = arith.mulf %1, %13 : vector<16x16x128xf32>
    %cst_13 = arith.constant dense<0.000000e+00> : vector<16x16xf32>
    %15 = vector.multi_reduction <add>, %14, %cst_13 [2] : vector<16x16x128xf32> to vector<16x16xf32>
    %16 = vector.shape_cast %10 : vector<16x128xf32> to vector<16x1x128xf32>
    %17 = vector.shape_cast %15 : vector<16x16xf32> to vector<16x16x1xf32>
    %18 = vector.broadcast %16 : vector<16x1x128xf32> to vector<16x16x128xf32>
    %19 = vector.broadcast %17 : vector<16x16x1xf32> to vector<16x16x128xf32>
    %20 = arith.addf %18, %19 : vector<16x16x128xf32>
    %21 = vector.shape_cast %20 : vector<16x16x128xf32> to vector<16x2048xf32>
    %c0_14 = arith.constant 0 : index
    %c0_15 = arith.constant 0 : index
    %22 = vector.load %arg6[%c0_14, %c0_15] : memref<8x16xf32, #tpu.memory_space<vmem>>, vector<8x16xf32>
    %cst_16 = arith.constant dense<0.000000e+00> : vector<8x2048xf32>
    %23 = tpu.matmul %22, %21, %cst_16 {dimension_numbers = #tpu.dot_dimension_numbers<[1], [0], [0], [1], [0, 0, 1, 1], [], []>} : vector<8x16xf32>, vector<16x2048xf32>, vector<8x2048xf32> -> vector<8x2048xf32>
    %c0_17 = arith.constant 0 : index
    %c0_18 = arith.constant 0 : index
    %24 = vector.load %arg7[%c0_17, %c0_18] : memref<8x1xf32, #tpu.memory_space<vmem>>, vector<8x1xf32>
    %25 = vector.broadcast %24 : vector<8x1xf32> to vector<8x2048xf32>
    %26 = arith.addf %23, %25 : vector<8x2048xf32>
    %cst_19 = arith.constant 0.000000e+00 : f32
    %27 = vector.broadcast %cst_19 : f32 to vector<8x2048xf32>
    %28 = arith.maximumf %26, %27 : vector<8x2048xf32>
    %c0_20 = arith.constant 0 : index
    %c0_21 = arith.constant 0 : index
    %29 = vector.load %arg8[%c0_20, %c0_21] : memref<16x8xf32, #tpu.memory_space<vmem>>, vector<16x8xf32>
    %cst_22 = arith.constant dense<0.000000e+00> : vector<16x2048xf32>
    %30 = tpu.matmul %29, %28, %cst_22 {dimension_numbers = #tpu.dot_dimension_numbers<[1], [0], [0], [1], [0, 0, 1, 1], [], []>} : vector<16x8xf32>, vector<8x2048xf32>, vector<16x2048xf32> -> vector<16x2048xf32>
    %c0_23 = arith.constant 0 : index
    %c0_24 = arith.constant 0 : index
    %31 = vector.load %arg9[%c0_23, %c0_24] : memref<16x1xf32, #tpu.memory_space<vmem>>, vector<16x1xf32>
    %32 = vector.broadcast %31 : vector<16x1xf32> to vector<16x2048xf32>
    %33 = arith.addf %30, %32 : vector<16x2048xf32>
    %34 = arith.negf %33 : vector<16x2048xf32>
    %35 = math.exp %34 : vector<16x2048xf32>
    %cst_25 = arith.constant 1.000000e+00 : f32
    %36 = vector.broadcast %cst_25 : f32 to vector<16x2048xf32>
    %37 = arith.addf %36, %35 : vector<16x2048xf32>
    %38 = arith.divf %36, %37 : vector<16x2048xf32>
    %39 = vector.shape_cast %38 : vector<16x2048xf32> to vector<16x16x128xf32>
    %40 = arith.mulf %1, %39 : vector<16x16x128xf32>
    %c0_26 = arith.constant 0 : index
    %c0_27 = arith.constant 0 : index
    %c0_28 = arith.constant 0 : index
    %c0_29 = arith.constant 0 : index
    %41 = vector.load %arg10[%c0_26, %c0_27, %c0_28, %c0_29] : memref<1x16x16x128xf32, #tpu.memory_space<vmem>>, vector<1x16x16x128xf32>
    %42 = vector.shape_cast %41 : vector<1x16x16x128xf32> to vector<16x16x128xf32>
    %43 = vector.shape_cast %40 : vector<16x16x128xf32> to vector<1x16x16x128xf32>
    tpu.vector_store %arg10[%c0_26, %c0_27, %c0_28, %c0_29], %43 {strides = array<i32>} : memref<1x16x16x128xf32, #tpu.memory_space<vmem>>, vector<1x16x16x128xf32>,
    %44 = arith.mulf %1, %1 : vector<16x16x128xf32>
    %cst_30 = arith.constant dense<0.000000e+00> : vector<16x128xf32>
    %45 = vector.multi_reduction <add>, %44, %cst_30 [0] : vector<16x16x128xf32> to vector<16x128xf32>
    %46 = vector.shape_cast %45 : vector<16x128xf32> to vector<1x16x128xf32>
    %c0_31 = arith.constant 0 : index
    %c0_32 = arith.constant 0 : index
    %c0_33 = arith.constant 0 : index
    %c0_34 = arith.constant 0 : index
    %47 = vector.load %arg11[%c0_31, %c0_32, %c0_33, %c0_34] : memref<1x1x16x128xf32, #tpu.memory_space<vmem>>, vector<1x1x16x128xf32>
    %48 = vector.shape_cast %47 : vector<1x1x16x128xf32> to vector<1x16x128xf32>
    %49 = vector.shape_cast %46 : vector<1x16x128xf32> to vector<1x1x16x128xf32>
    tpu.vector_store %arg11[%c0_31, %c0_32, %c0_33, %c0_34], %49 {strides = array<i32>} : memref<1x1x16x128xf32, #tpu.memory_space<vmem>>, vector<1x1x16x128xf32>,
    return
  }
  func.func @transform_0(%arg0: i32) -> (i32, i32, i32, i32) {
    %c0_i32 = arith.constant 0 : i32
    %c0_i32_0 = arith.constant 0 : i32
    %c0_i32_1 = arith.constant 0 : i32
    %c0_i32_2 = arith.constant 0 : i32
    return %arg0, %c0_i32, %c0_i32_0, %c0_i32_1 : i32, i32, i32, i32
  }
  func.func @transform_1(%arg0: i32) -> (i32, i32) {
    %c0_i32 = arith.constant 0 : i32
    %c0_i32_0 = arith.constant 0 : i32
    %c0_i32_1 = arith.constant 0 : i32
    return %c0_i32, %c0_i32_0 : i32, i32
  }
  func.func @transform_2(%arg0: i32) -> (i32, i32) {
    %c0_i32 = arith.constant 0 : i32
    %c0_i32_0 = arith.constant 0 : i32
    %c0_i32_1 = arith.constant 0 : i32
    return %c0_i32, %c0_i32_0 : i32, i32
  }
  func.func @transform_3(%arg0: i32) -> (i32, i32) {
    %c0_i32 = arith.constant 0 : i32
    %c0_i32_0 = arith.constant 0 : i32
    %c0_i32_1 = arith.constant 0 : i32
    return %c0_i32, %c0_i32_0 : i32, i32
  }
  func.func @transform_4(%arg0: i32) -> (i32, i32) {
    %c0_i32 = arith.constant 0 : i32
    %c0_i32_0 = arith.constant 0 : i32
    %c0_i32_1 = arith.constant 0 : i32
    return %c0_i32, %c0_i32_0 : i32, i32
  }
  func.func @transform_5(%arg0: i32) -> (i32, i32) {
    %c0_i32 = arith.constant 0 : i32
    %c0_i32_0 = arith.constant 0 : i32
    %c0_i32_1 = arith.constant 0 : i32
    return %c0_i32, %c0_i32_0 : i32, i32
  }
  func.func @transform_6(%arg0: i32) -> (i32, i32) {
    %c0_i32 = arith.constant 0 : i32
    %c0_i32_0 = arith.constant 0 : i32
    %c0_i32_1 = arith.constant 0 : i32
    return %c0_i32, %c0_i32_0 : i32, i32
  }
  func.func @transform_7(%arg0: i32) -> (i32, i32) {
    %c0_i32 = arith.constant 0 : i32
    %c0_i32_0 = arith.constant 0 : i32
    %c0_i32_1 = arith.constant 0 : i32
    return %c0_i32, %c0_i32_0 : i32, i32
  }
  func.func @transform_8(%arg0: i32) -> (i32, i32) {
    %c0_i32 = arith.constant 0 : i32
    %c0_i32_0 = arith.constant 0 : i32
    %c0_i32_1 = arith.constant 0 : i32
    return %c0_i32, %c0_i32_0 : i32, i32
  }
  func.func @transform_9(%arg0: i32) -> (i32, i32, i32, i32) {
    %c0_i32 = arith.constant 0 : i32
    %c0_i32_0 = arith.constant 0 : i32
    %c0_i32_1 = arith.constant 0 : i32
    %c0_i32_2 = arith.constant 0 : i32
    return %arg0, %c0_i32, %c0_i32_0, %c0_i32_1 : i32, i32, i32, i32
  }
  func.func @transform_10(%arg0: i32) -> (i32, i32, i32, i32) {
    %c0_i32 = arith.constant 0 : i32
    %c0_i32_0 = arith.constant 0 : i32
    %c0_i32_1 = arith.constant 0 : i32
    %c0_i32_2 = arith.constant 0 : i32
    return %arg0, %c0_i32, %c0_i32_0, %c0_i32_1 : i32, i32, i32, i32
  }
}

</mosaic_0001>

<llo_original>
// kernel: tpu_custom_call.1
$region0: #{tpu_custom_call.1}
  #allocation0 [shape = 'u32[]', space=smem, size = 0x4, offset = 0x4, fixed_abs, tag = 'smem constant byte address 0x4 - core index']
  #allocation1 [shape = 'u32[144,128]{1,0:T(1,128)}', space=vmem, size = 0x12000, scoped, tag = 'internal scratch']
  %s0 = inlined_call_operand.hbm [shape: f32[2,16,16,128], index: 0, kind: input, shape index: {}]
  %s1 = inlined_call_operand.vmem [shape: f32[16,1], index: 1, kind: input, shape index: {}]
  %s2 = inlined_call_operand.vmem [shape: f32[128,24], index: 2, kind: input, shape index: {}]
  %s3 = inlined_call_operand.vmem [shape: f32[24,128], index: 3, kind: input, shape index: {}]
  %s4 = inlined_call_operand.vmem [shape: f32[1,128], index: 4, kind: input, shape index: {}]
  %s5 = inlined_call_operand.vmem [shape: f32[8,16], index: 5, kind: input, shape index: {}]
  %s6 = inlined_call_operand.vmem [shape: f32[8,1], index: 6, kind: input, shape index: {}]
  %s7 = inlined_call_operand.vmem [shape: f32[16,8], index: 7, kind: input, shape index: {}]
  %s8 = inlined_call_operand.vmem [shape: f32[16,1], index: 8, kind: input, shape index: {}]
  %s9 = inlined_call_operand.hbm [shape: f32[2,16,16,128], index: 9, kind: output, shape index: {0}]
  %s10 = inlined_call_operand.hbm [shape: f32[2,1,16,128], index: 10, kind: output, shape index: {1}]
  %11 = xla_tuple %s9, %s10
  %s12 = sld [smem:[#allocation0]]
  $region81: #{tpu_custom_call.1} parent=0
    _
  %s14 = ssub.s32 1, %s12
  %s15 = scalar_select 0, %s14, %s12
  $region1: #{tpu_custom_call.1} parent=0
    #allocation2 [shape = 'u8[262144]{0}', space=vmem, size = 0x40000, scoped, tag = 'input window, operand 0']
    #allocation3 [shape = 's32[2]{0}', space=sflag, size = 0x8, scoped, tag = 'scoped memory for tpu_custom_call.1']
    #allocation4 [shape = 's32[2]{0}', space=sflag, size = 0x8, scoped, tag = 'scoped memory for tpu_custom_call.1']
    #allocation5 [shape = 'u8[262144]{0}', space=vmem, size = 0x40000, scoped, tag = 'output window, operand 0']
    #allocation6 [shape = 'u8[16384]{0}', space=vmem, size = 0x4000, scoped, tag = 'output window, operand 1']
    #allocation7 [shape = 's32[2]{0}', space=sflag, size = 0x8, scoped, tag = 'scoped memory for tpu_custom_call.1']
    %16 = vsyncpa [#allocation3], 0
    %s17 = scalar_lea.sflag [#allocation3], 1
    %18 = vsyncpa %s17, 0
    %19 = vsyncpa [#allocation4], 0
    %s20 = scalar_lea.sflag [#allocation4], 1
    %21 = vsyncpa %s20, 0
    %22 = vsyncpa [#allocation7], 0
    %s23 = scalar_lea.sflag [#allocation7], 1
    %24 = vsyncpa %s23, 0
    loop: start=0, step=1, limit=4
    $region2: #{tpu_custom_call.1} parent=1 // loop_pre_header
      _
    $region3: #{tpu_custom_call.1} parent=1 // loop_header
      %s26 = sphi 0, %s30
      %p27 = scmp.ge.s32.totalorder %s26, 4
      %s36 = sphi 0, %s38
      %s39 = sphi 0, %s36
      %s40 = sphi 0, %s39
      %s56 = sphi 0, %s40
      %s60 = sphi 0, %s60
      %s62 = sphi 0, %s60
      %s63 = sphi 0, %s62
      %s77 = sphi 0, %s63
      %s81 = sphi 0, %s81
      %s83 = sphi 0, %s81
      %s84 = sphi 0, %s83
      %s98 = sphi 0, %s84
      %s102 = sphi 0, %s102
      %s104 = sphi 0, %s102
      %s105 = sphi 0, %s104
      %s119 = sphi 0, %s105
      %s123 = sphi 0, %s123
      %s125 = sphi 0, %s123
      %s126 = sphi 0, %s125
      %s140 = sphi 0, %s126
      %s144 = sphi 0, %s144
      %s146 = sphi 0, %s144
      %s147 = sphi 0, %s146
      %s161 = sphi 0, %s147
      %s165 = sphi 0, %s165
      %s167 = sphi 0, %s165
      %s168 = sphi 0, %s167
      %s182 = sphi 0, %s168
      %s186 = sphi 0, %s186
      %s188 = sphi 0, %s186
      %s189 = sphi 0, %s188
      %s203 = sphi 0, %s189
      %s207 = sphi 0, %s207
      %s209 = sphi 0, %s207
      %s210 = sphi 0, %s209
      %s224 = sphi 0, %s210
      %s230 = sphi 0, %s232
      %s233 = sphi 0, %s230
      %s234 = sphi 0, %s233
      %s250 = sphi 0, %s234
      %s256 = sphi 0, %s258
      %s259 = sphi 0, %s256
      %s260 = sphi 0, %s259
      %s276 = sphi 0, %s260
    $region4: #{tpu_custom_call.1} parent=1 // loop_header_branch
      %29 = sbr.rel (%p27) target = $region8
    $region5: #{tpu_custom_call.1} parent=1 // loop_body
      %s31 = ssub.s32 %s26, 1
      %s32 = ssub.s32 %s26, 2
      %s33 = sadd.s32 %s26, 1
      %s34 = ssub.s32 %s26, %s33
      %p35 = scmp.eq.s32.totalorder %s34, 0
      %s37 = sadd.s32 %s36, 1
      %s38 = scalar_select %p35, %s36, %s37
      %p41 = pneg %p35
      %p42 = scmp.eq.s32.totalorder %s26, 1
      %p43 = por %p41, %p42
      %p44 = scmp.ne.s32.totalorder %s36, %s39
      %p45 = scmp.eq.s32.totalorder %s26, 0
      %p46 = por %p44, %p45
      %p47 = scmp.ne.s32.totalorder %s36, %s39
      %p48 = scmp.eq.s32.totalorder %s31, 1
      %p49 = por %p47, %p48
      %p50 = scmp.ne.s32.totalorder %s39, %s40
      %p51 = scmp.eq.s32.totalorder %s31, 0
      %p52 = por %p50, %p51
      %p53 = scmp.ne.s32.totalorder %s39, %s40
      %p54 = scmp.eq.s32.totalorder %s32, 1
      %p55 = por %p53, %p54
      %p57 = scmp.ne.s32.totalorder %s40, %s56
      %p58 = scmp.eq.s32.totalorder %s32, 0
      %p59 = por %p57, %p58
      %s61 = sadd.s32 %s60, 1
      %p64 = scmp.eq.s32.totalorder %s26, 1
      %p65 = scmp.ne.s32.totalorder %s60, %s62
      %p66 = scmp.eq.s32.totalorder %s26, 0
      %p67 = por %p65, %p66
      %p68 = scmp.ne.s32.totalorder %s60, %s62
      %p69 = scmp.eq.s32.totalorder %s31, 1
      %p70 = por %p68, %p69
      %p71 = scmp.ne.s32.totalorder %s62, %s63
      %p72 = scmp.eq.s32.totalorder %s31, 0
      %p73 = por %p71, %p72
      %p74 = scmp.ne.s32.totalorder %s62, %s63
      %p75 = scmp.eq.s32.totalorder %s32, 1
      %p76 = por %p74, %p75
      %p78 = scmp.ne.s32.totalorder %s63, %s77
      %p79 = scmp.eq.s32.totalorder %s32, 0
      %p80 = por %p78, %p79
      %s82 = sadd.s32 %s81, 1
      %p85 = scmp.eq.s32.totalorder %s26, 1
      %p86 = scmp.ne.s32.totalorder %s81, %s83
      %p87 = scmp.eq.s32.totalorder %s26, 0
      %p88 = por %p86, %p87
      %p89 = scmp.ne.s32.totalorder %s81, %s83
      %p90 = scmp.eq.s32.totalorder %s31, 1
      %p91 = por %p89, %p90
      %p92 = scmp.ne.s32.totalorder %s83, %s84
      %p93 = scmp.eq.s32.totalorder %s31, 0
      %p94 = por %p92, %p93
      %p95 = scmp.ne.s32.totalorder %s83, %s84
      %p96 = scmp.eq.s32.totalorder %s32, 1
      %p97 = por %p95, %p96
      %p99 = scmp.ne.s32.totalorder %s84, %s98
      %p100 = scmp.eq.s32.totalorder %s32, 0
      %p101 = por %p99, %p100
      %s103 = sadd.s32 %s102, 1
      %p106 = scmp.eq.s32.totalorder %s26, 1
      %p107 = scmp.ne.s32.totalorder %s102, %s104
      %p108 = scmp.eq.s32.totalorder %s26, 0
      %p109 = por %p107, %p108
      %p110 = scmp.ne.s32.totalorder %s102, %s104
      %p111 = scmp.eq.s32.totalorder %s31, 1
      %p112 = por %p110, %p111
      %p113 = scmp.ne.s32.totalorder %s104, %s105
      %p114 = scmp.eq.s32.totalorder %s31, 0
      %p115 = por %p113, %p114
      %p116 = scmp.ne.s32.totalorder %s104, %s105
      %p117 = scmp.eq.s32.totalorder %s32, 1
      %p118 = por %p116, %p117
      %p120 = scmp.ne.s32.totalorder %s105, %s119
      %p121 = scmp.eq.s32.totalorder %s32, 0
      %p122 = por %p120, %p121
      %s124 = sadd.s32 %s123, 1
      %p127 = scmp.eq.s32.totalorder %s26, 1
      %p128 = scmp.ne.s32.totalorder %s123, %s125
      %p129 = scmp.eq.s32.totalorder %s26, 0
      %p130 = por %p128, %p129
      %p131 = scmp.ne.s32.totalorder %s123, %s125
      %p132 = scmp.eq.s32.totalorder %s31, 1
      %p133 = por %p131, %p132
      %p134 = scmp.ne.s32.totalorder %s125, %s126
      %p135 = scmp.eq.s32.totalorder %s31, 0
      %p136 = por %p134, %p135
      %p137 = scmp.ne.s32.totalorder %s125, %s126
      %p138 = scmp.eq.s32.totalorder %s32, 1
      %p139 = por %p137, %p138
      %p141 = scmp.ne.s32.totalorder %s126, %s140
      %p142 = scmp.eq.s32.totalorder %s32, 0
      %p143 = por %p141, %p142
      %s145 = sadd.s32 %s144, 1
      %p148 = scmp.eq.s32.totalorder %s26, 1
      %p149 = scmp.ne.s32.totalorder %s144, %s146
      %p150 = scmp.eq.s32.totalorder %s26, 0
      %p151 = por %p149, %p150
      %p152 = scmp.ne.s32.totalorder %s144, %s146
      %p153 = scmp.eq.s32.totalorder %s31, 1
      %p154 = por %p152, %p153
      %p155 = scmp.ne.s32.totalorder %s146, %s147
      %p156 = scmp.eq.s32.totalorder %s31, 0
      %p157 = por %p155, %p156
      %p158 = scmp.ne.s32.totalorder %s146, %s147
      %p159 = scmp.eq.s32.totalorder %s32, 1
      %p160 = por %p158, %p159
      %p162 = scmp.ne.s32.totalorder %s147, %s161
      %p163 = scmp.eq.s32.totalorder %s32, 0
      %p164 = por %p162, %p163
      %s166 = sadd.s32 %s165, 1
      %p169 = scmp.eq.s32.totalorder %s26, 1
      %p170 = scmp.ne.s32.totalorder %s165, %s167
      %p171 = scmp.eq.s32.totalorder %s26, 0
      %p172 = por %p170, %p171
      %p173 = scmp.ne.s32.totalorder %s165, %s167
      %p174 = scmp.eq.s32.totalorder %s31, 1
      %p175 = por %p173, %p174
      %p176 = scmp.ne.s32.totalorder %s167, %s168
      %p177 = scmp.eq.s32.totalorder %s31, 0
      %p178 = por %p176, %p177
      %p179 = scmp.ne.s32.totalorder %s167, %s168
      %p180 = scmp.eq.s32.totalorder %s32, 1
      %p181 = por %p179, %p180
      %p183 = scmp.ne.s32.totalorder %s168, %s182
      %p184 = scmp.eq.s32.totalorder %s32, 0
      %p185 = por %p183, %p184
      %s187 = sadd.s32 %s186, 1
      %p190 = scmp.eq.s32.totalorder %s26, 1
      %p191 = scmp.ne.s32.totalorder %s186, %s188
      %p192 = scmp.eq.s32.totalorder %s26, 0
      %p193 = por %p191, %p192
      %p194 = scmp.ne.s32.totalorder %s186, %s188
      %p195 = scmp.eq.s32.totalorder %s31, 1
      %p196 = por %p194, %p195
      %p197 = scmp.ne.s32.totalorder %s188, %s189
      %p198 = scmp.eq.s32.totalorder %s31, 0
      %p199 = por %p197, %p198
      %p200 = scmp.ne.s32.totalorder %s188, %s189
      %p201 = scmp.eq.s32.totalorder %s32, 1
      %p202 = por %p200, %p201
      %p204 = scmp.ne.s32.totalorder %s189, %s203
      %p205 = scmp.eq.s32.totalorder %s32, 0
      %p206 = por %p204, %p205
      %s208 = sadd.s32 %s207, 1
      %p211 = scmp.eq.s32.totalorder %s26, 1
      %p212 = scmp.ne.s32.totalorder %s207, %s209
      %p213 = scmp.eq.s32.totalorder %s26, 0
      %p214 = por %p212, %p213
      %p215 = scmp.ne.s32.totalorder %s207, %s209
      %p216 = scmp.eq.s32.totalorder %s31, 1
      %p217 = por %p215, %p216
      %p218 = scmp.ne.s32.totalorder %s209, %s210
      %p219 = scmp.eq.s32.totalorder %s31, 0
      %p220 = por %p218, %p219
      %p221 = scmp.ne.s32.totalorder %s209, %s210
      %p222 = scmp.eq.s32.totalorder %s32, 1
      %p223 = por %p221, %p222
      %p225 = scmp.ne.s32.totalorder %s210, %s224
      %p226 = scmp.eq.s32.totalorder %s32, 0
      %p227 = por %p225, %p226
      %s228 = ssub.s32 %s26, %s33
      %p229 = scmp.eq.s32.totalorder %s228, 0
      %s231 = sadd.s32 %s230, 1
      %s232 = scalar_select %p229, %s230, %s231
      %p235 = pneg %p229
      %p236 = scmp.eq.s32.totalorder %s26, 1
      %p237 = por %p235, %p236
      %p238 = scmp.ne.s32.totalorder %s230, %s233
      %p239 = scmp.eq.s32.totalorder %s26, 0
      %p240 = por %p238, %p239
      %p241 = scmp.ne.s32.totalorder %s230, %s233
      %p242 = scmp.eq.s32.totalorder %s31, 1
      %p243 = por %p241, %p242
      %p244 = scmp.ne.s32.totalorder %s233, %s234
      %p245 = scmp.eq.s32.totalorder %s31, 0
      %p246 = por %p244, %p245
      %p247 = scmp.ne.s32.totalorder %s233, %s234
      %p248 = scmp.eq.s32.totalorder %s32, 1
      %p249 = por %p247, %p248
      %p251 = scmp.ne.s32.totalorder %s234, %s250
      %p252 = scmp.eq.s32.totalorder %s32, 0
      %p253 = por %p251, %p252
      %s254 = ssub.s32 %s26, %s33
      %p255 = scmp.eq.s32.totalorder %s254, 0
      %s257 = sadd.s32 %s256, 1
      %s258 = scalar_select %p255, %s256, %s257
      %p261 = pneg %p255
      %p262 = scmp.eq.s32.totalorder %s26, 1
      %p263 = por %p261, %p262
      %p264 = scmp.ne.s32.totalorder %s256, %s259
      %p265 = scmp.eq.s32.totalorder %s26, 0
      %p266 = por %p264, %p265
      %p267 = scmp.ne.s32.totalorder %s256, %s259
      %p268 = scmp.eq.s32.totalorder %s31, 1
      %p269 = por %p267, %p268
      %p270 = scmp.ne.s32.totalorder %s259, %s260
      %p271 = scmp.eq.s32.totalorder %s31, 0
      %p272 = por %p270, %p271
      %p273 = scmp.ne.s32.totalorder %s259, %s260
      %p274 = scmp.eq.s32.totalorder %s32, 1
      %p275 = por %p273, %p274
      %p277 = scmp.ne.s32.totalorder %s260, %s276
      %p278 = scmp.eq.s32.totalorder %s32, 0
      %p279 = por %p277, %p278
      %p280 = scmp.le.s32.totalorder 1, %s26
      %p281 = scmp.lt.s32.totalorder %s26, 3
      %p282 = pnand %p280, %p281
      %p283 = pneg %p282
      // Predicated region
      $region9: #{tpu_custom_call.1} parent=5 // pred_check
        _
      $region10: #{tpu_custom_call.1} parent=5 // pred_check_branch
        %285 = sbr.rel (%p282) target = $region12
      $region11: #{tpu_custom_call.1} parent=5 // pred_region
        %s286 = ssub.s32 %s26, 1
        // Predicated region
        $region13: #{tpu_custom_call.1} parent=11 // pred_check
          %p287 = pneg %p73
        $region14: #{tpu_custom_call.1} parent=11 // pred_check_branch
          %289 = sbr.rel (%p287) target = $region16
        $region15: #{tpu_custom_call.1} parent=11 // pred_region
          _
        $region16: #{tpu_custom_call.1} parent=11 // pred_fallthru
          _
        // Predicated region
        $region17: #{tpu_custom_call.1} parent=11 // pred_check
          %p290 = pneg %p94
        $region18: #{tpu_custom_call.1} parent=11 // pred_check_branch
          %292 = sbr.rel (%p290) target = $region20
        $region19: #{tpu_custom_call.1} parent=11 // pred_region
          _
        $region20: #{tpu_custom_call.1} parent=11 // pred_fallthru
          _
        // Predicated region
        $region21: #{tpu_custom_call.1} parent=11 // pred_check
          %p293 = pneg %p115
        $region22: #{tpu_custom_call.1} parent=11 // pred_check_branch
          %295 = sbr.rel (%p293) target = $region24
        $region23: #{tpu_custom_call.1} parent=11 // pred_region
          _
        $region24: #{tpu_custom_call.1} parent=11 // pred_fallthru
          _
        // Predicated region
        $region25: #{tpu_custom_call.1} parent=11 // pred_check
          %p296 = pneg %p136
        $region26: #{tpu_custom_call.1} parent=11 // pred_check_branch
          %298 = sbr.rel (%p296) target = $region28
        $region27: #{tpu_custom_call.1} parent=11 // pred_region
          _
        $region28: #{tpu_custom_call.1} parent=11 // pred_fallthru
          _
        // Predicated region
        $region29: #{tpu_custom_call.1} parent=11 // pred_check
          %p299 = pneg %p157
        $region30: #{tpu_custom_call.1} parent=11 // pred_check_branch
          %301 = sbr.rel (%p299) target = $region32
        $region31: #{tpu_custom_call.1} parent=11 // pred_region
          _
        $region32: #{tpu_custom_call.1} parent=11 // pred_fallthru
          _
        // Predicated region
        $region33: #{tpu_custom_call.1} parent=11 // pred_check
          %p302 = pneg %p178
        $region34: #{tpu_custom_call.1} parent=11 // pred_check_branch
          %304 = sbr.rel (%p302) target = $region36
        $region35: #{tpu_custom_call.1} parent=11 // pred_region
          _
        $region36: #{tpu_custom_call.1} parent=11 // pred_fallthru
          _
        // Predicated region
        $region37: #{tpu_custom_call.1} parent=11 // pred_check
          %p305 = pneg %p199
        $region38: #{tpu_custom_call.1} parent=11 // pred_check_branch
          %307 = sbr.rel (%p305) target = $region40
        $region39: #{tpu_custom_call.1} parent=11 // pred_region
          _
        $region40: #{tpu_custom_call.1} parent=11 // pred_fallthru
          _
        // Predicated region
        $region41: #{tpu_custom_call.1} parent=11 // pred_check
          %p308 = pneg %p220
        $region42: #{tpu_custom_call.1} parent=11 // pred_check_branch
          %310 = sbr.rel (%p308) target = $region44
        $region43: #{tpu_custom_call.1} parent=11 // pred_region
          _
        $region44: #{tpu_custom_call.1} parent=11 // pred_fallthru
          _
      $region12: #{tpu_custom_call.1} parent=5 // pred_fallthru
        _
      %p311 = scmp.lt.s32.totalorder %s26, 2
      // Predicated region
      $region45: #{tpu_custom_call.1} parent=5 // pred_check
        %p312 = pneg %p311
      $region46: #{tpu_custom_call.1} parent=5 // pred_check_branch
        %314 = sbr.rel (%p312) target = $region48
      $region47: #{tpu_custom_call.1} parent=5 // pred_region
        // Predicated region
        $region49: #{tpu_custom_call.1} parent=47 // pred_check
          %p315 = pneg %p46
        $region50: #{tpu_custom_call.1} parent=47 // pred_check_branch
          %317 = sbr.rel (%p315) target = $region52
        $region51: #{tpu_custom_call.1} parent=47 // pred_region
          %s318 = sand.u32 %s36, 1
          %s319 = scalar_lea.sflag [#allocation3], %s318
          %s320 = sand.u32 %s36, 1
          %s321 = smul.addr %s320, 256
          %s322 = scalar_lea.vmem [#allocation2], %s321
          %s324 = ssub.s32 4096, 4096
          %325 = vsyncadd %s319, %s324
          %s326 = smul.addr %s26, 32
          %s327 = smul.addr %s326, 128
          %s328 = scalar_lea.hbm %s0, %s327
          %s329 = sshll.u32 %s322, 4
          %s330 = int_to_ptr.vmem [resolvable:$true] %s329
          %335 = dma.hbm_to_vmem [thread:$0]  %s328, 4096, %s330, %s319, 128, 128, 8
        $region52: #{tpu_custom_call.1} parent=47 // pred_fallthru
          _
      $region48: #{tpu_custom_call.1} parent=5 // pred_fallthru
        _
      %p336 = scmp.le.s32.totalorder 1, %s26
      %p337 = scmp.lt.s32.totalorder %s26, 3
      %p338 = pnand %p336, %p337
      %p339 = pneg %p338
      // Predicated region
      $region53: #{tpu_custom_call.1} parent=5 // pred_check
        _
      $region54: #{tpu_custom_call.1} parent=5 // pred_check_branch
        %341 = sbr.rel (%p338) target = $region56
      $region55: #{tpu_custom_call.1} parent=5 // pred_region
        %s342 = ssub.s32 %s26, 1
        %s343 = sand.u32 %s39, 1
        %s344 = scalar_lea.sflag [#allocation3], %s343
        %s345 = sand.u32 %s39, 1
        %s346 = smul.addr %s345, 256
        %s347 = scalar_lea.vmem [#allocation2], %s346
        // Predicated region
        $region57: #{tpu_custom_call.1} parent=55 // pred_check
          %p348 = pneg %p52
        $region58: #{tpu_custom_call.1} parent=55 // pred_check_branch
          %350 = sbr.rel (%p348) target = $region60
        $region59: #{tpu_custom_call.1} parent=55 // pred_region
          %351 = dma.done %s344, 4096
        $region60: #{tpu_custom_call.1} parent=55 // pred_fallthru
          _
        %s352 = sand.u32 %s39, 1
        %s353 = scalar_lea.sflag [#allocation3], %s352
        %s354 = sand.u32 %s39, 1
        %s355 = smul.addr %s354, 256
        %s356 = scalar_lea.vmem [#allocation2], %s355
        %p357 = pneg %p52
        %p358 = pneg %p49
        %p359 = pneg %p73
        %p360 = pneg %p70
        %p361 = pneg %p94
        %p362 = pneg %p91
        %p363 = pneg %p115
        %p364 = pneg %p112
        %p365 = pneg %p136
        %p366 = pneg %p133
        %p367 = pneg %p157
        %p368 = pneg %p154
        %p369 = pneg %p178
        %p370 = pneg %p175
        %p371 = pneg %p199
        %p372 = pneg %p196
        %p373 = pneg %p220
        %p374 = pneg %p217
        %p375 = pneg %p246
        %p376 = pneg %p243
        %s377 = sand.u32 %s233, 1
        %s378 = scalar_lea.sflag [#allocation4], %s377
        %s379 = sand.u32 %s233, 1
        %s380 = smul.addr %s379, 256
        %s381 = scalar_lea.vmem [#allocation5], %s380
        %p382 = pneg %p272
        %p383 = pneg %p269
        %s384 = sand.u32 %s259, 1
        %s385 = scalar_lea.sflag [#allocation7], %s384
        %s386 = sand.u32 %s259, 1
        %s387 = smul.addr %s386, 16
        %s388 = scalar_lea.vmem [#allocation6], %s387
        %v389 = vld [vmem:[%s347] sm:$0xff]
        %v390 = vld [vmem:[%s347 + $0x8] sm:$0xff]
        %v391 = vld [vmem:[%s347 + $0x10] sm:$0xff]
        %v392 = vld [vmem:[%s347 + $0x18] sm:$0xff]
        %v393 = vld [vmem:[%s347 + $0x20] sm:$0xff]
        %v394 = vld [vmem:[%s347 + $0x28] sm:$0xff]
        %v395 = vld [vmem:[%s347 + $0x30] sm:$0xff]
        %v396 = vld [vmem:[%s347 + $0x38] sm:$0xff]
        %v397 = vld [vmem:[%s347 + $0x40] sm:$0xff]
        %v398 = vld [vmem:[%s347 + $0x48] sm:$0xff]
        %v399 = vld [vmem:[%s347 + $0x50] sm:$0xff]
        %v400 = vld [vmem:[%s347 + $0x58] sm:$0xff]
        %v401 = vld [vmem:[%s347 + $0x60] sm:$0xff]
        %v402 = vld [vmem:[%s347 + $0x68] sm:$0xff]
        %v403 = vld [vmem:[%s347 + $0x70] sm:$0xff]
        %v404 = vld [vmem:[%s347 + $0x78] sm:$0xff]
        %v405 = vld [vmem:[%s347 + $0x80] sm:$0xff]
        %v406 = vld [vmem:[%s347 + $0x88] sm:$0xff]
        %v407 = vld [vmem:[%s347 + $0x90] sm:$0xff]
        %v408 = vld [vmem:[%s347 + $0x98] sm:$0xff]
        %v409 = vld [vmem:[%s347 + $0xa0] sm:$0xff]
        %v410 = vld [vmem:[%s347 + $0xa8] sm:$0xff]
        %v411 = vld [vmem:[%s347 + $0xb0] sm:$0xff]
        %v412 = vld [vmem:[%s347 + $0xb8] sm:$0xff]
        %v413 = vld [vmem:[%s347 + $0xc0] sm:$0xff]
        %v414 = vld [vmem:[%s347 + $0xc8] sm:$0xff]
        %v415 = vld [vmem:[%s347 + $0xd0] sm:$0xff]
        %v416 = vld [vmem:[%s347 + $0xd8] sm:$0xff]
        %v417 = vld [vmem:[%s347 + $0xe0] sm:$0xff]
        %v418 = vld [vmem:[%s347 + $0xe8] sm:$0xff]
        %v419 = vld [vmem:[%s347 + $0xf0] sm:$0xff]
        %v420 = vld [vmem:[%s347 + $0xf8] sm:$0xff]
        %v421 = vld [vmem:[%s1] sm:$0xff]
        %v422 = vld [vmem:[%s1 + $0x8] sm:$0xff]
        %424 = vset.pattern.permute.xlu0 0
        %425 = vperm.xlu0 %424, %v421
        %v426 = vpop.permute.xlu0 %425
        %429 = vset.pattern.permute.xlu0 0
        %430 = vperm.xlu0 %429, %v422
        %v431 = vpop.permute.xlu0 %430
        %v433 = vmul.f32 %v389, %v426
        %v434 = vmul.f32 %v390, %v431
        %v435 = vmul.f32 %v391, %v426
        %v436 = vmul.f32 %v392, %v431
        %v437 = vmul.f32 %v393, %v426
        %v438 = vmul.f32 %v394, %v431
        %v439 = vmul.f32 %v395, %v426
        %v440 = vmul.f32 %v396, %v431
        %v441 = vmul.f32 %v397, %v426
        %v442 = vmul.f32 %v398, %v431
        %v443 = vmul.f32 %v399, %v426
        %v444 = vmul.f32 %v400, %v431
        %v445 = vmul.f32 %v401, %v426
        %v446 = vmul.f32 %v402, %v431
        %v447 = vmul.f32 %v403, %v426
        %v448 = vmul.f32 %v404, %v431
        %v449 = vmul.f32 %v405, %v426
        %v450 = vmul.f32 %v406, %v431
        %v451 = vmul.f32 %v407, %v426
        %v452 = vmul.f32 %v408, %v431
        %v453 = vmul.f32 %v409, %v426
        %v454 = vmul.f32 %v410, %v431
        %v455 = vmul.f32 %v411, %v426
        %v456 = vmul.f32 %v412, %v431
        %v457 = vmul.f32 %v413, %v426
        %v458 = vmul.f32 %v414, %v431
        %v459 = vmul.f32 %v415, %v426
        %v460 = vmul.f32 %v416, %v431
        %v461 = vmul.f32 %v417, %v426
        %v462 = vmul.f32 %v418, %v431
        %v463 = vmul.f32 %v419, %v426
        %v464 = vmul.f32 %v420, %v431
        %v465 = vadd.f32 %v433, %v434
        %v466 = vrot.slane %v465, 4
        %v467 = vadd.f32 %v465, %v466
        %v468 = vrot.slane %v467, 2
        %v469 = vadd.f32 %v467, %v468
        %v470 = vrot.slane %v469, 1
        %v471 = vadd.f32 %v469, %v470
        %v472 = vadd.f32 %v435, %v436
        %v473 = vrot.slane %v472, 4
        %v474 = vadd.f32 %v472, %v473
        %v475 = vrot.slane %v474, 2
        %v476 = vadd.f32 %v474, %v475
        %v477 = vrot.slane %v476, 1
        %v478 = vadd.f32 %v476, %v477
        %v479 = vadd.f32 %v437, %v438
        %v480 = vrot.slane %v479, 4
        %v481 = vadd.f32 %v479, %v480
        %v482 = vrot.slane %v481, 2
        %v483 = vadd.f32 %v481, %v482
        %v484 = vrot.slane %v483, 1
        %v485 = vadd.f32 %v483, %v484
        %v486 = vadd.f32 %v439, %v440
        %v487 = vrot.slane %v486, 4
        %v488 = vadd.f32 %v486, %v487
        %v489 = vrot.slane %v488, 2
        %v490 = vadd.f32 %v488, %v489
        %v491 = vrot.slane %v490, 1
        %v492 = vadd.f32 %v490, %v491
        %v493 = vadd.f32 %v441, %v442
        %v494 = vrot.slane %v493, 4
        %v495 = vadd.f32 %v493, %v494
        %v496 = vrot.slane %v495, 2
        %v497 = vadd.f32 %v495, %v496
        %v498 = vrot.slane %v497, 1
        %v499 = vadd.f32 %v497, %v498
        %v500 = vadd.f32 %v443, %v444
        %v501 = vrot.slane %v500, 4
        %v502 = vadd.f32 %v500, %v501
        %v503 = vrot.slane %v502, 2
        %v504 = vadd.f32 %v502, %v503
        %v505 = vrot.slane %v504, 1
        %v506 = vadd.f32 %v504, %v505
        %v507 = vadd.f32 %v445, %v446
        %v508 = vrot.slane %v507, 4
        %v509 = vadd.f32 %v507, %v508
        %v510 = vrot.slane %v509, 2
        %v511 = vadd.f32 %v509, %v510
        %v512 = vrot.slane %v511, 1
        %v513 = vadd.f32 %v511, %v512
        %v514 = vadd.f32 %v447, %v448
        %v515 = vrot.slane %v514, 4
        %v516 = vadd.f32 %v514, %v515
        %v517 = vrot.slane %v516, 2
        %v518 = vadd.f32 %v516, %v517
        %v519 = vrot.slane %v518, 1
        %v520 = vadd.f32 %v518, %v519
        %v521 = vadd.f32 %v449, %v450
        %v522 = vrot.slane %v521, 4
        %v523 = vadd.f32 %v521, %v522
        %v524 = vrot.slane %v523, 2
        %v525 = vadd.f32 %v523, %v524
        %v526 = vrot.slane %v525, 1
        %v527 = vadd.f32 %v525, %v526
        %v528 = vadd.f32 %v451, %v452
        %v529 = vrot.slane %v528, 4
        %v530 = vadd.f32 %v528, %v529
        %v531 = vrot.slane %v530, 2
        %v532 = vadd.f32 %v530, %v531
        %v533 = vrot.slane %v532, 1
        %v534 = vadd.f32 %v532, %v533
        %v535 = vadd.f32 %v453, %v454
        %v536 = vrot.slane %v535, 4
        %v537 = vadd.f32 %v535, %v536
        %v538 = vrot.slane %v537, 2
        %v539 = vadd.f32 %v537, %v538
        %v540 = vrot.slane %v539, 1
        %v541 = vadd.f32 %v539, %v540
        %v542 = vadd.f32 %v455, %v456
        %v543 = vrot.slane %v542, 4
        %v544 = vadd.f32 %v542, %v543
        %v545 = vrot.slane %v544, 2
        %v546 = vadd.f32 %v544, %v545
        %v547 = vrot.slane %v546, 1
        %v548 = vadd.f32 %v546, %v547
        %v549 = vadd.f32 %v457, %v458
        %v550 = vrot.slane %v549, 4
        %v551 = vadd.f32 %v549, %v550
        %v552 = vrot.slane %v551, 2
        %v553 = vadd.f32 %v551, %v552
        %v554 = vrot.slane %v553, 1
        %v555 = vadd.f32 %v553, %v554
        %v556 = vadd.f32 %v459, %v460
        %v557 = vrot.slane %v556, 4
        %v558 = vadd.f32 %v556, %v557
        %v559 = vrot.slane %v558, 2
        %v560 = vadd.f32 %v558, %v559
        %v561 = vrot.slane %v560, 1
        %v562 = vadd.f32 %v560, %v561
        %v563 = vadd.f32 %v461, %v462
        %v564 = vrot.slane %v563, 4
        %v565 = vadd.f32 %v563, %v564
        %v566 = vrot.slane %v565, 2
        %v567 = vadd.f32 %v565, %v566
        %v568 = vrot.slane %v567, 1
        %v569 = vadd.f32 %v567, %v568
        %v570 = vadd.f32 %v463, %v464
        %v571 = vrot.slane %v570, 4
        %v572 = vadd.f32 %v570, %v571
        %v573 = vrot.slane %v572, 2
        %v574 = vadd.f32 %v572, %v573
        %v575 = vrot.slane %v574, 1
        %v576 = vadd.f32 %v574, %v575
        %v577 = vld [vmem:[%s2] sm:$0xff]
        %v578 = vld [vmem:[%s2 + $0x8] sm:$0xff]
        %v579 = vld [vmem:[%s2 + $0x10] sm:$0xff]
        %v580 = vld [vmem:[%s2 + $0x18] sm:$0xff]
        %v581 = vld [vmem:[%s2 + $0x20] sm:$0xff]
        %v582 = vld [vmem:[%s2 + $0x28] sm:$0xff]
        %v583 = vld [vmem:[%s2 + $0x30] sm:$0xff]
        %v584 = vld [vmem:[%s2 + $0x38] sm:$0xff]
        %v585 = vld [vmem:[%s2 + $0x40] sm:$0xff]
        %v586 = vld [vmem:[%s2 + $0x48] sm:$0xff]
        %v587 = vld [vmem:[%s2 + $0x50] sm:$0xff]
        %v588 = vld [vmem:[%s2 + $0x58] sm:$0xff]
        %v589 = vld [vmem:[%s2 + $0x60] sm:$0xff]
        %v590 = vld [vmem:[%s2 + $0x68] sm:$0xff]
        %v591 = vld [vmem:[%s2 + $0x70] sm:$0xff]
        %v592 = vld [vmem:[%s2 + $0x78] sm:$0xff]
        %vm609 = vcmask 1041409
        %v610 = vsel %vm609, %v478, %v471
        %vm611 = vcmask 1042434
        %v612 = vsel %vm611, %v485, %v610
        %vm613 = vcmask 1043459
        %v614 = vsel %vm613, %v492, %v612
        %vm615 = vcmask 1044484
        %v616 = vsel %vm615, %v499, %v614
        %vm617 = vcmask 1045509
        %v618 = vsel %vm617, %v506, %v616
        %vm619 = vcmask 1046534
        %v620 = vsel %vm619, %v513, %v618
        %vm621 = vcmask 1047559
        %v622 = vsel %vm621, %v520, %v620
        %v623 = vsel %vm609, %v534, %v527
        %v624 = vsel %vm611, %v541, %v623
        %v625 = vsel %vm613, %v548, %v624
        %v626 = vsel %vm615, %v555, %v625
        %v627 = vsel %vm617, %v562, %v626
        %v628 = vsel %vm619, %v569, %v627
        %v629 = vsel %vm621, %v576, %v628
        %632 = vmatprep.subr.mxu0 0.0
        %633 = vmatpush1.msra.mxu0 %v577
        %634 = vmatprep.subr.mxu0 0.0
        %635 = vmatpush1.msra.mxu0 %v578
        %636 = vmatprep.subr.mxu0 0.0
        %637 = vmatpush1.msra.mxu0 %v579
        %638 = vmatprep.subr.mxu0 0.0
        %639 = vmatpush1.msra.mxu0 %v580
        %640 = vmatprep.subr.mxu0 0.0
        %641 = vmatpush1.msra.mxu0 %v581
        %642 = vmatprep.subr.mxu0 0.0
        %643 = vmatpush1.msra.mxu0 %v582
        %644 = vmatprep.subr.mxu0 0.0
        %645 = vmatpush1.msra.mxu0 %v583
        %646 = vmatprep.subr.mxu0 0.0
        %647 = vmatpush1.msra.mxu0 %v584
        %648 = vmatprep.subr.mxu0 0.0
        %649 = vmatpush1.msra.mxu0 %v585
        %650 = vmatprep.subr.mxu0 0.0
        %651 = vmatpush1.msra.mxu0 %v586
        %652 = vmatprep.subr.mxu0 0.0
        %653 = vmatpush1.msra.mxu0 %v587
        %654 = vmatprep.subr.mxu0 0.0
        %655 = vmatpush1.msra.mxu0 %v588
        %656 = vmatprep.subr.mxu0 0.0
        %657 = vmatpush1.msra.mxu0 %v589
        %658 = vmatprep.subr.mxu0 0.0
        %659 = vmatpush1.msra.mxu0 %v590
        %660 = vmatprep.subr.mxu0 0.0
        %661 = vmatpush1.msra.mxu0 %v591
        %662 = vmatprep.subr.mxu0 0.0
        %663 = vmatpush1.msra.mxu0 %v592
        %664 = vmatprep.subr.mxu0 0.0
        %665 = vmatpush1.msra.mxu0 0.0
        %666 = vmatprep.subr.mxu0 0.0
        %667 = vmatpush1.msra.mxu0 0.0
        %668 = vmatprep.subr.mxu0 0.0
        %669 = vmatpush1.msra.mxu0 0.0
        %670 = vmatprep.subr.mxu0 0.0
        %671 = vmatpush1.msra.mxu0 0.0
        %672 = vmatprep.subr.mxu0 0.0
        %673 = vmatpush1.msra.mxu0 0.0
        %674 = vmatprep.subr.mxu0 0.0
        %675 = vmatpush1.msra.mxu0 0.0
        %676 = vmatprep.subr.mxu0 0.0
        %677 = vmatpush1.msra.mxu0 0.0
        %678 = vmatprep.subr.mxu0 0.0
        %679 = vmatpush1.msra.mxu0 0.0
        %680 = vmatprep.subr.mxu0 0.0
        %681 = vmatpush1.msra.mxu0 0.0
        %682 = vmatprep.subr.mxu0 0.0
        %683 = vmatpush1.msra.mxu0 0.0
        %684 = vmatprep.subr.mxu0 0.0
        %685 = vmatpush1.msra.mxu0 0.0
        %686 = vmatprep.subr.mxu0 0.0
        %687 = vmatpush1.msra.mxu0 0.0
        %688 = vmatprep.subr.mxu0 0.0
        %689 = vmatpush1.msra.mxu0 0.0
        %690 = vmatprep.subr.mxu0 0.0
        %691 = vmatpush1.msra.mxu0 0.0
        %692 = vmatprep.subr.mxu0 0.0
        %693 = vmatpush1.msra.mxu0 0.0
        %694 = vmatprep.subr.mxu0 0.0
        %695 = vmatpush1.msra.mxu0 0.0
        %696 = vmatprep.mubr.f32.mxu0 0.0
        %697 = vmatmul.mubr.f32.gmra.mrb[0].mxu0 %v622
        %v698 = vpop.f32.mrb[0].mxu0
        %v699 = vadd.f32 0.0, %v698
        %v700 = vpop.f32.mrb[0].mxu0
        %701 = vmatprep.mubr.f32.mxu0 0.0
        %702 = vmatmul.mubr.f32.gmra.mrb[0].mxu0 %v629
        %v703 = vpop.f32.mrb[0].mxu0
        %v704 = vadd.f32 0.0, %v703
        %v705 = vpop.f32.mrb[0].mxu0
        %706 = vdwg.mxu0
        %v707 = vld [vmem:[%s3] sm:$0xff]
        %v708 = vld [vmem:[%s3 + $0x8] sm:$0xff]
        %v709 = vld [vmem:[%s3 + $0x10] sm:$0xff]
        %vm710 = vcmask 195584
        %v712 = vsel %vm710, %v699, 0
        %v715 = vsel %vm710, %v704, 0
        %717 = vmatprep.subr.mxu0 0.0
        %718 = vmatpush1.msra.mxu0 %v707
        %719 = vmatprep.subr.mxu0 0.0
        %720 = vmatpush1.msra.mxu0 %v708
        %721 = vmatprep.subr.mxu0 0.0
        %722 = vmatpush1.msra.mxu0 %v709
        %723 = vmatprep.subr.mxu0 0.0
        %724 = vmatpush1.msra.mxu0 0.0
        %725 = vmatprep.subr.mxu0 0.0
        %726 = vmatpush1.msra.mxu0 0.0
        %727 = vmatprep.subr.mxu0 0.0
        %728 = vmatpush1.msra.mxu0 0.0
        %729 = vmatprep.subr.mxu0 0.0
        %730 = vmatpush1.msra.mxu0 0.0
        %731 = vmatprep.subr.mxu0 0.0
        %732 = vmatpush1.msra.mxu0 0.0
        %733 = vmatprep.subr.mxu0 0.0
        %734 = vmatpush1.msra.mxu0 0.0
        %735 = vmatprep.subr.mxu0 0.0
        %736 = vmatpush1.msra.mxu0 0.0
        %737 = vmatprep.subr.mxu0 0.0
        %738 = vmatpush1.msra.mxu0 0.0
        %739 = vmatprep.subr.mxu0 0.0
        %740 = vmatpush1.msra.mxu0 0.0
        %741 = vmatprep.subr.mxu0 0.0
        %742 = vmatpush1.msra.mxu0 0.0
        %743 = vmatprep.subr.mxu0 0.0
        %744 = vmatpush1.msra.mxu0 0.0
        %745 = vmatprep.subr.mxu0 0.0
        %746 = vmatpush1.msra.mxu0 0.0
        %747 = vmatprep.subr.mxu0 0.0
        %748 = vmatpush1.msra.mxu0 0.0
        %749 = vmatprep.subr.mxu0 0.0
        %750 = vmatpush1.msra.mxu0 0.0
        %751 = vmatprep.subr.mxu0 0.0
        %752 = vmatpush1.msra.mxu0 0.0
        %753 = vmatprep.subr.mxu0 0.0
        %754 = vmatpush1.msra.mxu0 0.0
        %755 = vmatprep.subr.mxu0 0.0
        %756 = vmatpush1.msra.mxu0 0.0
        %757 = vmatprep.subr.mxu0 0.0
        %758 = vmatpush1.msra.mxu0 0.0
        %759 = vmatprep.subr.mxu0 0.0
        %760 = vmatpush1.msra.mxu0 0.0
        %761 = vmatprep.subr.mxu0 0.0
        %762 = vmatpush1.msra.mxu0 0.0
        %763 = vmatprep.subr.mxu0 0.0
        %764 = vmatpush1.msra.mxu0 0.0
        %765 = vmatprep.subr.mxu0 0.0
        %766 = vmatpush1.msra.mxu0 0.0
        %767 = vmatprep.subr.mxu0 0.0
        %768 = vmatpush1.msra.mxu0 0.0
        %769 = vmatprep.subr.mxu0 0.0
        %770 = vmatpush1.msra.mxu0 0.0
        %771 = vmatprep.subr.mxu0 0.0
        %772 = vmatpush1.msra.mxu0 0.0
        %773 = vmatprep.subr.mxu0 0.0
        %774 = vmatpush1.msra.mxu0 0.0
        %775 = vmatprep.subr.mxu0 0.0
        %776 = vmatpush1.msra.mxu0 0.0
        %777 = vmatprep.subr.mxu0 0.0
        %778 = vmatpush1.msra.mxu0 0.0
        %779 = vmatprep.subr.mxu0 0.0
        %780 = vmatpush1.msra.mxu0 0.0
        %781 = vmatprep.mubr.f32.mxu0 0.0
        %782 = vmatmul.mubr.f32.gmra.mrb[0].mxu0 %v712
        %v783 = vpop.f32.mrb[0].mxu0
        %v784 = vadd.f32 0.0, %v783
        %v785 = vpop.f32.mrb[0].mxu0
        %786 = vmatprep.mubr.f32.mxu0 0.0
        %787 = vmatmul.mubr.f32.gmra.mrb[0].mxu0 %v715
        %v788 = vpop.f32.mrb[0].mxu0
        %v789 = vadd.f32 0.0, %v788
        %v790 = vpop.f32.mrb[0].mxu0
        %791 = vdwg.mxu0
        %v792 = vld [vmem:[%s4] sm:$0x1]
        %v794 = vlaneseq
        %v795 = vshrl.u32 %v794, 7
        %v796 = vsub.s32 0, %v795
        %v797 = vrot.slane %v792, %v796
        %v799 = vmul.f32 %v389, %v797
        %v800 = vmul.f32 %v390, %v797
        %v801 = vmul.f32 %v391, %v797
        %v802 = vmul.f32 %v392, %v797
        %v803 = vmul.f32 %v393, %v797
        %v804 = vmul.f32 %v394, %v797
        %v805 = vmul.f32 %v395, %v797
        %v806 = vmul.f32 %v396, %v797
        %v807 = vmul.f32 %v397, %v797
        %v808 = vmul.f32 %v398, %v797
        %v809 = vmul.f32 %v399, %v797
        %v810 = vmul.f32 %v400, %v797
        %v811 = vmul.f32 %v401, %v797
        %v812 = vmul.f32 %v402, %v797
        %v813 = vmul.f32 %v403, %v797
        %v814 = vmul.f32 %v404, %v797
        %v815 = vmul.f32 %v405, %v797
        %v816 = vmul.f32 %v406, %v797
        %v817 = vmul.f32 %v407, %v797
        %v818 = vmul.f32 %v408, %v797
        %v819 = vmul.f32 %v409, %v797
        %v820 = vmul.f32 %v410, %v797
        %v821 = vmul.f32 %v411, %v797
        %v822 = vmul.f32 %v412, %v797
        %v823 = vmul.f32 %v413, %v797
        %v824 = vmul.f32 %v414, %v797
        %v825 = vmul.f32 %v415, %v797
        %v826 = vmul.f32 %v416, %v797
        %v827 = vmul.f32 %v417, %v797
        %v828 = vmul.f32 %v418, %v797
        %v829 = vmul.f32 %v419, %v797
        %v830 = vmul.f32 %v420, %v797
        %831 = vadd.xlane.f32.xlu0 %v799
        %v832 = vpop.xlane.xlu0 %831
        %833 = vadd.xlane.f32.xlu0 %v800
        %v834 = vpop.xlane.xlu0 %833
        %835 = vadd.xlane.f32.xlu0 %v801
        %v836 = vpop.xlane.xlu0 %835
        %837 = vadd.xlane.f32.xlu0 %v802
        %v838 = vpop.xlane.xlu0 %837
        %839 = vadd.xlane.f32.xlu0 %v803
        %v840 = vpop.xlane.xlu0 %839
        %841 = vadd.xlane.f32.xlu0 %v804
        %v842 = vpop.xlane.xlu0 %841
        %843 = vadd.xlane.f32.xlu0 %v805
        %v844 = vpop.xlane.xlu0 %843
        %845 = vadd.xlane.f32.xlu0 %v806
        %v846 = vpop.xlane.xlu0 %845
        %847 = vadd.xlane.f32.xlu0 %v807
        %v848 = vpop.xlane.xlu0 %847
        %849 = vadd.xlane.f32.xlu0 %v808
        %v850 = vpop.xlane.xlu0 %849
        %851 = vadd.xlane.f32.xlu0 %v809
        %v852 = vpop.xlane.xlu0 %851
        %853 = vadd.xlane.f32.xlu0 %v810
        %v854 = vpop.xlane.xlu0 %853
        %855 = vadd.xlane.f32.xlu0 %v811
        %v856 = vpop.xlane.xlu0 %855
        %857 = vadd.xlane.f32.xlu0 %v812
        %v858 = vpop.xlane.xlu0 %857
        %859 = vadd.xlane.f32.xlu0 %v813
        %v860 = vpop.xlane.xlu0 %859
        %861 = vadd.xlane.f32.xlu0 %v814
        %v862 = vpop.xlane.xlu0 %861
        %863 = vadd.xlane.f32.xlu0 %v815
        %v864 = vpop.xlane.xlu0 %863
        %865 = vadd.xlane.f32.xlu0 %v816
        %v866 = vpop.xlane.xlu0 %865
        %867 = vadd.xlane.f32.xlu0 %v817
        %v868 = vpop.xlane.xlu0 %867
        %869 = vadd.xlane.f32.xlu0 %v818
        %v870 = vpop.xlane.xlu0 %869
        %871 = vadd.xlane.f32.xlu0 %v819
        %v872 = vpop.xlane.xlu0 %871
        %873 = vadd.xlane.f32.xlu0 %v820
        %v874 = vpop.xlane.xlu0 %873
        %875 = vadd.xlane.f32.xlu0 %v821
        %v876 = vpop.xlane.xlu0 %875
        %877 = vadd.xlane.f32.xlu0 %v822
        %v878 = vpop.xlane.xlu0 %877
        %879 = vadd.xlane.f32.xlu0 %v823
        %v880 = vpop.xlane.xlu0 %879
        %881 = vadd.xlane.f32.xlu0 %v824
        %v882 = vpop.xlane.xlu0 %881
        %883 = vadd.xlane.f32.xlu0 %v825
        %v884 = vpop.xlane.xlu0 %883
        %885 = vadd.xlane.f32.xlu0 %v826
        %v886 = vpop.xlane.xlu0 %885
        %887 = vadd.xlane.f32.xlu0 %v827
        %v888 = vpop.xlane.xlu0 %887
        %889 = vadd.xlane.f32.xlu0 %v828
        %v890 = vpop.xlane.xlu0 %889
        %891 = vadd.xlane.f32.xlu0 %v829
        %v892 = vpop.xlane.xlu0 %891
        %893 = vadd.xlane.f32.xlu0 %v830
        %v894 = vpop.xlane.xlu0 %893
        %v897 = vcombine.high %v784, %v784
        %v899 = vunpack.c.l.s4 1966171168
        %v900 = vunpack.c.0.s8 %v899
        %v901 = vlaneseq
        %v902 = vshrl.u32 %v901, 7
        %v903 = vsub.s32 %v900, %v902
        %v904 = vrot.slane %v784, %v903
        %v906 = vunpack.c.l.s4 1966171168
        %v907 = vunpack.c.0.s8 %v906
        %v908 = vlaneseq
        %v909 = vshrl.u32 %v908, 7
        %v910 = vsub.s32 %v907, %v909
        %v911 = vrot.slane %v897, %v910
        %v912 = vcombine.high %v904, %v904
        %v913 = vcombine.high %v911, %v911
        %v915 = vunpack.c.l.s4 1966171168
        %v916 = vunpack.c.0.s8 %v915
        %v917 = vlaneseq
        %v918 = vshrl.u32 %v917, 7
        %v919 = vsub.s32 %v916, %v918
        %v920 = vrot.slane %v904, %v919
        %v922 = vunpack.c.l.s4 1966171168
        %v923 = vunpack.c.0.s8 %v922
        %v924 = vlaneseq
        %v925 = vshrl.u32 %v924, 7
        %v926 = vsub.s32 %v923, %v925
        %v927 = vrot.slane %v911, %v926
        %v929 = vunpack.c.l.s4 1966171168
        %v930 = vunpack.c.0.s8 %v929
        %v931 = vlaneseq
        %v932 = vshrl.u32 %v931, 7
        %v933 = vsub.s32 %v930, %v932
        %v934 = vrot.slane %v912, %v933
        %v936 = vunpack.c.l.s4 1966171168
        %v937 = vunpack.c.0.s8 %v936
        %v938 = vlaneseq
        %v939 = vshrl.u32 %v938, 7
        %v940 = vsub.s32 %v937, %v939
        %v941 = vrot.slane %v913, %v940
        %v942 = vcombine.high %v920, %v920
        %v943 = vcombine.high %v927, %v927
        %v944 = vcombine.high %v934, %v934
        %v945 = vcombine.high %v941, %v941
        %v946 = vcombine.high %v789, %v789
        %v948 = vunpack.c.l.s4 1966171168
        %v949 = vunpack.c.0.s8 %v948
        %v950 = vlaneseq
        %v951 = vshrl.u32 %v950, 7
        %v952 = vsub.s32 %v949, %v951
        %v953 = vrot.slane %v789, %v952
        %v955 = vunpack.c.l.s4 1966171168
        %v956 = vunpack.c.0.s8 %v955
        %v957 = vlaneseq
        %v958 = vshrl.u32 %v957, 7
        %v959 = vsub.s32 %v956, %v958
        %v960 = vrot.slane %v946, %v959
        %v961 = vcombine.high %v953, %v953
        %v962 = vcombine.high %v960, %v960
        %v964 = vunpack.c.l.s4 1966171168
        %v965 = vunpack.c.0.s8 %v964
        %v966 = vlaneseq
        %v967 = vshrl.u32 %v966, 7
        %v968 = vsub.s32 %v965, %v967
        %v969 = vrot.slane %v953, %v968
        %v971 = vunpack.c.l.s4 1966171168
        %v972 = vunpack.c.0.s8 %v971
        %v973 = vlaneseq
        %v974 = vshrl.u32 %v973, 7
        %v975 = vsub.s32 %v972, %v974
        %v976 = vrot.slane %v960, %v975
        %v978 = vunpack.c.l.s4 1966171168
        %v979 = vunpack.c.0.s8 %v978
        %v980 = vlaneseq
        %v981 = vshrl.u32 %v980, 7
        %v982 = vsub.s32 %v979, %v981
        %v983 = vrot.slane %v961, %v982
        %v985 = vunpack.c.l.s4 1966171168
        %v986 = vunpack.c.0.s8 %v985
        %v987 = vlaneseq
        %v988 = vshrl.u32 %v987, 7
        %v989 = vsub.s32 %v986, %v988
        %v990 = vrot.slane %v962, %v989
        %v991 = vcombine.high %v969, %v969
        %v992 = vcombine.high %v976, %v976
        %v993 = vcombine.high %v983, %v983
        %v994 = vcombine.high %v990, %v990
        %v995 = vlaneseq
        %v996 = vshrl.u32 %v995, 7
        %v997 = vsub.s32 0, %v996
        %v998 = vrot.slane %v920, %v997
        %v999 = vlaneseq
        %v1000 = vshrl.u32 %v999, 7
        %v1001 = vsub.s32 0, %v1000
        %v1002 = vrot.slane %v934, %v1001
        %v1003 = vlaneseq
        %v1004 = vshrl.u32 %v1003, 7
        %v1005 = vsub.s32 0, %v1004
        %v1006 = vrot.slane %v942, %v1005
        %v1007 = vlaneseq
        %v1008 = vshrl.u32 %v1007, 7
        %v1009 = vsub.s32 0, %v1008
        %v1010 = vrot.slane %v944, %v1009
        %v1011 = vlaneseq
        %v1012 = vshrl.u32 %v1011, 7
        %v1013 = vsub.s32 0, %v1012
        %v1014 = vrot.slane %v927, %v1013
        %v1015 = vlaneseq
        %v1016 = vshrl.u32 %v1015, 7
        %v1017 = vsub.s32 0, %v1016
        %v1018 = vrot.slane %v941, %v1017
        %v1019 = vlaneseq
        %v1020 = vshrl.u32 %v1019, 7
        %v1021 = vsub.s32 0, %v1020
        %v1022 = vrot.slane %v943, %v1021
        %v1023 = vlaneseq
        %v1024 = vshrl.u32 %v1023, 7
        %v1025 = vsub.s32 0, %v1024
        %v1026 = vrot.slane %v945, %v1025
        %v1027 = vlaneseq
        %v1028 = vshrl.u32 %v1027, 7
        %v1029 = vsub.s32 0, %v1028
        %v1030 = vrot.slane %v969, %v1029
        %v1031 = vlaneseq
        %v1032 = vshrl.u32 %v1031, 7
        %v1033 = vsub.s32 0, %v1032
        %v1034 = vrot.slane %v983, %v1033
        %v1035 = vlaneseq
        %v1036 = vshrl.u32 %v1035, 7
        %v1037 = vsub.s32 0, %v1036
        %v1038 = vrot.slane %v991, %v1037
        %v1039 = vlaneseq
        %v1040 = vshrl.u32 %v1039, 7
        %v1041 = vsub.s32 0, %v1040
        %v1042 = vrot.slane %v993, %v1041
        %v1043 = vlaneseq
        %v1044 = vshrl.u32 %v1043, 7
        %v1045 = vsub.s32 0, %v1044
        %v1046 = vrot.slane %v976, %v1045
        %v1047 = vlaneseq
        %v1048 = vshrl.u32 %v1047, 7
        %v1049 = vsub.s32 0, %v1048
        %v1050 = vrot.slane %v990, %v1049
        %v1051 = vlaneseq
        %v1052 = vshrl.u32 %v1051, 7
        %v1053 = vsub.s32 0, %v1052
        %v1054 = vrot.slane %v992, %v1053
        %v1055 = vlaneseq
        %v1056 = vshrl.u32 %v1055, 7
        %v1057 = vsub.s32 0, %v1056
        %v1058 = vrot.slane %v994, %v1057
        %v1075 = vadd.f32 %v998, %v832
        %v1076 = vadd.f32 %v998, %v834
        %v1077 = vadd.f32 %v1002, %v836
        %v1078 = vadd.f32 %v1002, %v838
        %v1079 = vadd.f32 %v1006, %v840
        %v1080 = vadd.f32 %v1006, %v842
        %v1081 = vadd.f32 %v1010, %v844
        %v1082 = vadd.f32 %v1010, %v846
        %v1083 = vadd.f32 %v1014, %v848
        %v1084 = vadd.f32 %v1014, %v850
        %v1085 = vadd.f32 %v1018, %v852
        %v1086 = vadd.f32 %v1018, %v854
        %v1087 = vadd.f32 %v1022, %v856
        %v1088 = vadd.f32 %v1022, %v858
        %v1089 = vadd.f32 %v1026, %v860
        %v1090 = vadd.f32 %v1026, %v862
        %v1091 = vadd.f32 %v1030, %v864
        %v1092 = vadd.f32 %v1030, %v866
        %v1093 = vadd.f32 %v1034, %v868
        %v1094 = vadd.f32 %v1034, %v870
        %v1095 = vadd.f32 %v1038, %v872
        %v1096 = vadd.f32 %v1038, %v874
        %v1097 = vadd.f32 %v1042, %v876
        %v1098 = vadd.f32 %v1042, %v878
        %v1099 = vadd.f32 %v1046, %v880
        %v1100 = vadd.f32 %v1046, %v882
        %v1101 = vadd.f32 %v1050, %v884
        %v1102 = vadd.f32 %v1050, %v886
        %v1103 = vadd.f32 %v1054, %v888
        %v1104 = vadd.f32 %v1054, %v890
        %v1105 = vadd.f32 %v1058, %v892
        %v1106 = vadd.f32 %v1058, %v894
        %v1107 = vcombine.low %v1075, %v1079
        %v1108 = vcombine.high %v1075, %v1079
        %v1110 = vunpack.c.l.s4 1983009808
        %v1111 = vunpack.c.0.s8 %v1110
        %v1112 = vlaneseq
        %v1113 = vshrl.u32 %v1112, 7
        %v1114 = vsub.s32 %v1111, %v1113
        %v1115 = vrot.slane %v1107, %v1114
        %v1117 = vunpack.c.l.s4 1983009808
        %v1118 = vunpack.c.0.s8 %v1117
        %v1119 = vlaneseq
        %v1120 = vshrl.u32 %v1119, 7
        %v1121 = vsub.s32 %v1118, %v1120
        %v1122 = vrot.slane %v1108, %v1121
        %v1123 = vcombine.low %v1077, %v1081
        %v1124 = vcombine.high %v1077, %v1081
        %v1126 = vunpack.c.l.s4 1983009808
        %v1127 = vunpack.c.0.s8 %v1126
        %v1128 = vlaneseq
        %v1129 = vshrl.u32 %v1128, 7
        %v1130 = vsub.s32 %v1127, %v1129
        %v1131 = vrot.slane %v1123, %v1130
        %v1133 = vunpack.c.l.s4 1983009808
        %v1134 = vunpack.c.0.s8 %v1133
        %v1135 = vlaneseq
        %v1136 = vshrl.u32 %v1135, 7
        %v1137 = vsub.s32 %v1134, %v1136
        %v1138 = vrot.slane %v1124, %v1137
        %v1139 = vcombine.low %v1083, %v1087
        %v1140 = vcombine.high %v1083, %v1087
        %v1142 = vunpack.c.l.s4 1983009808
        %v1143 = vunpack.c.0.s8 %v1142
        %v1144 = vlaneseq
        %v1145 = vshrl.u32 %v1144, 7
        %v1146 = vsub.s32 %v1143, %v1145
        %v1147 = vrot.slane %v1139, %v1146
        %v1149 = vunpack.c.l.s4 1983009808
        %v1150 = vunpack.c.0.s8 %v1149
        %v1151 = vlaneseq
        %v1152 = vshrl.u32 %v1151, 7
        %v1153 = vsub.s32 %v1150, %v1152
        %v1154 = vrot.slane %v1140, %v1153
        %v1155 = vcombine.low %v1085, %v1089
        %v1156 = vcombine.high %v1085, %v1089
        %v1158 = vunpack.c.l.s4 1983009808
        %v1159 = vunpack.c.0.s8 %v1158
        %v1160 = vlaneseq
        %v1161 = vshrl.u32 %v1160, 7
        %v1162 = vsub.s32 %v1159, %v1161
        %v1163 = vrot.slane %v1155, %v1162
        %v1165 = vunpack.c.l.s4 1983009808
        %v1166 = vunpack.c.0.s8 %v1165
        %v1167 = vlaneseq
        %v1168 = vshrl.u32 %v1167, 7
        %v1169 = vsub.s32 %v1166, %v1168
        %v1170 = vrot.slane %v1156, %v1169
        %v1171 = vcombine.low %v1115, %v1131
        %v1172 = vcombine.high %v1115, %v1131
        %v1174 = vunpack.c.l.s4 1934713408
        %v1175 = vunpack.c.0.s8 %v1174
        %v1176 = vlaneseq
        %v1177 = vshrl.u32 %v1176, 7
        %v1178 = vsub.s32 %v1175, %v1177
        %v1179 = vrot.slane %v1171, %v1178
        %v1181 = vunpack.c.l.s4 1934713408
        %v1182 = vunpack.c.0.s8 %v1181
        %v1183 = vlaneseq
        %v1184 = vshrl.u32 %v1183, 7
        %v1185 = vsub.s32 %v1182, %v1184
        %v1186 = vrot.slane %v1172, %v1185
        %v1187 = vcombine.low %v1122, %v1138
        %v1188 = vcombine.high %v1122, %v1138
        %v1190 = vunpack.c.l.s4 1934713408
        %v1191 = vunpack.c.0.s8 %v1190
        %v1192 = vlaneseq
        %v1193 = vshrl.u32 %v1192, 7
        %v1194 = vsub.s32 %v1191, %v1193
        %v1195 = vrot.slane %v1187, %v1194
        %v1197 = vunpack.c.l.s4 1934713408
        %v1198 = vunpack.c.0.s8 %v1197
        %v1199 = vlaneseq
        %v1200 = vshrl.u32 %v1199, 7
        %v1201 = vsub.s32 %v1198, %v1200
        %v1202 = vrot.slane %v1188, %v1201
        %v1203 = vcombine.low %v1147, %v1163
        %v1204 = vcombine.high %v1147, %v1163
        %v1206 = vunpack.c.l.s4 1934713408
        %v1207 = vunpack.c.0.s8 %v1206
        %v1208 = vlaneseq
        %v1209 = vshrl.u32 %v1208, 7
        %v1210 = vsub.s32 %v1207, %v1209
        %v1211 = vrot.slane %v1203, %v1210
        %v1213 = vunpack.c.l.s4 1934713408
        %v1214 = vunpack.c.0.s8 %v1213
        %v1215 = vlaneseq
        %v1216 = vshrl.u32 %v1215, 7
        %v1217 = vsub.s32 %v1214, %v1216
        %v1218 = vrot.slane %v1204, %v1217
        %v1219 = vcombine.low %v1154, %v1170
        %v1220 = vcombine.high %v1154, %v1170
        %v1222 = vunpack.c.l.s4 1934713408
        %v1223 = vunpack.c.0.s8 %v1222
        %v1224 = vlaneseq
        %v1225 = vshrl.u32 %v1224, 7
        %v1226 = vsub.s32 %v1223, %v1225
        %v1227 = vrot.slane %v1219, %v1226
        %v1229 = vunpack.c.l.s4 1934713408
        %v1230 = vunpack.c.0.s8 %v1229
        %v1231 = vlaneseq
        %v1232 = vshrl.u32 %v1231, 7
        %v1233 = vsub.s32 %v1230, %v1232
        %v1234 = vrot.slane %v1220, %v1233
        %v1235 = vcombine.low %v1179, %v1211
        %v1236 = vcombine.high %v1179, %v1211
        %v1237 = vcombine.low %v1186, %v1218
        %v1238 = vcombine.high %v1186, %v1218
        %v1239 = vcombine.low %v1195, %v1227
        %v1240 = vcombine.high %v1195, %v1227
        %v1241 = vcombine.low %v1202, %v1234
        %v1242 = vcombine.high %v1202, %v1234
        %v1243 = vcombine.low %v1091, %v1095
        %v1244 = vcombine.high %v1091, %v1095
        %v1246 = vunpack.c.l.s4 1983009808
        %v1247 = vunpack.c.0.s8 %v1246
        %v1248 = vlaneseq
        %v1249 = vshrl.u32 %v1248, 7
        %v1250 = vsub.s32 %v1247, %v1249
        %v1251 = vrot.slane %v1243, %v1250
        %v1253 = vunpack.c.l.s4 1983009808
        %v1254 = vunpack.c.0.s8 %v1253
        %v1255 = vlaneseq
        %v1256 = vshrl.u32 %v1255, 7
        %v1257 = vsub.s32 %v1254, %v1256
        %v1258 = vrot.slane %v1244, %v1257
        %v1259 = vcombine.low %v1093, %v1097
        %v1260 = vcombine.high %v1093, %v1097
        %v1262 = vunpack.c.l.s4 1983009808
        %v1263 = vunpack.c.0.s8 %v1262
        %v1264 = vlaneseq
        %v1265 = vshrl.u32 %v1264, 7
        %v1266 = vsub.s32 %v1263, %v1265
        %v1267 = vrot.slane %v1259, %v1266
        %v1269 = vunpack.c.l.s4 1983009808
        %v1270 = vunpack.c.0.s8 %v1269
        %v1271 = vlaneseq
        %v1272 = vshrl.u32 %v1271, 7
        %v1273 = vsub.s32 %v1270, %v1272
        %v1274 = vrot.slane %v1260, %v1273
        %v1275 = vcombine.low %v1099, %v1103
        %v1276 = vcombine.high %v1099, %v1103
        %v1278 = vunpack.c.l.s4 1983009808
        %v1279 = vunpack.c.0.s8 %v1278
        %v1280 = vlaneseq
        %v1281 = vshrl.u32 %v1280, 7
        %v1282 = vsub.s32 %v1279, %v1281
        %v1283 = vrot.slane %v1275, %v1282
        %v1285 = vunpack.c.l.s4 1983009808
        %v1286 = vunpack.c.0.s8 %v1285
        %v1287 = vlaneseq
        %v1288 = vshrl.u32 %v1287, 7
        %v1289 = vsub.s32 %v1286, %v1288
        %v1290 = vrot.slane %v1276, %v1289
        %v1291 = vcombine.low %v1101, %v1105
        %v1292 = vcombine.high %v1101, %v1105
        %v1294 = vunpack.c.l.s4 1983009808
        %v1295 = vunpack.c.0.s8 %v1294
        %v1296 = vlaneseq
        %v1297 = vshrl.u32 %v1296, 7
        %v1298 = vsub.s32 %v1295, %v1297
        %v1299 = vrot.slane %v1291, %v1298
        %v1301 = vunpack.c.l.s4 1983009808
        %v1302 = vunpack.c.0.s8 %v1301
        %v1303 = vlaneseq
        %v1304 = vshrl.u32 %v1303, 7
        %v1305 = vsub.s32 %v1302, %v1304
        %v1306 = vrot.slane %v1292, %v1305
        %v1307 = vcombine.low %v1251, %v1267
        %v1308 = vcombine.high %v1251, %v1267
        %v1310 = vunpack.c.l.s4 1934713408
        %v1311 = vunpack.c.0.s8 %v1310
        %v1312 = vlaneseq
        %v1313 = vshrl.u32 %v1312, 7
        %v1314 = vsub.s32 %v1311, %v1313
        %v1315 = vrot.slane %v1307, %v1314
        %v1317 = vunpack.c.l.s4 1934713408
        %v1318 = vunpack.c.0.s8 %v1317
        %v1319 = vlaneseq
        %v1320 = vshrl.u32 %v1319, 7
        %v1321 = vsub.s32 %v1318, %v1320
        %v1322 = vrot.slane %v1308, %v1321
        %v1323 = vcombine.low %v1258, %v1274
        %v1324 = vcombine.high %v1258, %v1274
        %v1326 = vunpack.c.l.s4 1934713408
        %v1327 = vunpack.c.0.s8 %v1326
        %v1328 = vlaneseq
        %v1329 = vshrl.u32 %v1328, 7
        %v1330 = vsub.s32 %v1327, %v1329
        %v1331 = vrot.slane %v1323, %v1330
        %v1333 = vunpack.c.l.s4 1934713408
        %v1334 = vunpack.c.0.s8 %v1333
        %v1335 = vlaneseq
        %v1336 = vshrl.u32 %v1335, 7
        %v1337 = vsub.s32 %v1334, %v1336
        %v1338 = vrot.slane %v1324, %v1337
        %v1339 = vcombine.low %v1283, %v1299
        %v1340 = vcombine.high %v1283, %v1299
        %v1342 = vunpack.c.l.s4 1934713408
        %v1343 = vunpack.c.0.s8 %v1342
        %v1344 = vlaneseq
        %v1345 = vshrl.u32 %v1344, 7
        %v1346 = vsub.s32 %v1343, %v1345
        %v1347 = vrot.slane %v1339, %v1346
        %v1349 = vunpack.c.l.s4 1934713408
        %v1350 = vunpack.c.0.s8 %v1349
        %v1351 = vlaneseq
        %v1352 = vshrl.u32 %v1351, 7
        %v1353 = vsub.s32 %v1350, %v1352
        %v1354 = vrot.slane %v1340, %v1353
        %v1355 = vcombine.low %v1290, %v1306
        %v1356 = vcombine.high %v1290, %v1306
        %v1358 = vunpack.c.l.s4 1934713408
        %v1359 = vunpack.c.0.s8 %v1358
        %v1360 = vlaneseq
        %v1361 = vshrl.u32 %v1360, 7
        %v1362 = vsub.s32 %v1359, %v1361
        %v1363 = vrot.slane %v1355, %v1362
        %v1365 = vunpack.c.l.s4 1934713408
        %v1366 = vunpack.c.0.s8 %v1365
        %v1367 = vlaneseq
        %v1368 = vshrl.u32 %v1367, 7
        %v1369 = vsub.s32 %v1366, %v1368
        %v1370 = vrot.slane %v1356, %v1369
        %v1371 = vcombine.low %v1315, %v1347
        %v1372 = vcombine.high %v1315, %v1347
        %v1373 = vcombine.low %v1322, %v1354
        %v1374 = vcombine.high %v1322, %v1354
        %v1375 = vcombine.low %v1331, %v1363
        %v1376 = vcombine.high %v1331, %v1363
        %v1377 = vcombine.low %v1338, %v1370
        %v1378 = vcombine.high %v1338, %v1370
        %v1379 = vcombine.low %v1076, %v1080
        %v1380 = vcombine.high %v1076, %v1080
        %v1382 = vunpack.c.l.s4 1983009808
        %v1383 = vunpack.c.0.s8 %v1382
        %v1384 = vlaneseq
        %v1385 = vshrl.u32 %v1384, 7
        %v1386 = vsub.s32 %v1383, %v1385
        %v1387 = vrot.slane %v1379, %v1386
        %v1389 = vunpack.c.l.s4 1983009808
        %v1390 = vunpack.c.0.s8 %v1389
        %v1391 = vlaneseq
        %v1392 = vshrl.u32 %v1391, 7
        %v1393 = vsub.s32 %v1390, %v1392
        %v1394 = vrot.slane %v1380, %v1393
        %v1395 = vcombine.low %v1078, %v1082
        %v1396 = vcombine.high %v1078, %v1082
        %v1398 = vunpack.c.l.s4 1983009808
        %v1399 = vunpack.c.0.s8 %v1398
        %v1400 = vlaneseq
        %v1401 = vshrl.u32 %v1400, 7
        %v1402 = vsub.s32 %v1399, %v1401
        %v1403 = vrot.slane %v1395, %v1402
        %v1405 = vunpack.c.l.s4 1983009808
        %v1406 = vunpack.c.0.s8 %v1405
        %v1407 = vlaneseq
        %v1408 = vshrl.u32 %v1407, 7
        %v1409 = vsub.s32 %v1406, %v1408
        %v1410 = vrot.slane %v1396, %v1409
        %v1411 = vcombine.low %v1084, %v1088
        %v1412 = vcombine.high %v1084, %v1088
        %v1414 = vunpack.c.l.s4 1983009808
        %v1415 = vunpack.c.0.s8 %v1414
        %v1416 = vlaneseq
        %v1417 = vshrl.u32 %v1416, 7
        %v1418 = vsub.s32 %v1415, %v1417
        %v1419 = vrot.slane %v1411, %v1418
        %v1421 = vunpack.c.l.s4 1983009808
        %v1422 = vunpack.c.0.s8 %v1421
        %v1423 = vlaneseq
        %v1424 = vshrl.u32 %v1423, 7
        %v1425 = vsub.s32 %v1422, %v1424
        %v1426 = vrot.slane %v1412, %v1425
        %v1427 = vcombine.low %v1086, %v1090
        %v1428 = vcombine.high %v1086, %v1090
        %v1430 = vunpack.c.l.s4 1983009808
        %v1431 = vunpack.c.0.s8 %v1430
        %v1432 = vlaneseq
        %v1433 = vshrl.u32 %v1432, 7
        %v1434 = vsub.s32 %v1431, %v1433
        %v1435 = vrot.slane %v1427, %v1434
        %v1437 = vunpack.c.l.s4 1983009808
        %v1438 = vunpack.c.0.s8 %v1437
        %v1439 = vlaneseq
        %v1440 = vshrl.u32 %v1439, 7
        %v1441 = vsub.s32 %v1438, %v1440
        %v1442 = vrot.slane %v1428, %v1441
        %v1443 = vcombine.low %v1387, %v1403
        %v1444 = vcombine.high %v1387, %v1403
        %v1446 = vunpack.c.l.s4 1934713408
        %v1447 = vunpack.c.0.s8 %v1446
        %v1448 = vlaneseq
        %v1449 = vshrl.u32 %v1448, 7
        %v1450 = vsub.s32 %v1447, %v1449
        %v1451 = vrot.slane %v1443, %v1450
        %v1453 = vunpack.c.l.s4 1934713408
        %v1454 = vunpack.c.0.s8 %v1453
        %v1455 = vlaneseq
        %v1456 = vshrl.u32 %v1455, 7
        %v1457 = vsub.s32 %v1454, %v1456
        %v1458 = vrot.slane %v1444, %v1457
        %v1459 = vcombine.low %v1394, %v1410
        %v1460 = vcombine.high %v1394, %v1410
        %v1462 = vunpack.c.l.s4 1934713408
        %v1463 = vunpack.c.0.s8 %v1462
        %v1464 = vlaneseq
        %v1465 = vshrl.u32 %v1464, 7
        %v1466 = vsub.s32 %v1463, %v1465
        %v1467 = vrot.slane %v1459, %v1466
        %v1469 = vunpack.c.l.s4 1934713408
        %v1470 = vunpack.c.0.s8 %v1469
        %v1471 = vlaneseq
        %v1472 = vshrl.u32 %v1471, 7
        %v1473 = vsub.s32 %v1470, %v1472
        %v1474 = vrot.slane %v1460, %v1473
        %v1475 = vcombine.low %v1419, %v1435
        %v1476 = vcombine.high %v1419, %v1435
        %v1478 = vunpack.c.l.s4 1934713408
        %v1479 = vunpack.c.0.s8 %v1478
        %v1480 = vlaneseq
        %v1481 = vshrl.u32 %v1480, 7
        %v1482 = vsub.s32 %v1479, %v1481
        %v1483 = vrot.slane %v1475, %v1482
        %v1485 = vunpack.c.l.s4 1934713408
        %v1486 = vunpack.c.0.s8 %v1485
        %v1487 = vlaneseq
        %v1488 = vshrl.u32 %v1487, 7
        %v1489 = vsub.s32 %v1486, %v1488
        %v1490 = vrot.slane %v1476, %v1489
        %v1491 = vcombine.low %v1426, %v1442
        %v1492 = vcombine.high %v1426, %v1442
        %v1494 = vunpack.c.l.s4 1934713408
        %v1495 = vunpack.c.0.s8 %v1494
        %v1496 = vlaneseq
        %v1497 = vshrl.u32 %v1496, 7
        %v1498 = vsub.s32 %v1495, %v1497
        %v1499 = vrot.slane %v1491, %v1498
        %v1501 = vunpack.c.l.s4 1934713408
        %v1502 = vunpack.c.0.s8 %v1501
        %v1503 = vlaneseq
        %v1504 = vshrl.u32 %v1503, 7
        %v1505 = vsub.s32 %v1502, %v1504
        %v1506 = vrot.slane %v1492, %v1505
        %v1507 = vcombine.low %v1451, %v1483
        %v1508 = vcombine.high %v1451, %v1483
        %v1509 = vcombine.low %v1458, %v1490
        %v1510 = vcombine.high %v1458, %v1490
        %v1511 = vcombine.low %v1467, %v1499
        %v1512 = vcombine.high %v1467, %v1499
        %v1513 = vcombine.low %v1474, %v1506
        %v1514 = vcombine.high %v1474, %v1506
        %v1515 = vcombine.low %v1092, %v1096
        %v1516 = vcombine.high %v1092, %v1096
        %v1518 = vunpack.c.l.s4 1983009808
        %v1519 = vunpack.c.0.s8 %v1518
        %v1520 = vlaneseq
        %v1521 = vshrl.u32 %v1520, 7
        %v1522 = vsub.s32 %v1519, %v1521
        %v1523 = vrot.slane %v1515, %v1522
        %v1525 = vunpack.c.l.s4 1983009808
        %v1526 = vunpack.c.0.s8 %v1525
        %v1527 = vlaneseq
        %v1528 = vshrl.u32 %v1527, 7
        %v1529 = vsub.s32 %v1526, %v1528
        %v1530 = vrot.slane %v1516, %v1529
        %v1531 = vcombine.low %v1094, %v1098
        %v1532 = vcombine.high %v1094, %v1098
        %v1534 = vunpack.c.l.s4 1983009808
        %v1535 = vunpack.c.0.s8 %v1534
        %v1536 = vlaneseq
        %v1537 = vshrl.u32 %v1536, 7
        %v1538 = vsub.s32 %v1535, %v1537
        %v1539 = vrot.slane %v1531, %v1538
        %v1541 = vunpack.c.l.s4 1983009808
        %v1542 = vunpack.c.0.s8 %v1541
        %v1543 = vlaneseq
        %v1544 = vshrl.u32 %v1543, 7
        %v1545 = vsub.s32 %v1542, %v1544
        %v1546 = vrot.slane %v1532, %v1545
        %v1547 = vcombine.low %v1100, %v1104
        %v1548 = vcombine.high %v1100, %v1104
        %v1550 = vunpack.c.l.s4 1983009808
        %v1551 = vunpack.c.0.s8 %v1550
        %v1552 = vlaneseq
        %v1553 = vshrl.u32 %v1552, 7
        %v1554 = vsub.s32 %v1551, %v1553
        %v1555 = vrot.slane %v1547, %v1554
        %v1557 = vunpack.c.l.s4 1983009808
        %v1558 = vunpack.c.0.s8 %v1557
        %v1559 = vlaneseq
        %v1560 = vshrl.u32 %v1559, 7
        %v1561 = vsub.s32 %v1558, %v1560
        %v1562 = vrot.slane %v1548, %v1561
        %v1563 = vcombine.low %v1102, %v1106
        %v1564 = vcombine.high %v1102, %v1106
        %v1566 = vunpack.c.l.s4 1983009808
        %v1567 = vunpack.c.0.s8 %v1566
        %v1568 = vlaneseq
        %v1569 = vshrl.u32 %v1568, 7
        %v1570 = vsub.s32 %v1567, %v1569
        %v1571 = vrot.slane %v1563, %v1570
        %v1573 = vunpack.c.l.s4 1983009808
        %v1574 = vunpack.c.0.s8 %v1573
        %v1575 = vlaneseq
        %v1576 = vshrl.u32 %v1575, 7
        %v1577 = vsub.s32 %v1574, %v1576
        %v1578 = vrot.slane %v1564, %v1577
        %v1579 = vcombine.low %v1523, %v1539
        %v1580 = vcombine.high %v1523, %v1539
        %v1582 = vunpack.c.l.s4 1934713408
        %v1583 = vunpack.c.0.s8 %v1582
        %v1584 = vlaneseq
        %v1585 = vshrl.u32 %v1584, 7
        %v1586 = vsub.s32 %v1583, %v1585
        %v1587 = vrot.slane %v1579, %v1586
        %v1589 = vunpack.c.l.s4 1934713408
        %v1590 = vunpack.c.0.s8 %v1589
        %v1591 = vlaneseq
        %v1592 = vshrl.u32 %v1591, 7
        %v1593 = vsub.s32 %v1590, %v1592
        %v1594 = vrot.slane %v1580, %v1593
        %v1595 = vcombine.low %v1530, %v1546
        %v1596 = vcombine.high %v1530, %v1546
        %v1598 = vunpack.c.l.s4 1934713408
        %v1599 = vunpack.c.0.s8 %v1598
        %v1600 = vlaneseq
        %v1601 = vshrl.u32 %v1600, 7
        %v1602 = vsub.s32 %v1599, %v1601
        %v1603 = vrot.slane %v1595, %v1602
        %v1605 = vunpack.c.l.s4 1934713408
        %v1606 = vunpack.c.0.s8 %v1605
        %v1607 = vlaneseq
        %v1608 = vshrl.u32 %v1607, 7
        %v1609 = vsub.s32 %v1606, %v1608
        %v1610 = vrot.slane %v1596, %v1609
        %v1611 = vcombine.low %v1555, %v1571
        %v1612 = vcombine.high %v1555, %v1571
        %v1614 = vunpack.c.l.s4 1934713408
        %v1615 = vunpack.c.0.s8 %v1614
        %v1616 = vlaneseq
        %v1617 = vshrl.u32 %v1616, 7
        %v1618 = vsub.s32 %v1615, %v1617
        %v1619 = vrot.slane %v1611, %v1618
        %v1621 = vunpack.c.l.s4 1934713408
        %v1622 = vunpack.c.0.s8 %v1621
        %v1623 = vlaneseq
        %v1624 = vshrl.u32 %v1623, 7
        %v1625 = vsub.s32 %v1622, %v1624
        %v1626 = vrot.slane %v1612, %v1625
        %v1627 = vcombine.low %v1562, %v1578
        %v1628 = vcombine.high %v1562, %v1578
        %v1630 = vunpack.c.l.s4 1934713408
        %v1631 = vunpack.c.0.s8 %v1630
        %v1632 = vlaneseq
        %v1633 = vshrl.u32 %v1632, 7
        %v1634 = vsub.s32 %v1631, %v1633
        %v1635 = vrot.slane %v1627, %v1634
        %v1637 = vunpack.c.l.s4 1934713408
        %v1638 = vunpack.c.0.s8 %v1637
        %v1639 = vlaneseq
        %v1640 = vshrl.u32 %v1639, 7
        %v1641 = vsub.s32 %v1638, %v1640
        %v1642 = vrot.slane %v1628, %v1641
        %v1643 = vcombine.low %v1587, %v1619
        %v1644 = vcombine.high %v1587, %v1619
        %v1645 = vcombine.low %v1594, %v1626
        %v1646 = vcombine.high %v1594, %v1626
        %v1647 = vcombine.low %v1603, %v1635
        %v1648 = vcombine.high %v1603, %v1635
        %v1649 = vcombine.low %v1610, %v1642
        %v1650 = vcombine.high %v1610, %v1642
        %v1651 = vld [vmem:[%s5] sm:$0xff]
        %v1652 = vld [vmem:[%s6] sm:$0xff]
        %1654 = vset.pattern.permute.xlu0 0
        %1655 = vperm.xlu0 %1654, %v1652
        %v1656 = vpop.permute.xlu0 %1655
        %vm1658 = vcmask 130048
        %v1660 = vsel %vm1658, %v1651, 0
        %1662 = vmatprep.subr.mxu0 %v1236
        %1663 = vmatpush1.msra.mxu0 %v1235
        %1664 = vmatprep.subr.mxu0 %v1372
        %1665 = vmatpush1.msra.mxu0 %v1371
        %1666 = vmatprep.subr.mxu0 0.0
        %1667 = vmatpush1.msra.mxu0 0.0
        %1668 = vmatprep.subr.mxu0 0.0
        %1669 = vmatpush1.msra.mxu0 0.0
        %1670 = vmatprep.subr.mxu0 0.0
        %1671 = vmatpush1.msra.mxu0 0.0
        %1672 = vmatprep.subr.mxu0 0.0
        %1673 = vmatpush1.msra.mxu0 0.0
        %1674 = vmatprep.subr.mxu0 0.0
        %1675 = vmatpush1.msra.mxu0 0.0
        %1676 = vmatprep.subr.mxu0 0.0
        %1677 = vmatpush1.msra.mxu0 0.0
        %1678 = vmatprep.subr.mxu0 0.0
        %1679 = vmatpush1.msra.mxu0 0.0
        %1680 = vmatprep.subr.mxu0 0.0
        %1681 = vmatpush1.msra.mxu0 0.0
        %1682 = vmatprep.subr.mxu0 0.0
        %1683 = vmatpush1.msra.mxu0 0.0
        %1684 = vmatprep.subr.mxu0 0.0
        %1685 = vmatpush1.msra.mxu0 0.0
        %1686 = vmatprep.subr.mxu0 0.0
        %1687 = vmatpush1.msra.mxu0 0.0
        %1688 = vmatprep.subr.mxu0 0.0
        %1689 = vmatpush1.msra.mxu0 0.0
        %1690 = vmatprep.subr.mxu0 0.0
        %1691 = vmatpush1.msra.mxu0 0.0
        %1692 = vmatprep.subr.mxu0 0.0
        %1693 = vmatpush1.msra.mxu0 0.0
        %1694 = vmatprep.subr.mxu0 0.0
        %1695 = vmatpush1.msra.mxu0 0.0
        %1696 = vmatprep.subr.mxu0 0.0
        %1697 = vmatpush1.msra.mxu0 0.0
        %1698 = vmatprep.subr.mxu0 0.0
        %1699 = vmatpush1.msra.mxu0 0.0
        %1700 = vmatprep.subr.mxu0 0.0
        %1701 = vmatpush1.msra.mxu0 0.0
        %1702 = vmatprep.subr.mxu0 0.0
        %1703 = vmatpush1.msra.mxu0 0.0
        %1704 = vmatprep.subr.mxu0 0.0
        %1705 = vmatpush1.msra.mxu0 0.0
        %1706 = vmatprep.subr.mxu0 0.0
        %1707 = vmatpush1.msra.mxu0 0.0
        %1708 = vmatprep.subr.mxu0 0.0
        %1709 = vmatpush1.msra.mxu0 0.0
        %1710 = vmatprep.subr.mxu0 0.0
        %1711 = vmatpush1.msra.mxu0 0.0
        %1712 = vmatprep.subr.mxu0 0.0
        %1713 = vmatpush1.msra.mxu0 0.0
        %1714 = vmatprep.subr.mxu0 0.0
        %1715 = vmatpush1.msra.mxu0 0.0
        %1716 = vmatprep.subr.mxu0 0.0
        %1717 = vmatpush1.msra.mxu0 0.0
        %1718 = vmatprep.subr.mxu0 0.0
        %1719 = vmatpush1.msra.mxu0 0.0
        %1720 = vmatprep.subr.mxu0 0.0
        %1721 = vmatpush1.msra.mxu0 0.0
        %1722 = vmatprep.subr.mxu0 0.0
        %1723 = vmatpush1.msra.mxu0 0.0
        %1724 = vmatprep.subr.mxu0 0.0
        %1725 = vmatpush1.msra.mxu0 0.0
        %1726 = vmatprep.mubr.f32.mxu0 0.0
        %1727 = vmatmul.mubr.f32.gmra.mrb[0].mxu0 %v1660
        %v1728 = vpop.f32.mrb[0].mxu0
        %v1729 = vadd.f32 %v1656, %v1728
        %v1730 = vpop.f32.mrb[0].mxu0
        %v1731 = vadd.f32 %v1656, %v1730
        %1732 = vdwg.mxu0
        %1733 = vmatprep.subr.mxu0 %v1238
        %1734 = vmatpush1.msra.mxu0 %v1237
        %1735 = vmatprep.subr.mxu0 %v1374
        %1736 = vmatpush1.msra.mxu0 %v1373
        %1737 = vmatprep.subr.mxu0 0.0
        %1738 = vmatpush1.msra.mxu0 0.0
        %1739 = vmatprep.subr.mxu0 0.0
        %1740 = vmatpush1.msra.mxu0 0.0
        %1741 = vmatprep.subr.mxu0 0.0
        %1742 = vmatpush1.msra.mxu0 0.0
        %1743 = vmatprep.subr.mxu0 0.0
        %1744 = vmatpush1.msra.mxu0 0.0
        %1745 = vmatprep.subr.mxu0 0.0
        %1746 = vmatpush1.msra.mxu0 0.0
        %1747 = vmatprep.subr.mxu0 0.0
        %1748 = vmatpush1.msra.mxu0 0.0
        %1749 = vmatprep.subr.mxu0 0.0
        %1750 = vmatpush1.msra.mxu0 0.0
        %1751 = vmatprep.subr.mxu0 0.0
        %1752 = vmatpush1.msra.mxu0 0.0
        %1753 = vmatprep.subr.mxu0 0.0
        %1754 = vmatpush1.msra.mxu0 0.0
        %1755 = vmatprep.subr.mxu0 0.0
        %1756 = vmatpush1.msra.mxu0 0.0
        %1757 = vmatprep.subr.mxu0 0.0
        %1758 = vmatpush1.msra.mxu0 0.0
        %1759 = vmatprep.subr.mxu0 0.0
        %1760 = vmatpush1.msra.mxu0 0.0
        %1761 = vmatprep.subr.mxu0 0.0
        %1762 = vmatpush1.msra.mxu0 0.0
        %1763 = vmatprep.subr.mxu0 0.0
        %1764 = vmatpush1.msra.mxu0 0.0
        %1765 = vmatprep.subr.mxu0 0.0
        %1766 = vmatpush1.msra.mxu0 0.0
        %1767 = vmatprep.subr.mxu0 0.0
        %1768 = vmatpush1.msra.mxu0 0.0
        %1769 = vmatprep.subr.mxu0 0.0
        %1770 = vmatpush1.msra.mxu0 0.0
        %1771 = vmatprep.subr.mxu0 0.0
        %1772 = vmatpush1.msra.mxu0 0.0
        %1773 = vmatprep.subr.mxu0 0.0
        %1774 = vmatpush1.msra.mxu0 0.0
        %1775 = vmatprep.subr.mxu0 0.0
        %1776 = vmatpush1.msra.mxu0 0.0
        %1777 = vmatprep.subr.mxu0 0.0
        %1778 = vmatpush1.msra.mxu0 0.0
        %1779 = vmatprep.subr.mxu0 0.0
        %1780 = vmatpush1.msra.mxu0 0.0
        %1781 = vmatprep.subr.mxu0 0.0
        %1782 = vmatpush1.msra.mxu0 0.0
        %1783 = vmatprep.subr.mxu0 0.0
        %1784 = vmatpush1.msra.mxu0 0.0
        %1785 = vmatprep.subr.mxu0 0.0
        %1786 = vmatpush1.msra.mxu0 0.0
        %1787 = vmatprep.subr.mxu0 0.0
        %1788 = vmatpush1.msra.mxu0 0.0
        %1789 = vmatprep.subr.mxu0 0.0
        %1790 = vmatpush1.msra.mxu0 0.0
        %1791 = vmatprep.subr.mxu0 0.0
        %1792 = vmatpush1.msra.mxu0 0.0
        %1793 = vmatprep.subr.mxu0 0.0
        %1794 = vmatpush1.msra.mxu0 0.0
        %1795 = vmatprep.subr.mxu0 0.0
        %1796 = vmatpush1.msra.mxu0 0.0
        %1797 = vmatprep.mubr.f32.mxu0 0.0
        %1798 = vmatmul.mubr.f32.gmra.mrb[0].mxu0 %v1660
        %v1799 = vpop.f32.mrb[0].mxu0
        %v1800 = vadd.f32 %v1656, %v1799
        %v1801 = vpop.f32.mrb[0].mxu0
        %v1802 = vadd.f32 %v1656, %v1801
        %1803 = vdwg.mxu0
        %1804 = vmatprep.subr.mxu0 %v1240
        %1805 = vmatpush1.msra.mxu0 %v1239
        %1806 = vmatprep.subr.mxu0 %v1376
        %1807 = vmatpush1.msra.mxu0 %v1375
        %1808 = vmatprep.subr.mxu0 0.0
        %1809 = vmatpush1.msra.mxu0 0.0
        %1810 = vmatprep.subr.mxu0 0.0
        %1811 = vmatpush1.msra.mxu0 0.0
        %1812 = vmatprep.subr.mxu0 0.0
        %1813 = vmatpush1.msra.mxu0 0.0
        %1814 = vmatprep.subr.mxu0 0.0
        %1815 = vmatpush1.msra.mxu0 0.0
        %1816 = vmatprep.subr.mxu0 0.0
        %1817 = vmatpush1.msra.mxu0 0.0
        %1818 = vmatprep.subr.mxu0 0.0
        %1819 = vmatpush1.msra.mxu0 0.0
        %1820 = vmatprep.subr.mxu0 0.0
        %1821 = vmatpush1.msra.mxu0 0.0
        %1822 = vmatprep.subr.mxu0 0.0
        %1823 = vmatpush1.msra.mxu0 0.0
        %1824 = vmatprep.subr.mxu0 0.0
        %1825 = vmatpush1.msra.mxu0 0.0
        %1826 = vmatprep.subr.mxu0 0.0
        %1827 = vmatpush1.msra.mxu0 0.0
        %1828 = vmatprep.subr.mxu0 0.0
        %1829 = vmatpush1.msra.mxu0 0.0
        %1830 = vmatprep.subr.mxu0 0.0
        %1831 = vmatpush1.msra.mxu0 0.0
        %1832 = vmatprep.subr.mxu0 0.0
        %1833 = vmatpush1.msra.mxu0 0.0
        %1834 = vmatprep.subr.mxu0 0.0
        %1835 = vmatpush1.msra.mxu0 0.0
        %1836 = vmatprep.subr.mxu0 0.0
        %1837 = vmatpush1.msra.mxu0 0.0
        %1838 = vmatprep.subr.mxu0 0.0
        %1839 = vmatpush1.msra.mxu0 0.0
        %1840 = vmatprep.subr.mxu0 0.0
        %1841 = vmatpush1.msra.mxu0 0.0
        %1842 = vmatprep.subr.mxu0 0.0
        %1843 = vmatpush1.msra.mxu0 0.0
        %1844 = vmatprep.subr.mxu0 0.0
        %1845 = vmatpush1.msra.mxu0 0.0
        %1846 = vmatprep.subr.mxu0 0.0
        %1847 = vmatpush1.msra.mxu0 0.0
        %1848 = vmatprep.subr.mxu0 0.0
        %1849 = vmatpush1.msra.mxu0 0.0
        %1850 = vmatprep.subr.mxu0 0.0
        %1851 = vmatpush1.msra.mxu0 0.0
        %1852 = vmatprep.subr.mxu0 0.0
        %1853 = vmatpush1.msra.mxu0 0.0
        %1854 = vmatprep.subr.mxu0 0.0
        %1855 = vmatpush1.msra.mxu0 0.0
        %1856 = vmatprep.subr.mxu0 0.0
        %1857 = vmatpush1.msra.mxu0 0.0
        %1858 = vmatprep.subr.mxu0 0.0
        %1859 = vmatpush1.msra.mxu0 0.0
        %1860 = vmatprep.subr.mxu0 0.0
        %1861 = vmatpush1.msra.mxu0 0.0
        %1862 = vmatprep.subr.mxu0 0.0
        %1863 = vmatpush1.msra.mxu0 0.0
        %1864 = vmatprep.subr.mxu0 0.0
        %1865 = vmatpush1.msra.mxu0 0.0
        %1866 = vmatprep.subr.mxu0 0.0
        %1867 = vmatpush1.msra.mxu0 0.0
        %1868 = vmatprep.mubr.f32.mxu0 0.0
        %1869 = vmatmul.mubr.f32.gmra.mrb[0].mxu0 %v1660
        %v1870 = vpop.f32.mrb[0].mxu0
        %v1871 = vadd.f32 %v1656, %v1870
        %v1872 = vpop.f32.mrb[0].mxu0
        %v1873 = vadd.f32 %v1656, %v1872
        %1874 = vdwg.mxu0
        %1875 = vmatprep.subr.mxu0 %v1242
        %1876 = vmatpush1.msra.mxu0 %v1241
        %1877 = vmatprep.subr.mxu0 %v1378
        %1878 = vmatpush1.msra.mxu0 %v1377
        %1879 = vmatprep.subr.mxu0 0.0
        %1880 = vmatpush1.msra.mxu0 0.0
        %1881 = vmatprep.subr.mxu0 0.0
        %1882 = vmatpush1.msra.mxu0 0.0
        %1883 = vmatprep.subr.mxu0 0.0
        %1884 = vmatpush1.msra.mxu0 0.0
        %1885 = vmatprep.subr.mxu0 0.0
        %1886 = vmatpush1.msra.mxu0 0.0
        %1887 = vmatprep.subr.mxu0 0.0
        %1888 = vmatpush1.msra.mxu0 0.0
        %1889 = vmatprep.subr.mxu0 0.0
        %1890 = vmatpush1.msra.mxu0 0.0
        %1891 = vmatprep.subr.mxu0 0.0
        %1892 = vmatpush1.msra.mxu0 0.0
        %1893 = vmatprep.subr.mxu0 0.0
        %1894 = vmatpush1.msra.mxu0 0.0
        %1895 = vmatprep.subr.mxu0 0.0
        %1896 = vmatpush1.msra.mxu0 0.0
        %1897 = vmatprep.subr.mxu0 0.0
        %1898 = vmatpush1.msra.mxu0 0.0
        %1899 = vmatprep.subr.mxu0 0.0
        %1900 = vmatpush1.msra.mxu0 0.0
        %1901 = vmatprep.subr.mxu0 0.0
        %1902 = vmatpush1.msra.mxu0 0.0
        %1903 = vmatprep.subr.mxu0 0.0
        %1904 = vmatpush1.msra.mxu0 0.0
        %1905 = vmatprep.subr.mxu0 0.0
        %1906 = vmatpush1.msra.mxu0 0.0
        %1907 = vmatprep.subr.mxu0 0.0
        %1908 = vmatpush1.msra.mxu0 0.0
        %1909 = vmatprep.subr.mxu0 0.0
        %1910 = vmatpush1.msra.mxu0 0.0
        %1911 = vmatprep.subr.mxu0 0.0
        %1912 = vmatpush1.msra.mxu0 0.0
        %1913 = vmatprep.subr.mxu0 0.0
        %1914 = vmatpush1.msra.mxu0 0.0
        %1915 = vmatprep.subr.mxu0 0.0
        %1916 = vmatpush1.msra.mxu0 0.0
        %1917 = vmatprep.subr.mxu0 0.0
        %1918 = vmatpush1.msra.mxu0 0.0
        %1919 = vmatprep.subr.mxu0 0.0
        %1920 = vmatpush1.msra.mxu0 0.0
        %1921 = vmatprep.subr.mxu0 0.0
        %1922 = vmatpush1.msra.mxu0 0.0
        %1923 = vmatprep.subr.mxu0 0.0
        %1924 = vmatpush1.msra.mxu0 0.0
        %1925 = vmatprep.subr.mxu0 0.0
        %1926 = vmatpush1.msra.mxu0 0.0
        %1927 = vmatprep.subr.mxu0 0.0
        %1928 = vmatpush1.msra.mxu0 0.0
        %1929 = vmatprep.subr.mxu0 0.0
        %1930 = vmatpush1.msra.mxu0 0.0
        %1931 = vmatprep.subr.mxu0 0.0
        %1932 = vmatpush1.msra.mxu0 0.0
        %1933 = vmatprep.subr.mxu0 0.0
        %1934 = vmatpush1.msra.mxu0 0.0
        %1935 = vmatprep.subr.mxu0 0.0
        %1936 = vmatpush1.msra.mxu0 0.0
        %1937 = vmatprep.subr.mxu0 0.0
        %1938 = vmatpush1.msra.mxu0 0.0
        %1939 = vmatprep.mubr.f32.mxu0 0.0
        %1940 = vmatmul.mubr.f32.gmra.mrb[0].mxu0 %v1660
        %v1941 = vpop.f32.mrb[0].mxu0
        %v1942 = vadd.f32 %v1656, %v1941
        %v1943 = vpop.f32.mrb[0].mxu0
        %v1944 = vadd.f32 %v1656, %v1943
        %1945 = vdwg.mxu0
        %1946 = vmatprep.subr.mxu0 %v1508
        %1947 = vmatpush1.msra.mxu0 %v1507
        %1948 = vmatprep.subr.mxu0 %v1644
        %1949 = vmatpush1.msra.mxu0 %v1643
        %1950 = vmatprep.subr.mxu0 0.0
        %1951 = vmatpush1.msra.mxu0 0.0
        %1952 = vmatprep.subr.mxu0 0.0
        %1953 = vmatpush1.msra.mxu0 0.0
        %1954 = vmatprep.subr.mxu0 0.0
        %1955 = vmatpush1.msra.mxu0 0.0
        %1956 = vmatprep.subr.mxu0 0.0
        %1957 = vmatpush1.msra.mxu0 0.0
        %1958 = vmatprep.subr.mxu0 0.0
        %1959 = vmatpush1.msra.mxu0 0.0
        %1960 = vmatprep.subr.mxu0 0.0
        %1961 = vmatpush1.msra.mxu0 0.0
        %1962 = vmatprep.subr.mxu0 0.0
        %1963 = vmatpush1.msra.mxu0 0.0
        %1964 = vmatprep.subr.mxu0 0.0
        %1965 = vmatpush1.msra.mxu0 0.0
        %1966 = vmatprep.subr.mxu0 0.0
        %1967 = vmatpush1.msra.mxu0 0.0
        %1968 = vmatprep.subr.mxu0 0.0
        %1969 = vmatpush1.msra.mxu0 0.0
        %1970 = vmatprep.subr.mxu0 0.0
        %1971 = vmatpush1.msra.mxu0 0.0
        %1972 = vmatprep.subr.mxu0 0.0
        %1973 = vmatpush1.msra.mxu0 0.0
        %1974 = vmatprep.subr.mxu0 0.0
        %1975 = vmatpush1.msra.mxu0 0.0
        %1976 = vmatprep.subr.mxu0 0.0
        %1977 = vmatpush1.msra.mxu0 0.0
        %1978 = vmatprep.subr.mxu0 0.0
        %1979 = vmatpush1.msra.mxu0 0.0
        %1980 = vmatprep.subr.mxu0 0.0
        %1981 = vmatpush1.msra.mxu0 0.0
        %1982 = vmatprep.subr.mxu0 0.0
        %1983 = vmatpush1.msra.mxu0 0.0
        %1984 = vmatprep.subr.mxu0 0.0
        %1985 = vmatpush1.msra.mxu0 0.0
        %1986 = vmatprep.subr.mxu0 0.0
        %1987 = vmatpush1.msra.mxu0 0.0
        %1988 = vmatprep.subr.mxu0 0.0
        %1989 = vmatpush1.msra.mxu0 0.0
        %1990 = vmatprep.subr.mxu0 0.0
        %1991 = vmatpush1.msra.mxu0 0.0
        %1992 = vmatprep.subr.mxu0 0.0
        %1993 = vmatpush1.msra.mxu0 0.0
        %1994 = vmatprep.subr.mxu0 0.0
        %1995 = vmatpush1.msra.mxu0 0.0
        %1996 = vmatprep.subr.mxu0 0.0
        %1997 = vmatpush1.msra.mxu0 0.0
        %1998 = vmatprep.subr.mxu0 0.0
        %1999 = vmatpush1.msra.mxu0 0.0
        %2000 = vmatprep.subr.mxu0 0.0
        %2001 = vmatpush1.msra.mxu0 0.0
        %2002 = vmatprep.subr.mxu0 0.0
        %2003 = vmatpush1.msra.mxu0 0.0
        %2004 = vmatprep.subr.mxu0 0.0
        %2005 = vmatpush1.msra.mxu0 0.0
        %2006 = vmatprep.subr.mxu0 0.0
        %2007 = vmatpush1.msra.mxu0 0.0
        %2008 = vmatprep.subr.mxu0 0.0
        %2009 = vmatpush1.msra.mxu0 0.0
        %2010 = vmatprep.mubr.f32.mxu0 0.0
        %2011 = vmatmul.mubr.f32.gmra.mrb[0].mxu0 %v1660
        %v2012 = vpop.f32.mrb[0].mxu0
        %v2013 = vadd.f32 %v1656, %v2012
        %v2014 = vpop.f32.mrb[0].mxu0
        %v2015 = vadd.f32 %v1656, %v2014
        %2016 = vdwg.mxu0
        %2017 = vmatprep.subr.mxu0 %v1510
        %2018 = vmatpush1.msra.mxu0 %v1509
        %2019 = vmatprep.subr.mxu0 %v1646
        %2020 = vmatpush1.msra.mxu0 %v1645
        %2021 = vmatprep.subr.mxu0 0.0
        %2022 = vmatpush1.msra.mxu0 0.0
        %2023 = vmatprep.subr.mxu0 0.0
        %2024 = vmatpush1.msra.mxu0 0.0
        %2025 = vmatprep.subr.mxu0 0.0
        %2026 = vmatpush1.msra.mxu0 0.0
        %2027 = vmatprep.subr.mxu0 0.0
        %2028 = vmatpush1.msra.mxu0 0.0
        %2029 = vmatprep.subr.mxu0 0.0
        %2030 = vmatpush1.msra.mxu0 0.0
        %2031 = vmatprep.subr.mxu0 0.0
        %2032 = vmatpush1.msra.mxu0 0.0
        %2033 = vmatprep.subr.mxu0 0.0
        %2034 = vmatpush1.msra.mxu0 0.0
        %2035 = vmatprep.subr.mxu0 0.0
        %2036 = vmatpush1.msra.mxu0 0.0
        %2037 = vmatprep.subr.mxu0 0.0
        %2038 = vmatpush1.msra.mxu0 0.0
        %2039 = vmatprep.subr.mxu0 0.0
        %2040 = vmatpush1.msra.mxu0 0.0
        %2041 = vmatprep.subr.mxu0 0.0
        %2042 = vmatpush1.msra.mxu0 0.0
        %2043 = vmatprep.subr.mxu0 0.0
        %2044 = vmatpush1.msra.mxu0 0.0
        %2045 = vmatprep.subr.mxu0 0.0
        %2046 = vmatpush1.msra.mxu0 0.0
        %2047 = vmatprep.subr.mxu0 0.0
        %2048 = vmatpush1.msra.mxu0 0.0
        %2049 = vmatprep.subr.mxu0 0.0
        %2050 = vmatpush1.msra.mxu0 0.0
        %2051 = vmatprep.subr.mxu0 0.0
        %2052 = vmatpush1.msra.mxu0 0.0
        %2053 = vmatprep.subr.mxu0 0.0
        %2054 = vmatpush1.msra.mxu0 0.0
        %2055 = vmatprep.subr.mxu0 0.0
        %2056 = vmatpush1.msra.mxu0 0.0
        %2057 = vmatprep.subr.mxu0 0.0
        %2058 = vmatpush1.msra.mxu0 0.0
        %2059 = vmatprep.subr.mxu0 0.0
        %2060 = vmatpush1.msra.mxu0 0.0
        %2061 = vmatprep.subr.mxu0 0.0
        %2062 = vmatpush1.msra.mxu0 0.0
        %2063 = vmatprep.subr.mxu0 0.0
        %2064 = vmatpush1.msra.mxu0 0.0
        %2065 = vmatprep.subr.mxu0 0.0
        %2066 = vmatpush1.msra.mxu0 0.0
        %2067 = vmatprep.subr.mxu0 0.0
        %2068 = vmatpush1.msra.mxu0 0.0
        %2069 = vmatprep.subr.mxu0 0.0
        %2070 = vmatpush1.msra.mxu0 0.0
        %2071 = vmatprep.subr.mxu0 0.0
        %2072 = vmatpush1.msra.mxu0 0.0
        %2073 = vmatprep.subr.mxu0 0.0
        %2074 = vmatpush1.msra.mxu0 0.0
        %2075 = vmatprep.subr.mxu0 0.0
        %2076 = vmatpush1.msra.mxu0 0.0
        %2077 = vmatprep.subr.mxu0 0.0
        %2078 = vmatpush1.msra.mxu0 0.0
        %2079 = vmatprep.subr.mxu0 0.0
        %2080 = vmatpush1.msra.mxu0 0.0
        %2081 = vmatprep.mubr.f32.mxu0 0.0
        %2082 = vmatmul.mubr.f32.gmra.mrb[0].mxu0 %v1660
        %v2083 = vpop.f32.mrb[0].mxu0
        %v2084 = vadd.f32 %v1656, %v2083
        %v2085 = vpop.f32.mrb[0].mxu0
        %v2086 = vadd.f32 %v1656, %v2085
        %2087 = vdwg.mxu0
        %2088 = vmatprep.subr.mxu0 %v1512
        %2089 = vmatpush1.msra.mxu0 %v1511
        %2090 = vmatprep.subr.mxu0 %v1648
        %2091 = vmatpush1.msra.mxu0 %v1647
        %2092 = vmatprep.subr.mxu0 0.0
        %2093 = vmatpush1.msra.mxu0 0.0
        %2094 = vmatprep.subr.mxu0 0.0
        %2095 = vmatpush1.msra.mxu0 0.0
        %2096 = vmatprep.subr.mxu0 0.0
        %2097 = vmatpush1.msra.mxu0 0.0
        %2098 = vmatprep.subr.mxu0 0.0
        %2099 = vmatpush1.msra.mxu0 0.0
        %2100 = vmatprep.subr.mxu0 0.0
        %2101 = vmatpush1.msra.mxu0 0.0
        %2102 = vmatprep.subr.mxu0 0.0
        %2103 = vmatpush1.msra.mxu0 0.0
        %2104 = vmatprep.subr.mxu0 0.0
        %2105 = vmatpush1.msra.mxu0 0.0
        %2106 = vmatprep.subr.mxu0 0.0
        %2107 = vmatpush1.msra.mxu0 0.0
        %2108 = vmatprep.subr.mxu0 0.0
        %2109 = vmatpush1.msra.mxu0 0.0
        %2110 = vmatprep.subr.mxu0 0.0
        %2111 = vmatpush1.msra.mxu0 0.0
        %2112 = vmatprep.subr.mxu0 0.0
        %2113 = vmatpush1.msra.mxu0 0.0
        %2114 = vmatprep.subr.mxu0 0.0
        %2115 = vmatpush1.msra.mxu0 0.0
        %2116 = vmatprep.subr.mxu0 0.0
        %2117 = vmatpush1.msra.mxu0 0.0
        %2118 = vmatprep.subr.mxu0 0.0
        %2119 = vmatpush1.msra.mxu0 0.0
        %2120 = vmatprep.subr.mxu0 0.0
        %2121 = vmatpush1.msra.mxu0 0.0
        %2122 = vmatprep.subr.mxu0 0.0
        %2123 = vmatpush1.msra.mxu0 0.0
        %2124 = vmatprep.subr.mxu0 0.0
        %2125 = vmatpush1.msra.mxu0 0.0
        %2126 = vmatprep.subr.mxu0 0.0
        %2127 = vmatpush1.msra.mxu0 0.0
        %2128 = vmatprep.subr.mxu0 0.0
        %2129 = vmatpush1.msra.mxu0 0.0
        %2130 = vmatprep.subr.mxu0 0.0
        %2131 = vmatpush1.msra.mxu0 0.0
        %2132 = vmatprep.subr.mxu0 0.0
        %2133 = vmatpush1.msra.mxu0 0.0
        %2134 = vmatprep.subr.mxu0 0.0
        %2135 = vmatpush1.msra.mxu0 0.0
        %2136 = vmatprep.subr.mxu0 0.0
        %2137 = vmatpush1.msra.mxu0 0.0
        %2138 = vmatprep.subr.mxu0 0.0
        %2139 = vmatpush1.msra.mxu0 0.0
        %2140 = vmatprep.subr.mxu0 0.0
        %2141 = vmatpush1.msra.mxu0 0.0
        %2142 = vmatprep.subr.mxu0 0.0
        %2143 = vmatpush1.msra.mxu0 0.0
        %2144 = vmatprep.subr.mxu0 0.0
        %2145 = vmatpush1.msra.mxu0 0.0
        %2146 = vmatprep.subr.mxu0 0.0
        %2147 = vmatpush1.msra.mxu0 0.0
        %2148 = vmatprep.subr.mxu0 0.0
        %2149 = vmatpush1.msra.mxu0 0.0
        %2150 = vmatprep.subr.mxu0 0.0
        %2151 = vmatpush1.msra.mxu0 0.0
        %2152 = vmatprep.mubr.f32.mxu0 0.0
        %2153 = vmatmul.mubr.f32.gmra.mrb[0].mxu0 %v1660
        %v2154 = vpop.f32.mrb[0].mxu0
        %v2155 = vadd.f32 %v1656, %v2154
        %v2156 = vpop.f32.mrb[0].mxu0
        %v2157 = vadd.f32 %v1656, %v2156
        %2158 = vdwg.mxu0
        %2159 = vmatprep.subr.mxu0 %v1514
        %2160 = vmatpush1.msra.mxu0 %v1513
        %2161 = vmatprep.subr.mxu0 %v1650
        %2162 = vmatpush1.msra.mxu0 %v1649
        %2163 = vmatprep.subr.mxu0 0.0
        %2164 = vmatpush1.msra.mxu0 0.0
        %2165 = vmatprep.subr.mxu0 0.0
        %2166 = vmatpush1.msra.mxu0 0.0
        %2167 = vmatprep.subr.mxu0 0.0
        %2168 = vmatpush1.msra.mxu0 0.0
        %2169 = vmatprep.subr.mxu0 0.0
        %2170 = vmatpush1.msra.mxu0 0.0
        %2171 = vmatprep.subr.mxu0 0.0
        %2172 = vmatpush1.msra.mxu0 0.0
        %2173 = vmatprep.subr.mxu0 0.0
        %2174 = vmatpush1.msra.mxu0 0.0
        %2175 = vmatprep.subr.mxu0 0.0
        %2176 = vmatpush1.msra.mxu0 0.0
        %2177 = vmatprep.subr.mxu0 0.0
        %2178 = vmatpush1.msra.mxu0 0.0
        %2179 = vmatprep.subr.mxu0 0.0
        %2180 = vmatpush1.msra.mxu0 0.0
        %2181 = vmatprep.subr.mxu0 0.0
        %2182 = vmatpush1.msra.mxu0 0.0
        %2183 = vmatprep.subr.mxu0 0.0
        %2184 = vmatpush1.msra.mxu0 0.0
        %2185 = vmatprep.subr.mxu0 0.0
        %2186 = vmatpush1.msra.mxu0 0.0
        %2187 = vmatprep.subr.mxu0 0.0
        %2188 = vmatpush1.msra.mxu0 0.0
        %2189 = vmatprep.subr.mxu0 0.0
        %2190 = vmatpush1.msra.mxu0 0.0
        %2191 = vmatprep.subr.mxu0 0.0
        %2192 = vmatpush1.msra.mxu0 0.0
        %2193 = vmatprep.subr.mxu0 0.0
        %2194 = vmatpush1.msra.mxu0 0.0
        %2195 = vmatprep.subr.mxu0 0.0
        %2196 = vmatpush1.msra.mxu0 0.0
        %2197 = vmatprep.subr.mxu0 0.0
        %2198 = vmatpush1.msra.mxu0 0.0
        %2199 = vmatprep.subr.mxu0 0.0
        %2200 = vmatpush1.msra.mxu0 0.0
        %2201 = vmatprep.subr.mxu0 0.0
        %2202 = vmatpush1.msra.mxu0 0.0
        %2203 = vmatprep.subr.mxu0 0.0
        %2204 = vmatpush1.msra.mxu0 0.0
        %2205 = vmatprep.subr.mxu0 0.0
        %2206 = vmatpush1.msra.mxu0 0.0
        %2207 = vmatprep.subr.mxu0 0.0
        %2208 = vmatpush1.msra.mxu0 0.0
        %2209 = vmatprep.subr.mxu0 0.0
        %2210 = vmatpush1.msra.mxu0 0.0
        %2211 = vmatprep.subr.mxu0 0.0
        %2212 = vmatpush1.msra.mxu0 0.0
        %2213 = vmatprep.subr.mxu0 0.0
        %2214 = vmatpush1.msra.mxu0 0.0
        %2215 = vmatprep.subr.mxu0 0.0
        %2216 = vmatpush1.msra.mxu0 0.0
        %2217 = vmatprep.subr.mxu0 0.0
        %2218 = vmatpush1.msra.mxu0 0.0
        %2219 = vmatprep.subr.mxu0 0.0
        %2220 = vmatpush1.msra.mxu0 0.0
        %2221 = vmatprep.subr.mxu0 0.0
        %2222 = vmatpush1.msra.mxu0 0.0
        %2223 = vmatprep.mubr.f32.mxu0 0.0
        %2224 = vmatmul.mubr.f32.gmra.mrb[0].mxu0 %v1660
        %v2225 = vpop.f32.mrb[0].mxu0
        %v2226 = vadd.f32 %v1656, %v2225
        %v2227 = vpop.f32.mrb[0].mxu0
        %v2228 = vadd.f32 %v1656, %v2227
        %2229 = vdwg.mxu0
        %v2230 = vmax.f32 %v1729, 0.0
        %v2231 = vmax.f32 %v1731, 0.0
        %v2232 = vmax.f32 %v1800, 0.0
        %v2233 = vmax.f32 %v1802, 0.0
        %v2234 = vmax.f32 %v1871, 0.0
        %v2235 = vmax.f32 %v1873, 0.0
        %v2236 = vmax.f32 %v1942, 0.0
        %v2237 = vmax.f32 %v1944, 0.0
        %v2238 = vmax.f32 %v2013, 0.0
        %v2239 = vmax.f32 %v2015, 0.0
        %v2240 = vmax.f32 %v2084, 0.0
        %v2241 = vmax.f32 %v2086, 0.0
        %v2242 = vmax.f32 %v2155, 0.0
        %v2243 = vmax.f32 %v2157, 0.0
        %v2244 = vmax.f32 %v2226, 0.0
        %v2245 = vmax.f32 %v2228, 0.0
        %v2246 = vld [vmem:[%s7] sm:$0xff]
        %v2247 = vld [vmem:[%s7 + $0x8] sm:$0xff]
        %v2248 = vld [vmem:[%s8] sm:$0xff]
        %v2249 = vld [vmem:[%s8 + $0x8] sm:$0xff]
        %2251 = vset.pattern.permute.xlu0 0
        %2252 = vperm.xlu0 %2251, %v2248
        %v2253 = vpop.permute.xlu0 %2252
        %2256 = vset.pattern.permute.xlu0 0
        %2257 = vperm.xlu0 %2256, %v2249
        %v2258 = vpop.permute.xlu0 %2257
        %vm2260 = vcmask 64512
        %v2262 = vsel %vm2260, %v2246, 0
        %v2265 = vsel %vm2260, %v2247, 0
        %2267 = vmatprep.subr.mxu0 %v2231
        %2268 = vmatpush1.msra.mxu0 %v2230
        %2269 = vmatprep.subr.mxu0 0.0
        %2270 = vmatpush1.msra.mxu0 0.0
        %2271 = vmatprep.subr.mxu0 0.0
        %2272 = vmatpush1.msra.mxu0 0.0
        %2273 = vmatprep.subr.mxu0 0.0
        %2274 = vmatpush1.msra.mxu0 0.0
        %2275 = vmatprep.subr.mxu0 0.0
        %2276 = vmatpush1.msra.mxu0 0.0
        %2277 = vmatprep.subr.mxu0 0.0
        %2278 = vmatpush1.msra.mxu0 0.0
        %2279 = vmatprep.subr.mxu0 0.0
        %2280 = vmatpush1.msra.mxu0 0.0
        %2281 = vmatprep.subr.mxu0 0.0
        %2282 = vmatpush1.msra.mxu0 0.0
        %2283 = vmatprep.subr.mxu0 0.0
        %2284 = vmatpush1.msra.mxu0 0.0
        %2285 = vmatprep.subr.mxu0 0.0
        %2286 = vmatpush1.msra.mxu0 0.0
        %2287 = vmatprep.subr.mxu0 0.0
        %2288 = vmatpush1.msra.mxu0 0.0
        %2289 = vmatprep.subr.mxu0 0.0
        %2290 = vmatpush1.msra.mxu0 0.0
        %2291 = vmatprep.subr.mxu0 0.0
        %2292 = vmatpush1.msra.mxu0 0.0
        %2293 = vmatprep.subr.mxu0 0.0
        %2294 = vmatpush1.msra.mxu0 0.0
        %2295 = vmatprep.subr.mxu0 0.0
        %2296 = vmatpush1.msra.mxu0 0.0
        %2297 = vmatprep.subr.mxu0 0.0
        %2298 = vmatpush1.msra.mxu0 0.0
        %2299 = vmatprep.subr.mxu0 0.0
        %2300 = vmatpush1.msra.mxu0 0.0
        %2301 = vmatprep.subr.mxu0 0.0
        %2302 = vmatpush1.msra.mxu0 0.0
        %2303 = vmatprep.subr.mxu0 0.0
        %2304 = vmatpush1.msra.mxu0 0.0
        %2305 = vmatprep.subr.mxu0 0.0
        %2306 = vmatpush1.msra.mxu0 0.0
        %2307 = vmatprep.subr.mxu0 0.0
        %2308 = vmatpush1.msra.mxu0 0.0
        %2309 = vmatprep.subr.mxu0 0.0
        %2310 = vmatpush1.msra.mxu0 0.0
        %2311 = vmatprep.subr.mxu0 0.0
        %2312 = vmatpush1.msra.mxu0 0.0
        %2313 = vmatprep.subr.mxu0 0.0
        %2314 = vmatpush1.msra.mxu0 0.0
        %2315 = vmatprep.subr.mxu0 0.0
        %2316 = vmatpush1.msra.mxu0 0.0
        %2317 = vmatprep.subr.mxu0 0.0
        %2318 = vmatpush1.msra.mxu0 0.0
        %2319 = vmatprep.subr.mxu0 0.0
        %2320 = vmatpush1.msra.mxu0 0.0
        %2321 = vmatprep.subr.mxu0 0.0
        %2322 = vmatpush1.msra.mxu0 0.0
        %2323 = vmatprep.subr.mxu0 0.0
        %2324 = vmatpush1.msra.mxu0 0.0
        %2325 = vmatprep.subr.mxu0 0.0
        %2326 = vmatpush1.msra.mxu0 0.0
        %2327 = vmatprep.subr.mxu0 0.0
        %2328 = vmatpush1.msra.mxu0 0.0
        %2329 = vmatprep.subr.mxu0 0.0
        %2330 = vmatpush1.msra.mxu0 0.0
        %2331 = vmatprep.mubr.f32.mxu0 0.0
        %2332 = vmatmul.mubr.f32.gmra.mrb[0].mxu0 %v2262
        %v2333 = vpop.f32.mrb[0].mxu0
        %v2334 = vadd.f32 %v2253, %v2333
        %v2335 = vpop.f32.mrb[0].mxu0
        %v2336 = vadd.f32 %v2253, %v2335
        %2337 = vmatprep.mubr.f32.mxu0 0.0
        %2338 = vmatmul.mubr.f32.gmra.mrb[0].mxu0 %v2265
        %v2339 = vpop.f32.mrb[0].mxu0
        %v2340 = vadd.f32 %v2258, %v2339
        %v2341 = vpop.f32.mrb[0].mxu0
        %v2342 = vadd.f32 %v2258, %v2341
        %2343 = vdwg.mxu0
        %2344 = vmatprep.subr.mxu0 %v2233
        %2345 = vmatpush1.msra.mxu0 %v2232
        %2346 = vmatprep.subr.mxu0 0.0
        %2347 = vmatpush1.msra.mxu0 0.0
        %2348 = vmatprep.subr.mxu0 0.0
        %2349 = vmatpush1.msra.mxu0 0.0
        %2350 = vmatprep.subr.mxu0 0.0
        %2351 = vmatpush1.msra.mxu0 0.0
        %2352 = vmatprep.subr.mxu0 0.0
        %2353 = vmatpush1.msra.mxu0 0.0
        %2354 = vmatprep.subr.mxu0 0.0
        %2355 = vmatpush1.msra.mxu0 0.0
        %2356 = vmatprep.subr.mxu0 0.0
        %2357 = vmatpush1.msra.mxu0 0.0
        %2358 = vmatprep.subr.mxu0 0.0
        %2359 = vmatpush1.msra.mxu0 0.0
        %2360 = vmatprep.subr.mxu0 0.0
        %2361 = vmatpush1.msra.mxu0 0.0
        %2362 = vmatprep.subr.mxu0 0.0
        %2363 = vmatpush1.msra.mxu0 0.0
        %2364 = vmatprep.subr.mxu0 0.0
        %2365 = vmatpush1.msra.mxu0 0.0
        %2366 = vmatprep.subr.mxu0 0.0
        %2367 = vmatpush1.msra.mxu0 0.0
        %2368 = vmatprep.subr.mxu0 0.0
        %2369 = vmatpush1.msra.mxu0 0.0
        %2370 = vmatprep.subr.mxu0 0.0
        %2371 = vmatpush1.msra.mxu0 0.0
        %2372 = vmatprep.subr.mxu0 0.0
        %2373 = vmatpush1.msra.mxu0 0.0
        %2374 = vmatprep.subr.mxu0 0.0
        %2375 = vmatpush1.msra.mxu0 0.0
        %2376 = vmatprep.subr.mxu0 0.0
        %2377 = vmatpush1.msra.mxu0 0.0
        %2378 = vmatprep.subr.mxu0 0.0
        %2379 = vmatpush1.msra.mxu0 0.0
        %2380 = vmatprep.subr.mxu0 0.0
        %2381 = vmatpush1.msra.mxu0 0.0
        %2382 = vmatprep.subr.mxu0 0.0
        %2383 = vmatpush1.msra.mxu0 0.0
        %2384 = vmatprep.subr.mxu0 0.0
        %2385 = vmatpush1.msra.mxu0 0.0
        %2386 = vmatprep.subr.mxu0 0.0
        %2387 = vmatpush1.msra.mxu0 0.0
        %2388 = vmatprep.subr.mxu0 0.0
        %2389 = vmatpush1.msra.mxu0 0.0
        %2390 = vmatprep.subr.mxu0 0.0
        %2391 = vmatpush1.msra.mxu0 0.0
        %2392 = vmatprep.subr.mxu0 0.0
        %2393 = vmatpush1.msra.mxu0 0.0
        %2394 = vmatprep.subr.mxu0 0.0
        %2395 = vmatpush1.msra.mxu0 0.0
        %2396 = vmatprep.subr.mxu0 0.0
        %2397 = vmatpush1.msra.mxu0 0.0
        %2398 = vmatprep.subr.mxu0 0.0
        %2399 = vmatpush1.msra.mxu0 0.0
        %2400 = vmatprep.subr.mxu0 0.0
        %2401 = vmatpush1.msra.mxu0 0.0
        %2402 = vmatprep.subr.mxu0 0.0
        %2403 = vmatpush1.msra.mxu0 0.0
        %2404 = vmatprep.subr.mxu0 0.0
        %2405 = vmatpush1.msra.mxu0 0.0
        %2406 = vmatprep.subr.mxu0 0.0
        %2407 = vmatpush1.msra.mxu0 0.0
        %2408 = vmatprep.mubr.f32.mxu0 0.0
        %2409 = vmatmul.mubr.f32.gmra.mrb[0].mxu0 %v2262
        %v2410 = vpop.f32.mrb[0].mxu0
        %v2411 = vadd.f32 %v2253, %v2410
        %v2412 = vpop.f32.mrb[0].mxu0
        %v2413 = vadd.f32 %v2253, %v2412
        %2414 = vmatprep.mubr.f32.mxu0 0.0
        %2415 = vmatmul.mubr.f32.gmra.mrb[0].mxu0 %v2265
        %v2416 = vpop.f32.mrb[0].mxu0
        %v2417 = vadd.f32 %v2258, %v2416
        %v2418 = vpop.f32.mrb[0].mxu0
        %v2419 = vadd.f32 %v2258, %v2418
        %2420 = vdwg.mxu0
        %2421 = vmatprep.subr.mxu0 %v2235
        %2422 = vmatpush1.msra.mxu0 %v2234
        %2423 = vmatprep.subr.mxu0 0.0
        %2424 = vmatpush1.msra.mxu0 0.0
        %2425 = vmatprep.subr.mxu0 0.0
        %2426 = vmatpush1.msra.mxu0 0.0
        %2427 = vmatprep.subr.mxu0 0.0
        %2428 = vmatpush1.msra.mxu0 0.0
        %2429 = vmatprep.subr.mxu0 0.0
        %2430 = vmatpush1.msra.mxu0 0.0
        %2431 = vmatprep.subr.mxu0 0.0
        %2432 = vmatpush1.msra.mxu0 0.0
        %2433 = vmatprep.subr.mxu0 0.0
        %2434 = vmatpush1.msra.mxu0 0.0
        %2435 = vmatprep.subr.mxu0 0.0
        %2436 = vmatpush1.msra.mxu0 0.0
        %2437 = vmatprep.subr.mxu0 0.0
        %2438 = vmatpush1.msra.mxu0 0.0
        %2439 = vmatprep.subr.mxu0 0.0
        %2440 = vmatpush1.msra.mxu0 0.0
        %2441 = vmatprep.subr.mxu0 0.0
        %2442 = vmatpush1.msra.mxu0 0.0
        %2443 = vmatprep.subr.mxu0 0.0
        %2444 = vmatpush1.msra.mxu0 0.0
        %2445 = vmatprep.subr.mxu0 0.0
        %2446 = vmatpush1.msra.mxu0 0.0
        %2447 = vmatprep.subr.mxu0 0.0
        %2448 = vmatpush1.msra.mxu0 0.0
        %2449 = vmatprep.subr.mxu0 0.0
        %2450 = vmatpush1.msra.mxu0 0.0
        %2451 = vmatprep.subr.mxu0 0.0
        %2452 = vmatpush1.msra.mxu0 0.0
        %2453 = vmatprep.subr.mxu0 0.0
        %2454 = vmatpush1.msra.mxu0 0.0
        %2455 = vmatprep.subr.mxu0 0.0
        %2456 = vmatpush1.msra.mxu0 0.0
        %2457 = vmatprep.subr.mxu0 0.0
        %2458 = vmatpush1.msra.mxu0 0.0
        %2459 = vmatprep.subr.mxu0 0.0
        %2460 = vmatpush1.msra.mxu0 0.0
        %2461 = vmatprep.subr.mxu0 0.0
        %2462 = vmatpush1.msra.mxu0 0.0
        %2463 = vmatprep.subr.mxu0 0.0
        %2464 = vmatpush1.msra.mxu0 0.0
        %2465 = vmatprep.subr.mxu0 0.0
        %2466 = vmatpush1.msra.mxu0 0.0
        %2467 = vmatprep.subr.mxu0 0.0
        %2468 = vmatpush1.msra.mxu0 0.0
        %2469 = vmatprep.subr.mxu0 0.0
        %2470 = vmatpush1.msra.mxu0 0.0
        %2471 = vmatprep.subr.mxu0 0.0
        %2472 = vmatpush1.msra.mxu0 0.0
        %2473 = vmatprep.subr.mxu0 0.0
        %2474 = vmatpush1.msra.mxu0 0.0
        %2475 = vmatprep.subr.mxu0 0.0
        %2476 = vmatpush1.msra.mxu0 0.0
        %2477 = vmatprep.subr.mxu0 0.0
        %2478 = vmatpush1.msra.mxu0 0.0
        %2479 = vmatprep.subr.mxu0 0.0
        %2480 = vmatpush1.msra.mxu0 0.0
        %2481 = vmatprep.subr.mxu0 0.0
        %2482 = vmatpush1.msra.mxu0 0.0
        %2483 = vmatprep.subr.mxu0 0.0
        %2484 = vmatpush1.msra.mxu0 0.0
        %2485 = vmatprep.mubr.f32.mxu0 0.0
        %2486 = vmatmul.mubr.f32.gmra.mrb[0].mxu0 %v2262
        %v2487 = vpop.f32.mrb[0].mxu0
        %v2488 = vadd.f32 %v2253, %v2487
        %v2489 = vpop.f32.mrb[0].mxu0
        %v2490 = vadd.f32 %v2253, %v2489
        %2491 = vmatprep.mubr.f32.mxu0 0.0
        %2492 = vmatmul.mubr.f32.gmra.mrb[0].mxu0 %v2265
        %v2493 = vpop.f32.mrb[0].mxu0
        %v2494 = vadd.f32 %v2258, %v2493
        %v2495 = vpop.f32.mrb[0].mxu0
        %v2496 = vadd.f32 %v2258, %v2495
        %2497 = vdwg.mxu0
        %2498 = vmatprep.subr.mxu0 %v2237
        %2499 = vmatpush1.msra.mxu0 %v2236
        %2500 = vmatprep.subr.mxu0 0.0
        %2501 = vmatpush1.msra.mxu0 0.0
        %2502 = vmatprep.subr.mxu0 0.0
        %2503 = vmatpush1.msra.mxu0 0.0
        %2504 = vmatprep.subr.mxu0 0.0
        %2505 = vmatpush1.msra.mxu0 0.0
        %2506 = vmatprep.subr.mxu0 0.0
        %2507 = vmatpush1.msra.mxu0 0.0
        %2508 = vmatprep.subr.mxu0 0.0
        %2509 = vmatpush1.msra.mxu0 0.0
        %2510 = vmatprep.subr.mxu0 0.0
        %2511 = vmatpush1.msra.mxu0 0.0
        %2512 = vmatprep.subr.mxu0 0.0
        %2513 = vmatpush1.msra.mxu0 0.0
        %2514 = vmatprep.subr.mxu0 0.0
        %2515 = vmatpush1.msra.mxu0 0.0
        %2516 = vmatprep.subr.mxu0 0.0
        %2517 = vmatpush1.msra.mxu0 0.0
        %2518 = vmatprep.subr.mxu0 0.0
        %2519 = vmatpush1.msra.mxu0 0.0
        %2520 = vmatprep.subr.mxu0 0.0
        %2521 = vmatpush1.msra.mxu0 0.0
        %2522 = vmatprep.subr.mxu0 0.0
        %2523 = vmatpush1.msra.mxu0 0.0
        %2524 = vmatprep.subr.mxu0 0.0
        %2525 = vmatpush1.msra.mxu0 0.0
        %2526 = vmatprep.subr.mxu0 0.0
        %2527 = vmatpush1.msra.mxu0 0.0
        %2528 = vmatprep.subr.mxu0 0.0
        %2529 = vmatpush1.msra.mxu0 0.0
        %2530 = vmatprep.subr.mxu0 0.0
        %2531 = vmatpush1.msra.mxu0 0.0
        %2532 = vmatprep.subr.mxu0 0.0
        %2533 = vmatpush1.msra.mxu0 0.0
        %2534 = vmatprep.subr.mxu0 0.0
        %2535 = vmatpush1.msra.mxu0 0.0
        %2536 = vmatprep.subr.mxu0 0.0
        %2537 = vmatpush1.msra.mxu0 0.0
        %2538 = vmatprep.subr.mxu0 0.0
        %2539 = vmatpush1.msra.mxu0 0.0
        %2540 = vmatprep.subr.mxu0 0.0
        %2541 = vmatpush1.msra.mxu0 0.0
        %2542 = vmatprep.subr.mxu0 0.0
        %2543 = vmatpush1.msra.mxu0 0.0
        %2544 = vmatprep.subr.mxu0 0.0
        %2545 = vmatpush1.msra.mxu0 0.0
        %2546 = vmatprep.subr.mxu0 0.0
        %2547 = vmatpush1.msra.mxu0 0.0
        %2548 = vmatprep.subr.mxu0 0.0
        %2549 = vmatpush1.msra.mxu0 0.0
        %2550 = vmatprep.subr.mxu0 0.0
        %2551 = vmatpush1.msra.mxu0 0.0
        %2552 = vmatprep.subr.mxu0 0.0
        %2553 = vmatpush1.msra.mxu0 0.0
        %2554 = vmatprep.subr.mxu0 0.0
        %2555 = vmatpush1.msra.mxu0 0.0
        %2556 = vmatprep.subr.mxu0 0.0
        %2557 = vmatpush1.msra.mxu0 0.0
        %2558 = vmatprep.subr.mxu0 0.0
        %2559 = vmatpush1.msra.mxu0 0.0
        %2560 = vmatprep.subr.mxu0 0.0
        %2561 = vmatpush1.msra.mxu0 0.0
        %2562 = vmatprep.mubr.f32.mxu0 0.0
        %2563 = vmatmul.mubr.f32.gmra.mrb[0].mxu0 %v2262
        %v2564 = vpop.f32.mrb[0].mxu0
        %v2565 = vadd.f32 %v2253, %v2564
        %v2566 = vpop.f32.mrb[0].mxu0
        %v2567 = vadd.f32 %v2253, %v2566
        %2568 = vmatprep.mubr.f32.mxu0 0.0
        %2569 = vmatmul.mubr.f32.gmra.mrb[0].mxu0 %v2265
        %v2570 = vpop.f32.mrb[0].mxu0
        %v2571 = vadd.f32 %v2258, %v2570
        %v2572 = vpop.f32.mrb[0].mxu0
        %v2573 = vadd.f32 %v2258, %v2572
        %2574 = vdwg.mxu0
        %2575 = vmatprep.subr.mxu0 %v2239
        %2576 = vmatpush1.msra.mxu0 %v2238
        %2577 = vmatprep.subr.mxu0 0.0
        %2578 = vmatpush1.msra.mxu0 0.0
        %2579 = vmatprep.subr.mxu0 0.0
        %2580 = vmatpush1.msra.mxu0 0.0
        %2581 = vmatprep.subr.mxu0 0.0
        %2582 = vmatpush1.msra.mxu0 0.0
        %2583 = vmatprep.subr.mxu0 0.0
        %2584 = vmatpush1.msra.mxu0 0.0
        %2585 = vmatprep.subr.mxu0 0.0
        %2586 = vmatpush1.msra.mxu0 0.0
        %2587 = vmatprep.subr.mxu0 0.0
        %2588 = vmatpush1.msra.mxu0 0.0
        %2589 = vmatprep.subr.mxu0 0.0
        %2590 = vmatpush1.msra.mxu0 0.0
        %2591 = vmatprep.subr.mxu0 0.0
        %2592 = vmatpush1.msra.mxu0 0.0
        %2593 = vmatprep.subr.mxu0 0.0
        %2594 = vmatpush1.msra.mxu0 0.0
        %2595 = vmatprep.subr.mxu0 0.0
        %2596 = vmatpush1.msra.mxu0 0.0
        %2597 = vmatprep.subr.mxu0 0.0
        %2598 = vmatpush1.msra.mxu0 0.0
        %2599 = vmatprep.subr.mxu0 0.0
        %2600 = vmatpush1.msra.mxu0 0.0
        %2601 = vmatprep.subr.mxu0 0.0
        %2602 = vmatpush1.msra.mxu0 0.0
        %2603 = vmatprep.subr.mxu0 0.0
        %2604 = vmatpush1.msra.mxu0 0.0
        %2605 = vmatprep.subr.mxu0 0.0
        %2606 = vmatpush1.msra.mxu0 0.0
        %2607 = vmatprep.subr.mxu0 0.0
        %2608 = vmatpush1.msra.mxu0 0.0
        %2609 = vmatprep.subr.mxu0 0.0
        %2610 = vmatpush1.msra.mxu0 0.0
        %2611 = vmatprep.subr.mxu0 0.0
        %2612 = vmatpush1.msra.mxu0 0.0
        %2613 = vmatprep.subr.mxu0 0.0
        %2614 = vmatpush1.msra.mxu0 0.0
        %2615 = vmatprep.subr.mxu0 0.0
        %2616 = vmatpush1.msra.mxu0 0.0
        %2617 = vmatprep.subr.mxu0 0.0
        %2618 = vmatpush1.msra.mxu0 0.0
        %2619 = vmatprep.subr.mxu0 0.0
        %2620 = vmatpush1.msra.mxu0 0.0
        %2621 = vmatprep.subr.mxu0 0.0
        %2622 = vmatpush1.msra.mxu0 0.0
        %2623 = vmatprep.subr.mxu0 0.0
        %2624 = vmatpush1.msra.mxu0 0.0
        %2625 = vmatprep.subr.mxu0 0.0
        %2626 = vmatpush1.msra.mxu0 0.0
        %2627 = vmatprep.subr.mxu0 0.0
        %2628 = vmatpush1.msra.mxu0 0.0
        %2629 = vmatprep.subr.mxu0 0.0
        %2630 = vmatpush1.msra.mxu0 0.0
        %2631 = vmatprep.subr.mxu0 0.0
        %2632 = vmatpush1.msra.mxu0 0.0
        %2633 = vmatprep.subr.mxu0 0.0
        %2634 = vmatpush1.msra.mxu0 0.0
        %2635 = vmatprep.subr.mxu0 0.0
        %2636 = vmatpush1.msra.mxu0 0.0
        %2637 = vmatprep.subr.mxu0 0.0
        %2638 = vmatpush1.msra.mxu0 0.0
        %2639 = vmatprep.mubr.f32.mxu0 0.0
        %2640 = vmatmul.mubr.f32.gmra.mrb[0].mxu0 %v2262
        %v2641 = vpop.f32.mrb[0].mxu0
        %v2642 = vadd.f32 %v2253, %v2641
        %v2643 = vpop.f32.mrb[0].mxu0
        %v2644 = vadd.f32 %v2253, %v2643
        %2645 = vmatprep.mubr.f32.mxu0 0.0
        %2646 = vmatmul.mubr.f32.gmra.mrb[0].mxu0 %v2265
        %v2647 = vpop.f32.mrb[0].mxu0
        %v2648 = vadd.f32 %v2258, %v2647
        %v2649 = vpop.f32.mrb[0].mxu0
        %v2650 = vadd.f32 %v2258, %v2649
        %2651 = vdwg.mxu0
        %2652 = vmatprep.subr.mxu0 %v2241
        %2653 = vmatpush1.msra.mxu0 %v2240
        %2654 = vmatprep.subr.mxu0 0.0
        %2655 = vmatpush1.msra.mxu0 0.0
        %2656 = vmatprep.subr.mxu0 0.0
        %2657 = vmatpush1.msra.mxu0 0.0
        %2658 = vmatprep.subr.mxu0 0.0
        %2659 = vmatpush1.msra.mxu0 0.0
        %2660 = vmatprep.subr.mxu0 0.0
        %2661 = vmatpush1.msra.mxu0 0.0
        %2662 = vmatprep.subr.mxu0 0.0
        %2663 = vmatpush1.msra.mxu0 0.0
        %2664 = vmatprep.subr.mxu0 0.0
        %2665 = vmatpush1.msra.mxu0 0.0
        %2666 = vmatprep.subr.mxu0 0.0
        %2667 = vmatpush1.msra.mxu0 0.0
        %2668 = vmatprep.subr.mxu0 0.0
        %2669 = vmatpush1.msra.mxu0 0.0
        %2670 = vmatprep.subr.mxu0 0.0
        %2671 = vmatpush1.msra.mxu0 0.0
        %2672 = vmatprep.subr.mxu0 0.0
        %2673 = vmatpush1.msra.mxu0 0.0
        %2674 = vmatprep.subr.mxu0 0.0
        %2675 = vmatpush1.msra.mxu0 0.0
        %2676 = vmatprep.subr.mxu0 0.0
        %2677 = vmatpush1.msra.mxu0 0.0
        %2678 = vmatprep.subr.mxu0 0.0
        %2679 = vmatpush1.msra.mxu0 0.0
        %2680 = vmatprep.subr.mxu0 0.0
        %2681 = vmatpush1.msra.mxu0 0.0
        %2682 = vmatprep.subr.mxu0 0.0
        %2683 = vmatpush1.msra.mxu0 0.0
        %2684 = vmatprep.subr.mxu0 0.0
        %2685 = vmatpush1.msra.mxu0 0.0
        %2686 = vmatprep.subr.mxu0 0.0
        %2687 = vmatpush1.msra.mxu0 0.0
        %2688 = vmatprep.subr.mxu0 0.0
        %2689 = vmatpush1.msra.mxu0 0.0
        %2690 = vmatprep.subr.mxu0 0.0
        %2691 = vmatpush1.msra.mxu0 0.0
        %2692 = vmatprep.subr.mxu0 0.0
        %2693 = vmatpush1.msra.mxu0 0.0
        %2694 = vmatprep.subr.mxu0 0.0
        %2695 = vmatpush1.msra.mxu0 0.0
        %2696 = vmatprep.subr.mxu0 0.0
        %2697 = vmatpush1.msra.mxu0 0.0
        %2698 = vmatprep.subr.mxu0 0.0
        %2699 = vmatpush1.msra.mxu0 0.0
        %2700 = vmatprep.subr.mxu0 0.0
        %2701 = vmatpush1.msra.mxu0 0.0
        %2702 = vmatprep.subr.mxu0 0.0
        %2703 = vmatpush1.msra.mxu0 0.0
        %2704 = vmatprep.subr.mxu0 0.0
        %2705 = vmatpush1.msra.mxu0 0.0
        %2706 = vmatprep.subr.mxu0 0.0
        %2707 = vmatpush1.msra.mxu0 0.0
        %2708 = vmatprep.subr.mxu0 0.0
        %2709 = vmatpush1.msra.mxu0 0.0
        %2710 = vmatprep.subr.mxu0 0.0
        %2711 = vmatpush1.msra.mxu0 0.0
        %2712 = vmatprep.subr.mxu0 0.0
        %2713 = vmatpush1.msra.mxu0 0.0
        %2714 = vmatprep.subr.mxu0 0.0
        %2715 = vmatpush1.msra.mxu0 0.0
        %2716 = vmatprep.mubr.f32.mxu0 0.0
        %2717 = vmatmul.mubr.f32.gmra.mrb[0].mxu0 %v2262
        %v2718 = vpop.f32.mrb[0].mxu0
        %v2719 = vadd.f32 %v2253, %v2718
        %v2720 = vpop.f32.mrb[0].mxu0
        %v2721 = vadd.f32 %v2253, %v2720
        %2722 = vmatprep.mubr.f32.mxu0 0.0
        %2723 = vmatmul.mubr.f32.gmra.mrb[0].mxu0 %v2265
        %v2724 = vpop.f32.mrb[0].mxu0
        %v2725 = vadd.f32 %v2258, %v2724
        %v2726 = vpop.f32.mrb[0].mxu0
        %v2727 = vadd.f32 %v2258, %v2726
        %2728 = vdwg.mxu0
        %2729 = vmatprep.subr.mxu0 %v2243
        %2730 = vmatpush1.msra.mxu0 %v2242
        %2731 = vmatprep.subr.mxu0 0.0
        %2732 = vmatpush1.msra.mxu0 0.0
        %2733 = vmatprep.subr.mxu0 0.0
        %2734 = vmatpush1.msra.mxu0 0.0
        %2735 = vmatprep.subr.mxu0 0.0
        %2736 = vmatpush1.msra.mxu0 0.0
        %2737 = vmatprep.subr.mxu0 0.0
        %2738 = vmatpush1.msra.mxu0 0.0
        %2739 = vmatprep.subr.mxu0 0.0
        %2740 = vmatpush1.msra.mxu0 0.0
        %2741 = vmatprep.subr.mxu0 0.0
        %2742 = vmatpush1.msra.mxu0 0.0
        %2743 = vmatprep.subr.mxu0 0.0
        %2744 = vmatpush1.msra.mxu0 0.0
        %2745 = vmatprep.subr.mxu0 0.0
        %2746 = vmatpush1.msra.mxu0 0.0
        %2747 = vmatprep.subr.mxu0 0.0
        %2748 = vmatpush1.msra.mxu0 0.0
        %2749 = vmatprep.subr.mxu0 0.0
        %2750 = vmatpush1.msra.mxu0 0.0
        %2751 = vmatprep.subr.mxu0 0.0
        %2752 = vmatpush1.msra.mxu0 0.0
        %2753 = vmatprep.subr.mxu0 0.0
        %2754 = vmatpush1.msra.mxu0 0.0
        %2755 = vmatprep.subr.mxu0 0.0
        %2756 = vmatpush1.msra.mxu0 0.0
        %2757 = vmatprep.subr.mxu0 0.0
        %2758 = vmatpush1.msra.mxu0 0.0
        %2759 = vmatprep.subr.mxu0 0.0
        %2760 = vmatpush1.msra.mxu0 0.0
        %2761 = vmatprep.subr.mxu0 0.0
        %2762 = vmatpush1.msra.mxu0 0.0
        %2763 = vmatprep.subr.mxu0 0.0
        %2764 = vmatpush1.msra.mxu0 0.0
        %2765 = vmatprep.subr.mxu0 0.0
        %2766 = vmatpush1.msra.mxu0 0.0
        %2767 = vmatprep.subr.mxu0 0.0
        %2768 = vmatpush1.msra.mxu0 0.0
        %2769 = vmatprep.subr.mxu0 0.0
        %2770 = vmatpush1.msra.mxu0 0.0
        %2771 = vmatprep.subr.mxu0 0.0
        %2772 = vmatpush1.msra.mxu0 0.0
        %2773 = vmatprep.subr.mxu0 0.0
        %2774 = vmatpush1.msra.mxu0 0.0
        %2775 = vmatprep.subr.mxu0 0.0
        %2776 = vmatpush1.msra.mxu0 0.0
        %2777 = vmatprep.subr.mxu0 0.0
        %2778 = vmatpush1.msra.mxu0 0.0
        %2779 = vmatprep.subr.mxu0 0.0
        %2780 = vmatpush1.msra.mxu0 0.0
        %2781 = vmatprep.subr.mxu0 0.0
        %2782 = vmatpush1.msra.mxu0 0.0
        %2783 = vmatprep.subr.mxu0 0.0
        %2784 = vmatpush1.msra.mxu0 0.0
        %2785 = vmatprep.subr.mxu0 0.0
        %2786 = vmatpush1.msra.mxu0 0.0
        %2787 = vmatprep.subr.mxu0 0.0
        %2788 = vmatpush1.msra.mxu0 0.0
        %2789 = vmatprep.subr.mxu0 0.0
        %2790 = vmatpush1.msra.mxu0 0.0
        %2791 = vmatprep.subr.mxu0 0.0
        %2792 = vmatpush1.msra.mxu0 0.0
        %2793 = vmatprep.mubr.f32.mxu0 0.0
        %2794 = vmatmul.mubr.f32.gmra.mrb[0].mxu0 %v2262
        %v2795 = vpop.f32.mrb[0].mxu0
        %v2796 = vadd.f32 %v2253, %v2795
        %v2797 = vpop.f32.mrb[0].mxu0
        %v2798 = vadd.f32 %v2253, %v2797
        %2799 = vmatprep.mubr.f32.mxu0 0.0
        %2800 = vmatmul.mubr.f32.gmra.mrb[0].mxu0 %v2265
        %v2801 = vpop.f32.mrb[0].mxu0
        %v2802 = vadd.f32 %v2258, %v2801
        %v2803 = vpop.f32.mrb[0].mxu0
        %v2804 = vadd.f32 %v2258, %v2803
        %2805 = vdwg.mxu0
        %2806 = vmatprep.subr.mxu0 %v2245
        %2807 = vmatpush1.msra.mxu0 %v2244
        %2808 = vmatprep.subr.mxu0 0.0
        %2809 = vmatpush1.msra.mxu0 0.0
        %2810 = vmatprep.subr.mxu0 0.0
        %2811 = vmatpush1.msra.mxu0 0.0
        %2812 = vmatprep.subr.mxu0 0.0
        %2813 = vmatpush1.msra.mxu0 0.0
        %2814 = vmatprep.subr.mxu0 0.0
        %2815 = vmatpush1.msra.mxu0 0.0
        %2816 = vmatprep.subr.mxu0 0.0
        %2817 = vmatpush1.msra.mxu0 0.0
        %2818 = vmatprep.subr.mxu0 0.0
        %2819 = vmatpush1.msra.mxu0 0.0
        %2820 = vmatprep.subr.mxu0 0.0
        %2821 = vmatpush1.msra.mxu0 0.0
        %2822 = vmatprep.subr.mxu0 0.0
        %2823 = vmatpush1.msra.mxu0 0.0
        %2824 = vmatprep.subr.mxu0 0.0
        %2825 = vmatpush1.msra.mxu0 0.0
        %2826 = vmatprep.subr.mxu0 0.0
        %2827 = vmatpush1.msra.mxu0 0.0
        %2828 = vmatprep.subr.mxu0 0.0
        %2829 = vmatpush1.msra.mxu0 0.0
        %2830 = vmatprep.subr.mxu0 0.0
        %2831 = vmatpush1.msra.mxu0 0.0
        %2832 = vmatprep.subr.mxu0 0.0
        %2833 = vmatpush1.msra.mxu0 0.0
        %2834 = vmatprep.subr.mxu0 0.0
        %2835 = vmatpush1.msra.mxu0 0.0
        %2836 = vmatprep.subr.mxu0 0.0
        %2837 = vmatpush1.msra.mxu0 0.0
        %2838 = vmatprep.subr.mxu0 0.0
        %2839 = vmatpush1.msra.mxu0 0.0
        %2840 = vmatprep.subr.mxu0 0.0
        %2841 = vmatpush1.msra.mxu0 0.0
        %2842 = vmatprep.subr.mxu0 0.0
        %2843 = vmatpush1.msra.mxu0 0.0
        %2844 = vmatprep.subr.mxu0 0.0
        %2845 = vmatpush1.msra.mxu0 0.0
        %2846 = vmatprep.subr.mxu0 0.0
        %2847 = vmatpush1.msra.mxu0 0.0
        %2848 = vmatprep.subr.mxu0 0.0
        %2849 = vmatpush1.msra.mxu0 0.0
        %2850 = vmatprep.subr.mxu0 0.0
        %2851 = vmatpush1.msra.mxu0 0.0
        %2852 = vmatprep.subr.mxu0 0.0
        %2853 = vmatpush1.msra.mxu0 0.0
        %2854 = vmatprep.subr.mxu0 0.0
        %2855 = vmatpush1.msra.mxu0 0.0
        %2856 = vmatprep.subr.mxu0 0.0
        %2857 = vmatpush1.msra.mxu0 0.0
        %2858 = vmatprep.subr.mxu0 0.0
        %2859 = vmatpush1.msra.mxu0 0.0
        %2860 = vmatprep.subr.mxu0 0.0
        %2861 = vmatpush1.msra.mxu0 0.0
        %2862 = vmatprep.subr.mxu0 0.0
        %2863 = vmatpush1.msra.mxu0 0.0
        %2864 = vmatprep.subr.mxu0 0.0
        %2865 = vmatpush1.msra.mxu0 0.0
        %2866 = vmatprep.subr.mxu0 0.0
        %2867 = vmatpush1.msra.mxu0 0.0
        %2868 = vmatprep.subr.mxu0 0.0
        %2869 = vmatpush1.msra.mxu0 0.0
        %2870 = vmatprep.mubr.f32.mxu0 0.0
        %2871 = vmatmul.mubr.f32.gmra.mrb[0].mxu0 %v2262
        %v2872 = vpop.f32.mrb[0].mxu0
        %v2873 = vadd.f32 %v2253, %v2872
        %v2874 = vpop.f32.mrb[0].mxu0
        %v2875 = vadd.f32 %v2253, %v2874
        %2876 = vmatprep.mubr.f32.mxu0 0.0
        %2877 = vmatmul.mubr.f32.gmra.mrb[0].mxu0 %v2265
        %v2878 = vpop.f32.mrb[0].mxu0
        %v2879 = vadd.f32 %v2258, %v2878
        %v2880 = vpop.f32.mrb[0].mxu0
        %v2881 = vadd.f32 %v2258, %v2880
        %2882 = vdwg.mxu0
        %v2883 = vxor.u32 %v2334, 2147483648
        %v2884 = vxor.u32 %v2336, 2147483648
        %v2885 = vxor.u32 %v2411, 2147483648
        %v2886 = vxor.u32 %v2413, 2147483648
        %v2887 = vxor.u32 %v2488, 2147483648
        %v2888 = vxor.u32 %v2490, 2147483648
        %v2889 = vxor.u32 %v2565, 2147483648
        %v2890 = vxor.u32 %v2567, 2147483648
        %v2891 = vxor.u32 %v2642, 2147483648
        %v2892 = vxor.u32 %v2644, 2147483648
        %v2893 = vxor.u32 %v2719, 2147483648
        %v2894 = vxor.u32 %v2721, 2147483648
        %v2895 = vxor.u32 %v2796, 2147483648
        %v2896 = vxor.u32 %v2798, 2147483648
        %v2897 = vxor.u32 %v2873, 2147483648
        %v2898 = vxor.u32 %v2875, 2147483648
        %v2899 = vxor.u32 %v2340, 2147483648
        %v2900 = vxor.u32 %v2342, 2147483648
        %v2901 = vxor.u32 %v2417, 2147483648
        %v2902 = vxor.u32 %v2419, 2147483648
        %v2903 = vxor.u32 %v2494, 2147483648
        %v2904 = vxor.u32 %v2496, 2147483648
        %v2905 = vxor.u32 %v2571, 2147483648
        %v2906 = vxor.u32 %v2573, 2147483648
        %v2907 = vxor.u32 %v2648, 2147483648
        %v2908 = vxor.u32 %v2650, 2147483648
        %v2909 = vxor.u32 %v2725, 2147483648
        %v2910 = vxor.u32 %v2727, 2147483648
        %v2911 = vxor.u32 %v2802, 2147483648
        %v2912 = vxor.u32 %v2804, 2147483648
        %v2913 = vxor.u32 %v2879, 2147483648
        %v2914 = vxor.u32 %v2881, 2147483648
        %v2915 = vmul.f32 %v2883, 1.442695
        %v2916 = vpow.pop %v2915
        %v2917 = vmul.f32 %v2884, 1.442695
        %v2918 = vpow.pop %v2917
        %v2919 = vmul.f32 %v2885, 1.442695
        %v2920 = vpow.pop %v2919
        %v2921 = vmul.f32 %v2886, 1.442695
        %v2922 = vpow.pop %v2921
        %v2923 = vmul.f32 %v2887, 1.442695
        %v2924 = vpow.pop %v2923
        %v2925 = vmul.f32 %v2888, 1.442695
        %v2926 = vpow.pop %v2925
        %v2927 = vmul.f32 %v2889, 1.442695
        %v2928 = vpow.pop %v2927
        %v2929 = vmul.f32 %v2890, 1.442695
        %v2930 = vpow.pop %v2929
        %v2931 = vmul.f32 %v2891, 1.442695
        %v2932 = vpow.pop %v2931
        %v2933 = vmul.f32 %v2892, 1.442695
        %v2934 = vpow.pop %v2933
        %v2935 = vmul.f32 %v2893, 1.442695
        %v2936 = vpow.pop %v2935
        %v2937 = vmul.f32 %v2894, 1.442695
        %v2938 = vpow.pop %v2937
        %v2939 = vmul.f32 %v2895, 1.442695
        %v2940 = vpow.pop %v2939
        %v2941 = vmul.f32 %v2896, 1.442695
        %v2942 = vpow.pop %v2941
        %v2943 = vmul.f32 %v2897, 1.442695
        %v2944 = vpow.pop %v2943
        %v2945 = vmul.f32 %v2898, 1.442695
        %v2946 = vpow.pop %v2945
        %v2947 = vmul.f32 %v2899, 1.442695
        %v2948 = vpow.pop %v2947
        %v2949 = vmul.f32 %v2900, 1.442695
        %v2950 = vpow.pop %v2949
        %v2951 = vmul.f32 %v2901, 1.442695
        %v2952 = vpow.pop %v2951
        %v2953 = vmul.f32 %v2902, 1.442695
        %v2954 = vpow.pop %v2953
        %v2955 = vmul.f32 %v2903, 1.442695
        %v2956 = vpow.pop %v2955
        %v2957 = vmul.f32 %v2904, 1.442695
        %v2958 = vpow.pop %v2957
        %v2959 = vmul.f32 %v2905, 1.442695
        %v2960 = vpow.pop %v2959
        %v2961 = vmul.f32 %v2906, 1.442695
        %v2962 = vpow.pop %v2961
        %v2963 = vmul.f32 %v2907, 1.442695
        %v2964 = vpow.pop %v2963
        %v2965 = vmul.f32 %v2908, 1.442695
        %v2966 = vpow.pop %v2965
        %v2967 = vmul.f32 %v2909, 1.442695
        %v2968 = vpow.pop %v2967
        %v2969 = vmul.f32 %v2910, 1.442695
        %v2970 = vpow.pop %v2969
        %v2971 = vmul.f32 %v2911, 1.442695
        %v2972 = vpow.pop %v2971
        %v2973 = vmul.f32 %v2912, 1.442695
        %v2974 = vpow.pop %v2973
        %v2975 = vmul.f32 %v2913, 1.442695
        %v2976 = vpow.pop %v2975
        %v2977 = vmul.f32 %v2914, 1.442695
        %v2978 = vpow.pop %v2977
        %v2979 = vadd.f32 %v2916, 1.0
        %v2980 = vadd.f32 %v2918, 1.0
        %v2981 = vadd.f32 %v2920, 1.0
        %v2982 = vadd.f32 %v2922, 1.0
        %v2983 = vadd.f32 %v2924, 1.0
        %v2984 = vadd.f32 %v2926, 1.0
        %v2985 = vadd.f32 %v2928, 1.0
        %v2986 = vadd.f32 %v2930, 1.0
        %v2987 = vadd.f32 %v2932, 1.0
        %v2988 = vadd.f32 %v2934, 1.0
        %v2989 = vadd.f32 %v2936, 1.0
        %v2990 = vadd.f32 %v2938, 1.0
        %v2991 = vadd.f32 %v2940, 1.0
        %v2992 = vadd.f32 %v2942, 1.0
        %v2993 = vadd.f32 %v2944, 1.0
        %v2994 = vadd.f32 %v2946, 1.0
        %v2995 = vadd.f32 %v2948, 1.0
        %v2996 = vadd.f32 %v2950, 1.0
        %v2997 = vadd.f32 %v2952, 1.0
        %v2998 = vadd.f32 %v2954, 1.0
        %v2999 = vadd.f32 %v2956, 1.0
        %v3000 = vadd.f32 %v2958, 1.0
        %v3001 = vadd.f32 %v2960, 1.0
        %v3002 = vadd.f32 %v2962, 1.0
        %v3003 = vadd.f32 %v2964, 1.0
        %v3004 = vadd.f32 %v2966, 1.0
        %v3005 = vadd.f32 %v2968, 1.0
        %v3006 = vadd.f32 %v2970, 1.0
        %v3007 = vadd.f32 %v2972, 1.0
        %v3008 = vadd.f32 %v2974, 1.0
        %v3009 = vadd.f32 %v2976, 1.0
        %v3010 = vadd.f32 %v2978, 1.0
        %v3011 = vrcp.pop %v2979
        %v3012 = vmul.f32 1.0, %v3011
        %v3013 = vrcp.pop %v2980
        %v3014 = vmul.f32 1.0, %v3013
        %v3015 = vrcp.pop %v2981
        %v3016 = vmul.f32 1.0, %v3015
        %v3017 = vrcp.pop %v2982
        %v3018 = vmul.f32 1.0, %v3017
        %v3019 = vrcp.pop %v2983
        %v3020 = vmul.f32 1.0, %v3019
        %v3021 = vrcp.pop %v2984
        %v3022 = vmul.f32 1.0, %v3021
        %v3023 = vrcp.pop %v2985
        %v3024 = vmul.f32 1.0, %v3023
        %v3025 = vrcp.pop %v2986
        %v3026 = vmul.f32 1.0, %v3025
        %v3027 = vrcp.pop %v2987
        %v3028 = vmul.f32 1.0, %v3027
        %v3029 = vrcp.pop %v2988
        %v3030 = vmul.f32 1.0, %v3029
        %v3031 = vrcp.pop %v2989
        %v3032 = vmul.f32 1.0, %v3031
        %v3033 = vrcp.pop %v2990
        %v3034 = vmul.f32 1.0, %v3033
        %v3035 = vrcp.pop %v2991
        %v3036 = vmul.f32 1.0, %v3035
        %v3037 = vrcp.pop %v2992
        %v3038 = vmul.f32 1.0, %v3037
        %v3039 = vrcp.pop %v2993
        %v3040 = vmul.f32 1.0, %v3039
        %v3041 = vrcp.pop %v2994
        %v3042 = vmul.f32 1.0, %v3041
        %v3043 = vrcp.pop %v2995
        %v3044 = vmul.f32 1.0, %v3043
        %v3045 = vrcp.pop %v2996
        %v3046 = vmul.f32 1.0, %v3045
        %v3047 = vrcp.pop %v2997
        %v3048 = vmul.f32 1.0, %v3047
        %v3049 = vrcp.pop %v2998
        %v3050 = vmul.f32 1.0, %v3049
        %v3051 = vrcp.pop %v2999
        %v3052 = vmul.f32 1.0, %v3051
        %v3053 = vrcp.pop %v3000
        %v3054 = vmul.f32 1.0, %v3053
        %v3055 = vrcp.pop %v3001
        %v3056 = vmul.f32 1.0, %v3055
        %v3057 = vrcp.pop %v3002
        %v3058 = vmul.f32 1.0, %v3057
        %v3059 = vrcp.pop %v3003
        %v3060 = vmul.f32 1.0, %v3059
        %v3061 = vrcp.pop %v3004
        %v3062 = vmul.f32 1.0, %v3061
        %v3063 = vrcp.pop %v3005
        %v3064 = vmul.f32 1.0, %v3063
        %v3065 = vrcp.pop %v3006
        %v3066 = vmul.f32 1.0, %v3065
        %v3067 = vrcp.pop %v3007
        %v3068 = vmul.f32 1.0, %v3067
        %v3069 = vrcp.pop %v3008
        %v3070 = vmul.f32 1.0, %v3069
        %v3071 = vrcp.pop %v3009
        %v3072 = vmul.f32 1.0, %v3071
        %v3073 = vrcp.pop %v3010
        %v3074 = vmul.f32 1.0, %v3073
        %v3075 = vcombine.low %v3012, %v3016
        %v3076 = vcombine.high %v3012, %v3016
        %v3078 = vunpack.c.l.s4 1983009808
        %v3079 = vunpack.c.0.s8 %v3078
        %v3080 = vlaneseq
        %v3081 = vshrl.u32 %v3080, 7
        %v3082 = vsub.s32 %v3079, %v3081
        %v3083 = vrot.slane %v3075, %v3082
        %v3085 = vunpack.c.l.s4 1983009808
        %v3086 = vunpack.c.0.s8 %v3085
        %v3087 = vlaneseq
        %v3088 = vshrl.u32 %v3087, 7
        %v3089 = vsub.s32 %v3086, %v3088
        %v3090 = vrot.slane %v3076, %v3089
        %v3091 = vcombine.low %v3014, %v3018
        %v3092 = vcombine.high %v3014, %v3018
        %v3094 = vunpack.c.l.s4 1983009808
        %v3095 = vunpack.c.0.s8 %v3094
        %v3096 = vlaneseq
        %v3097 = vshrl.u32 %v3096, 7
        %v3098 = vsub.s32 %v3095, %v3097
        %v3099 = vrot.slane %v3091, %v3098
        %v3101 = vunpack.c.l.s4 1983009808
        %v3102 = vunpack.c.0.s8 %v3101
        %v3103 = vlaneseq
        %v3104 = vshrl.u32 %v3103, 7
        %v3105 = vsub.s32 %v3102, %v3104
        %v3106 = vrot.slane %v3092, %v3105
        %v3107 = vcombine.low %v3020, %v3024
        %v3108 = vcombine.high %v3020, %v3024
        %v3110 = vunpack.c.l.s4 1983009808
        %v3111 = vunpack.c.0.s8 %v3110
        %v3112 = vlaneseq
        %v3113 = vshrl.u32 %v3112, 7
        %v3114 = vsub.s32 %v3111, %v3113
        %v3115 = vrot.slane %v3107, %v3114
        %v3117 = vunpack.c.l.s4 1983009808
        %v3118 = vunpack.c.0.s8 %v3117
        %v3119 = vlaneseq
        %v3120 = vshrl.u32 %v3119, 7
        %v3121 = vsub.s32 %v3118, %v3120
        %v3122 = vrot.slane %v3108, %v3121
        %v3123 = vcombine.low %v3022, %v3026
        %v3124 = vcombine.high %v3022, %v3026
        %v3126 = vunpack.c.l.s4 1983009808
        %v3127 = vunpack.c.0.s8 %v3126
        %v3128 = vlaneseq
        %v3129 = vshrl.u32 %v3128, 7
        %v3130 = vsub.s32 %v3127, %v3129
        %v3131 = vrot.slane %v3123, %v3130
        %v3133 = vunpack.c.l.s4 1983009808
        %v3134 = vunpack.c.0.s8 %v3133
        %v3135 = vlaneseq
        %v3136 = vshrl.u32 %v3135, 7
        %v3137 = vsub.s32 %v3134, %v3136
        %v3138 = vrot.slane %v3124, %v3137
        %v3139 = vcombine.low %v3083, %v3099
        %v3140 = vcombine.high %v3083, %v3099
        %v3142 = vunpack.c.l.s4 1934713408
        %v3143 = vunpack.c.0.s8 %v3142
        %v3144 = vlaneseq
        %v3145 = vshrl.u32 %v3144, 7
        %v3146 = vsub.s32 %v3143, %v3145
        %v3147 = vrot.slane %v3139, %v3146
        %v3149 = vunpack.c.l.s4 1934713408
        %v3150 = vunpack.c.0.s8 %v3149
        %v3151 = vlaneseq
        %v3152 = vshrl.u32 %v3151, 7
        %v3153 = vsub.s32 %v3150, %v3152
        %v3154 = vrot.slane %v3140, %v3153
        %v3155 = vcombine.low %v3090, %v3106
        %v3156 = vcombine.high %v3090, %v3106
        %v3158 = vunpack.c.l.s4 1934713408
        %v3159 = vunpack.c.0.s8 %v3158
        %v3160 = vlaneseq
        %v3161 = vshrl.u32 %v3160, 7
        %v3162 = vsub.s32 %v3159, %v3161
        %v3163 = vrot.slane %v3155, %v3162
        %v3165 = vunpack.c.l.s4 1934713408
        %v3166 = vunpack.c.0.s8 %v3165
        %v3167 = vlaneseq
        %v3168 = vshrl.u32 %v3167, 7
        %v3169 = vsub.s32 %v3166, %v3168
        %v3170 = vrot.slane %v3156, %v3169
        %v3171 = vcombine.low %v3115, %v3131
        %v3172 = vcombine.high %v3115, %v3131
        %v3174 = vunpack.c.l.s4 1934713408
        %v3175 = vunpack.c.0.s8 %v3174
        %v3176 = vlaneseq
        %v3177 = vshrl.u32 %v3176, 7
        %v3178 = vsub.s32 %v3175, %v3177
        %v3179 = vrot.slane %v3171, %v3178
        %v3181 = vunpack.c.l.s4 1934713408
        %v3182 = vunpack.c.0.s8 %v3181
        %v3183 = vlaneseq
        %v3184 = vshrl.u32 %v3183, 7
        %v3185 = vsub.s32 %v3182, %v3184
        %v3186 = vrot.slane %v3172, %v3185
        %v3187 = vcombine.low %v3122, %v3138
        %v3188 = vcombine.high %v3122, %v3138
        %v3190 = vunpack.c.l.s4 1934713408
        %v3191 = vunpack.c.0.s8 %v3190
        %v3192 = vlaneseq
        %v3193 = vshrl.u32 %v3192, 7
        %v3194 = vsub.s32 %v3191, %v3193
        %v3195 = vrot.slane %v3187, %v3194
        %v3197 = vunpack.c.l.s4 1934713408
        %v3198 = vunpack.c.0.s8 %v3197
        %v3199 = vlaneseq
        %v3200 = vshrl.u32 %v3199, 7
        %v3201 = vsub.s32 %v3198, %v3200
        %v3202 = vrot.slane %v3188, %v3201
        %v3203 = vcombine.low %v3147, %v3179
        %v3204 = vcombine.high %v3147, %v3179
        %v3205 = vcombine.low %v3154, %v3186
        %v3206 = vcombine.high %v3154, %v3186
        %v3207 = vcombine.low %v3163, %v3195
        %v3208 = vcombine.high %v3163, %v3195
        %v3209 = vcombine.low %v3170, %v3202
        %v3210 = vcombine.high %v3170, %v3202
        %v3211 = vcombine.low %v3028, %v3032
        %v3212 = vcombine.high %v3028, %v3032
        %v3214 = vunpack.c.l.s4 1983009808
        %v3215 = vunpack.c.0.s8 %v3214
        %v3216 = vlaneseq
        %v3217 = vshrl.u32 %v3216, 7
        %v3218 = vsub.s32 %v3215, %v3217
        %v3219 = vrot.slane %v3211, %v3218
        %v3221 = vunpack.c.l.s4 1983009808
        %v3222 = vunpack.c.0.s8 %v3221
        %v3223 = vlaneseq
        %v3224 = vshrl.u32 %v3223, 7
        %v3225 = vsub.s32 %v3222, %v3224
        %v3226 = vrot.slane %v3212, %v3225
        %v3227 = vcombine.low %v3030, %v3034
        %v3228 = vcombine.high %v3030, %v3034
        %v3230 = vunpack.c.l.s4 1983009808
        %v3231 = vunpack.c.0.s8 %v3230
        %v3232 = vlaneseq
        %v3233 = vshrl.u32 %v3232, 7
        %v3234 = vsub.s32 %v3231, %v3233
        %v3235 = vrot.slane %v3227, %v3234
        %v3237 = vunpack.c.l.s4 1983009808
        %v3238 = vunpack.c.0.s8 %v3237
        %v3239 = vlaneseq
        %v3240 = vshrl.u32 %v3239, 7
        %v3241 = vsub.s32 %v3238, %v3240
        %v3242 = vrot.slane %v3228, %v3241
        %v3243 = vcombine.low %v3036, %v3040
        %v3244 = vcombine.high %v3036, %v3040
        %v3246 = vunpack.c.l.s4 1983009808
        %v3247 = vunpack.c.0.s8 %v3246
        %v3248 = vlaneseq
        %v3249 = vshrl.u32 %v3248, 7
        %v3250 = vsub.s32 %v3247, %v3249
        %v3251 = vrot.slane %v3243, %v3250
        %v3253 = vunpack.c.l.s4 1983009808
        %v3254 = vunpack.c.0.s8 %v3253
        %v3255 = vlaneseq
        %v3256 = vshrl.u32 %v3255, 7
        %v3257 = vsub.s32 %v3254, %v3256
        %v3258 = vrot.slane %v3244, %v3257
        %v3259 = vcombine.low %v3038, %v3042
        %v3260 = vcombine.high %v3038, %v3042
        %v3262 = vunpack.c.l.s4 1983009808
        %v3263 = vunpack.c.0.s8 %v3262
        %v3264 = vlaneseq
        %v3265 = vshrl.u32 %v3264, 7
        %v3266 = vsub.s32 %v3263, %v3265
        %v3267 = vrot.slane %v3259, %v3266
        %v3269 = vunpack.c.l.s4 1983009808
        %v3270 = vunpack.c.0.s8 %v3269
        %v3271 = vlaneseq
        %v3272 = vshrl.u32 %v3271, 7
        %v3273 = vsub.s32 %v3270, %v3272
        %v3274 = vrot.slane %v3260, %v3273
        %v3275 = vcombine.low %v3219, %v3235
        %v3276 = vcombine.high %v3219, %v3235
        %v3278 = vunpack.c.l.s4 1934713408
        %v3279 = vunpack.c.0.s8 %v3278
        %v3280 = vlaneseq
        %v3281 = vshrl.u32 %v3280, 7
        %v3282 = vsub.s32 %v3279, %v3281
        %v3283 = vrot.slane %v3275, %v3282
        %v3285 = vunpack.c.l.s4 1934713408
        %v3286 = vunpack.c.0.s8 %v3285
        %v3287 = vlaneseq
        %v3288 = vshrl.u32 %v3287, 7
        %v3289 = vsub.s32 %v3286, %v3288
        %v3290 = vrot.slane %v3276, %v3289
        %v3291 = vcombine.low %v3226, %v3242
        %v3292 = vcombine.high %v3226, %v3242
        %v3294 = vunpack.c.l.s4 1934713408
        %v3295 = vunpack.c.0.s8 %v3294
        %v3296 = vlaneseq
        %v3297 = vshrl.u32 %v3296, 7
        %v3298 = vsub.s32 %v3295, %v3297
        %v3299 = vrot.slane %v3291, %v3298
        %v3301 = vunpack.c.l.s4 1934713408
        %v3302 = vunpack.c.0.s8 %v3301
        %v3303 = vlaneseq
        %v3304 = vshrl.u32 %v3303, 7
        %v3305 = vsub.s32 %v3302, %v3304
        %v3306 = vrot.slane %v3292, %v3305
        %v3307 = vcombine.low %v3251, %v3267
        %v3308 = vcombine.high %v3251, %v3267
        %v3310 = vunpack.c.l.s4 1934713408
        %v3311 = vunpack.c.0.s8 %v3310
        %v3312 = vlaneseq
        %v3313 = vshrl.u32 %v3312, 7
        %v3314 = vsub.s32 %v3311, %v3313
        %v3315 = vrot.slane %v3307, %v3314
        %v3317 = vunpack.c.l.s4 1934713408
        %v3318 = vunpack.c.0.s8 %v3317
        %v3319 = vlaneseq
        %v3320 = vshrl.u32 %v3319, 7
        %v3321 = vsub.s32 %v3318, %v3320
        %v3322 = vrot.slane %v3308, %v3321
        %v3323 = vcombine.low %v3258, %v3274
        %v3324 = vcombine.high %v3258, %v3274
        %v3326 = vunpack.c.l.s4 1934713408
        %v3327 = vunpack.c.0.s8 %v3326
        %v3328 = vlaneseq
        %v3329 = vshrl.u32 %v3328, 7
        %v3330 = vsub.s32 %v3327, %v3329
        %v3331 = vrot.slane %v3323, %v3330
        %v3333 = vunpack.c.l.s4 1934713408
        %v3334 = vunpack.c.0.s8 %v3333
        %v3335 = vlaneseq
        %v3336 = vshrl.u32 %v3335, 7
        %v3337 = vsub.s32 %v3334, %v3336
        %v3338 = vrot.slane %v3324, %v3337
        %v3339 = vcombine.low %v3283, %v3315
        %v3340 = vcombine.high %v3283, %v3315
        %v3341 = vcombine.low %v3290, %v3322
        %v3342 = vcombine.high %v3290, %v3322
        %v3343 = vcombine.low %v3299, %v3331
        %v3344 = vcombine.high %v3299, %v3331
        %v3345 = vcombine.low %v3306, %v3338
        %v3346 = vcombine.high %v3306, %v3338
        %v3347 = vcombine.low %v3044, %v3048
        %v3348 = vcombine.high %v3044, %v3048
        %v3350 = vunpack.c.l.s4 1983009808
        %v3351 = vunpack.c.0.s8 %v3350
        %v3352 = vlaneseq
        %v3353 = vshrl.u32 %v3352, 7
        %v3354 = vsub.s32 %v3351, %v3353
        %v3355 = vrot.slane %v3347, %v3354
        %v3357 = vunpack.c.l.s4 1983009808
        %v3358 = vunpack.c.0.s8 %v3357
        %v3359 = vlaneseq
        %v3360 = vshrl.u32 %v3359, 7
        %v3361 = vsub.s32 %v3358, %v3360
        %v3362 = vrot.slane %v3348, %v3361
        %v3363 = vcombine.low %v3046, %v3050
        %v3364 = vcombine.high %v3046, %v3050
        %v3366 = vunpack.c.l.s4 1983009808
        %v3367 = vunpack.c.0.s8 %v3366
        %v3368 = vlaneseq
        %v3369 = vshrl.u32 %v3368, 7
        %v3370 = vsub.s32 %v3367, %v3369
        %v3371 = vrot.slane %v3363, %v3370
        %v3373 = vunpack.c.l.s4 1983009808
        %v3374 = vunpack.c.0.s8 %v3373
        %v3375 = vlaneseq
        %v3376 = vshrl.u32 %v3375, 7
        %v3377 = vsub.s32 %v3374, %v3376
        %v3378 = vrot.slane %v3364, %v3377
        %v3379 = vcombine.low %v3052, %v3056
        %v3380 = vcombine.high %v3052, %v3056
        %v3382 = vunpack.c.l.s4 1983009808
        %v3383 = vunpack.c.0.s8 %v3382
        %v3384 = vlaneseq
        %v3385 = vshrl.u32 %v3384, 7
        %v3386 = vsub.s32 %v3383, %v3385
        %v3387 = vrot.slane %v3379, %v3386
        %v3389 = vunpack.c.l.s4 1983009808
        %v3390 = vunpack.c.0.s8 %v3389
        %v3391 = vlaneseq
        %v3392 = vshrl.u32 %v3391, 7
        %v3393 = vsub.s32 %v3390, %v3392
        %v3394 = vrot.slane %v3380, %v3393
        %v3395 = vcombine.low %v3054, %v3058
        %v3396 = vcombine.high %v3054, %v3058
        %v3398 = vunpack.c.l.s4 1983009808
        %v3399 = vunpack.c.0.s8 %v3398
        %v3400 = vlaneseq
        %v3401 = vshrl.u32 %v3400, 7
        %v3402 = vsub.s32 %v3399, %v3401
        %v3403 = vrot.slane %v3395, %v3402
        %v3405 = vunpack.c.l.s4 1983009808
        %v3406 = vunpack.c.0.s8 %v3405
        %v3407 = vlaneseq
        %v3408 = vshrl.u32 %v3407, 7
        %v3409 = vsub.s32 %v3406, %v3408
        %v3410 = vrot.slane %v3396, %v3409
        %v3411 = vcombine.low %v3355, %v3371
        %v3412 = vcombine.high %v3355, %v3371
        %v3414 = vunpack.c.l.s4 1934713408
        %v3415 = vunpack.c.0.s8 %v3414
        %v3416 = vlaneseq
        %v3417 = vshrl.u32 %v3416, 7
        %v3418 = vsub.s32 %v3415, %v3417
        %v3419 = vrot.slane %v3411, %v3418
        %v3421 = vunpack.c.l.s4 1934713408
        %v3422 = vunpack.c.0.s8 %v3421
        %v3423 = vlaneseq
        %v3424 = vshrl.u32 %v3423, 7
        %v3425 = vsub.s32 %v3422, %v3424
        %v3426 = vrot.slane %v3412, %v3425
        %v3427 = vcombine.low %v3362, %v3378
        %v3428 = vcombine.high %v3362, %v3378
        %v3430 = vunpack.c.l.s4 1934713408
        %v3431 = vunpack.c.0.s8 %v3430
        %v3432 = vlaneseq
        %v3433 = vshrl.u32 %v3432, 7
        %v3434 = vsub.s32 %v3431, %v3433
        %v3435 = vrot.slane %v3427, %v3434
        %v3437 = vunpack.c.l.s4 1934713408
        %v3438 = vunpack.c.0.s8 %v3437
        %v3439 = vlaneseq
        %v3440 = vshrl.u32 %v3439, 7
        %v3441 = vsub.s32 %v3438, %v3440
        %v3442 = vrot.slane %v3428, %v3441
        %v3443 = vcombine.low %v3387, %v3403
        %v3444 = vcombine.high %v3387, %v3403
        %v3446 = vunpack.c.l.s4 1934713408
        %v3447 = vunpack.c.0.s8 %v3446
        %v3448 = vlaneseq
        %v3449 = vshrl.u32 %v3448, 7
        %v3450 = vsub.s32 %v3447, %v3449
        %v3451 = vrot.slane %v3443, %v3450
        %v3453 = vunpack.c.l.s4 1934713408
        %v3454 = vunpack.c.0.s8 %v3453
        %v3455 = vlaneseq
        %v3456 = vshrl.u32 %v3455, 7
        %v3457 = vsub.s32 %v3454, %v3456
        %v3458 = vrot.slane %v3444, %v3457
        %v3459 = vcombine.low %v3394, %v3410
        %v3460 = vcombine.high %v3394, %v3410
        %v3462 = vunpack.c.l.s4 1934713408
        %v3463 = vunpack.c.0.s8 %v3462
        %v3464 = vlaneseq
        %v3465 = vshrl.u32 %v3464, 7
        %v3466 = vsub.s32 %v3463, %v3465
        %v3467 = vrot.slane %v3459, %v3466
        %v3469 = vunpack.c.l.s4 1934713408
        %v3470 = vunpack.c.0.s8 %v3469
        %v3471 = vlaneseq
        %v3472 = vshrl.u32 %v3471, 7
        %v3473 = vsub.s32 %v3470, %v3472
        %v3474 = vrot.slane %v3460, %v3473
        %v3475 = vcombine.low %v3419, %v3451
        %v3476 = vcombine.high %v3419, %v3451
        %v3477 = vcombine.low %v3426, %v3458
        %v3478 = vcombine.high %v3426, %v3458
        %v3479 = vcombine.low %v3435, %v3467
        %v3480 = vcombine.high %v3435, %v3467
        %v3481 = vcombine.low %v3442, %v3474
        %v3482 = vcombine.high %v3442, %v3474
        %v3483 = vcombine.low %v3060, %v3064
        %v3484 = vcombine.high %v3060, %v3064
        %v3486 = vunpack.c.l.s4 1983009808
        %v3487 = vunpack.c.0.s8 %v3486
        %v3488 = vlaneseq
        %v3489 = vshrl.u32 %v3488, 7
        %v3490 = vsub.s32 %v3487, %v3489
        %v3491 = vrot.slane %v3483, %v3490
        %v3493 = vunpack.c.l.s4 1983009808
        %v3494 = vunpack.c.0.s8 %v3493
        %v3495 = vlaneseq
        %v3496 = vshrl.u32 %v3495, 7
        %v3497 = vsub.s32 %v3494, %v3496
        %v3498 = vrot.slane %v3484, %v3497
        %v3499 = vcombine.low %v3062, %v3066
        %v3500 = vcombine.high %v3062, %v3066
        %v3502 = vunpack.c.l.s4 1983009808
        %v3503 = vunpack.c.0.s8 %v3502
        %v3504 = vlaneseq
        %v3505 = vshrl.u32 %v3504, 7
        %v3506 = vsub.s32 %v3503, %v3505
        %v3507 = vrot.slane %v3499, %v3506
        %v3509 = vunpack.c.l.s4 1983009808
        %v3510 = vunpack.c.0.s8 %v3509
        %v3511 = vlaneseq
        %v3512 = vshrl.u32 %v3511, 7
        %v3513 = vsub.s32 %v3510, %v3512
        %v3514 = vrot.slane %v3500, %v3513
        %v3515 = vcombine.low %v3068, %v3072
        %v3516 = vcombine.high %v3068, %v3072
        %v3518 = vunpack.c.l.s4 1983009808
        %v3519 = vunpack.c.0.s8 %v3518
        %v3520 = vlaneseq
        %v3521 = vshrl.u32 %v3520, 7
        %v3522 = vsub.s32 %v3519, %v3521
        %v3523 = vrot.slane %v3515, %v3522
        %v3525 = vunpack.c.l.s4 1983009808
        %v3526 = vunpack.c.0.s8 %v3525
        %v3527 = vlaneseq
        %v3528 = vshrl.u32 %v3527, 7
        %v3529 = vsub.s32 %v3526, %v3528
        %v3530 = vrot.slane %v3516, %v3529
        %v3531 = vcombine.low %v3070, %v3074
        %v3532 = vcombine.high %v3070, %v3074
        %v3534 = vunpack.c.l.s4 1983009808
        %v3535 = vunpack.c.0.s8 %v3534
        %v3536 = vlaneseq
        %v3537 = vshrl.u32 %v3536, 7
        %v3538 = vsub.s32 %v3535, %v3537
        %v3539 = vrot.slane %v3531, %v3538
        %v3541 = vunpack.c.l.s4 1983009808
        %v3542 = vunpack.c.0.s8 %v3541
        %v3543 = vlaneseq
        %v3544 = vshrl.u32 %v3543, 7
        %v3545 = vsub.s32 %v3542, %v3544
        %v3546 = vrot.slane %v3532, %v3545
        %v3547 = vcombine.low %v3491, %v3507
        %v3548 = vcombine.high %v3491, %v3507
        %v3550 = vunpack.c.l.s4 1934713408
        %v3551 = vunpack.c.0.s8 %v3550
        %v3552 = vlaneseq
        %v3553 = vshrl.u32 %v3552, 7
        %v3554 = vsub.s32 %v3551, %v3553
        %v3555 = vrot.slane %v3547, %v3554
        %v3557 = vunpack.c.l.s4 1934713408
        %v3558 = vunpack.c.0.s8 %v3557
        %v3559 = vlaneseq
        %v3560 = vshrl.u32 %v3559, 7
        %v3561 = vsub.s32 %v3558, %v3560
        %v3562 = vrot.slane %v3548, %v3561
        %v3563 = vcombine.low %v3498, %v3514
        %v3564 = vcombine.high %v3498, %v3514
        %v3566 = vunpack.c.l.s4 1934713408
        %v3567 = vunpack.c.0.s8 %v3566
        %v3568 = vlaneseq
        %v3569 = vshrl.u32 %v3568, 7
        %v3570 = vsub.s32 %v3567, %v3569
        %v3571 = vrot.slane %v3563, %v3570
        %v3573 = vunpack.c.l.s4 1934713408
        %v3574 = vunpack.c.0.s8 %v3573
        %v3575 = vlaneseq
        %v3576 = vshrl.u32 %v3575, 7
        %v3577 = vsub.s32 %v3574, %v3576
        %v3578 = vrot.slane %v3564, %v3577
        %v3579 = vcombine.low %v3523, %v3539
        %v3580 = vcombine.high %v3523, %v3539
        %v3582 = vunpack.c.l.s4 1934713408
        %v3583 = vunpack.c.0.s8 %v3582
        %v3584 = vlaneseq
        %v3585 = vshrl.u32 %v3584, 7
        %v3586 = vsub.s32 %v3583, %v3585
        %v3587 = vrot.slane %v3579, %v3586
        %v3589 = vunpack.c.l.s4 1934713408
        %v3590 = vunpack.c.0.s8 %v3589
        %v3591 = vlaneseq
        %v3592 = vshrl.u32 %v3591, 7
        %v3593 = vsub.s32 %v3590, %v3592
        %v3594 = vrot.slane %v3580, %v3593
        %v3595 = vcombine.low %v3530, %v3546
        %v3596 = vcombine.high %v3530, %v3546
        %v3598 = vunpack.c.l.s4 1934713408
        %v3599 = vunpack.c.0.s8 %v3598
        %v3600 = vlaneseq
        %v3601 = vshrl.u32 %v3600, 7
        %v3602 = vsub.s32 %v3599, %v3601
        %v3603 = vrot.slane %v3595, %v3602
        %v3605 = vunpack.c.l.s4 1934713408
        %v3606 = vunpack.c.0.s8 %v3605
        %v3607 = vlaneseq
        %v3608 = vshrl.u32 %v3607, 7
        %v3609 = vsub.s32 %v3606, %v3608
        %v3610 = vrot.slane %v3596, %v3609
        %v3611 = vcombine.low %v3555, %v3587
        %v3612 = vcombine.high %v3555, %v3587
        %v3613 = vcombine.low %v3562, %v3594
        %v3614 = vcombine.high %v3562, %v3594
        %v3615 = vcombine.low %v3571, %v3603
        %v3616 = vcombine.high %v3571, %v3603
        %v3617 = vcombine.low %v3578, %v3610
        %v3618 = vcombine.high %v3578, %v3610
        %v3619 = vmul.f32 %v389, %v3203
        %v3620 = vmul.f32 %v390, %v3339
        %v3621 = vmul.f32 %v391, %v3204
        %v3622 = vmul.f32 %v392, %v3340
        %v3623 = vmul.f32 %v393, %v3205
        %v3624 = vmul.f32 %v394, %v3341
        %v3625 = vmul.f32 %v395, %v3206
        %v3626 = vmul.f32 %v396, %v3342
        %v3627 = vmul.f32 %v397, %v3207
        %v3628 = vmul.f32 %v398, %v3343
        %v3629 = vmul.f32 %v399, %v3208
        %v3630 = vmul.f32 %v400, %v3344
        %v3631 = vmul.f32 %v401, %v3209
        %v3632 = vmul.f32 %v402, %v3345
        %v3633 = vmul.f32 %v403, %v3210
        %v3634 = vmul.f32 %v404, %v3346
        %v3635 = vmul.f32 %v405, %v3475
        %v3636 = vmul.f32 %v406, %v3611
        %v3637 = vmul.f32 %v407, %v3476
        %v3638 = vmul.f32 %v408, %v3612
        %v3639 = vmul.f32 %v409, %v3477
        %v3640 = vmul.f32 %v410, %v3613
        %v3641 = vmul.f32 %v411, %v3478
        %v3642 = vmul.f32 %v412, %v3614
        %v3643 = vmul.f32 %v413, %v3479
        %v3644 = vmul.f32 %v414, %v3615
        %v3645 = vmul.f32 %v415, %v3480
        %v3646 = vmul.f32 %v416, %v3616
        %v3647 = vmul.f32 %v417, %v3481
        %v3648 = vmul.f32 %v418, %v3617
        %v3649 = vmul.f32 %v419, %v3482
        %v3650 = vmul.f32 %v420, %v3618
        %3651 = vst [vmem:[%s381] sm:$0xff] %v3619
        %3652 = vst [vmem:[%s381 + $0x8] sm:$0xff] %v3620
        %3653 = vst [vmem:[%s381 + $0x10] sm:$0xff] %v3621
        %3654 = vst [vmem:[%s381 + $0x18] sm:$0xff] %v3622
        %3655 = vst [vmem:[%s381 + $0x20] sm:$0xff] %v3623
        %3656 = vst [vmem:[%s381 + $0x28] sm:$0xff] %v3624
        %3657 = vst [vmem:[%s381 + $0x30] sm:$0xff] %v3625
        %3658 = vst [vmem:[%s381 + $0x38] sm:$0xff] %v3626
        %3659 = vst [vmem:[%s381 + $0x40] sm:$0xff] %v3627
        %3660 = vst [vmem:[%s381 + $0x48] sm:$0xff] %v3628
        %3661 = vst [vmem:[%s381 + $0x50] sm:$0xff] %v3629
        %3662 = vst [vmem:[%s381 + $0x58] sm:$0xff] %v3630
        %3663 = vst [vmem:[%s381 + $0x60] sm:$0xff] %v3631
        %3664 = vst [vmem:[%s381 + $0x68] sm:$0xff] %v3632
        %3665 = vst [vmem:[%s381 + $0x70] sm:$0xff] %v3633
        %3666 = vst [vmem:[%s381 + $0x78] sm:$0xff] %v3634
        %3667 = vst [vmem:[%s381 + $0x80] sm:$0xff] %v3635
        %3668 = vst [vmem:[%s381 + $0x88] sm:$0xff] %v3636
        %3669 = vst [vmem:[%s381 + $0x90] sm:$0xff] %v3637
        %3670 = vst [vmem:[%s381 + $0x98] sm:$0xff] %v3638
        %3671 = vst [vmem:[%s381 + $0xa0] sm:$0xff] %v3639
        %3672 = vst [vmem:[%s381 + $0xa8] sm:$0xff] %v3640
        %3673 = vst [vmem:[%s381 + $0xb0] sm:$0xff] %v3641
        %3674 = vst [vmem:[%s381 + $0xb8] sm:$0xff] %v3642
        %3675 = vst [vmem:[%s381 + $0xc0] sm:$0xff] %v3643
        %3676 = vst [vmem:[%s381 + $0xc8] sm:$0xff] %v3644
        %3677 = vst [vmem:[%s381 + $0xd0] sm:$0xff] %v3645
        %3678 = vst [vmem:[%s381 + $0xd8] sm:$0xff] %v3646
        %3679 = vst [vmem:[%s381 + $0xe0] sm:$0xff] %v3647
        %3680 = vst [vmem:[%s381 + $0xe8] sm:$0xff] %v3648
        %3681 = vst [vmem:[%s381 + $0xf0] sm:$0xff] %v3649
        %3682 = vst [vmem:[%s381 + $0xf8] sm:$0xff] %v3650
        %v3683 = vmul.f32 %v389, %v389
        %v3684 = vmul.f32 %v390, %v390
        %v3685 = vmul.f32 %v391, %v391
        %v3686 = vmul.f32 %v392, %v392
        %v3687 = vmul.f32 %v393, %v393
        %v3688 = vmul.f32 %v394, %v394
        %v3689 = vmul.f32 %v395, %v395
        %v3690 = vmul.f32 %v396, %v396
        %v3691 = vmul.f32 %v397, %v397
        %v3692 = vmul.f32 %v398, %v398
        %v3693 = vmul.f32 %v399, %v399
        %v3694 = vmul.f32 %v400, %v400
        %v3695 = vmul.f32 %v401, %v401
        %v3696 = vmul.f32 %v402, %v402
        %v3697 = vmul.f32 %v403, %v403
        %v3698 = vmul.f32 %v404, %v404
        %v3699 = vmul.f32 %v405, %v405
        %v3700 = vmul.f32 %v406, %v406
        %v3701 = vmul.f32 %v407, %v407
        %v3702 = vmul.f32 %v408, %v408
        %v3703 = vmul.f32 %v409, %v409
        %v3704 = vmul.f32 %v410, %v410
        %v3705 = vmul.f32 %v411, %v411
        %v3706 = vmul.f32 %v412, %v412
        %v3707 = vmul.f32 %v413, %v413
        %v3708 = vmul.f32 %v414, %v414
        %v3709 = vmul.f32 %v415, %v415
        %v3710 = vmul.f32 %v416, %v416
        %v3711 = vmul.f32 %v417, %v417
        %v3712 = vmul.f32 %v418, %v418
        %v3713 = vmul.f32 %v419, %v419
        %v3714 = vmul.f32 %v420, %v420
        %v3715 = vadd.f32 %v3683, %v3685
        %v3716 = vadd.f32 %v3715, %v3687
        %v3717 = vadd.f32 %v3716, %v3689
        %v3718 = vadd.f32 %v3717, %v3691
        %v3719 = vadd.f32 %v3718, %v3693
        %v3720 = vadd.f32 %v3719, %v3695
        %v3721 = vadd.f32 %v3720, %v3697
        %v3722 = vadd.f32 %v3721, %v3699
        %v3723 = vadd.f32 %v3722, %v3701
        %v3724 = vadd.f32 %v3723, %v3703
        %v3725 = vadd.f32 %v3724, %v3705
        %v3726 = vadd.f32 %v3725, %v3707
        %v3727 = vadd.f32 %v3726, %v3709
        %v3728 = vadd.f32 %v3727, %v3711
        %v3729 = vadd.f32 %v3728, %v3713
        %v3730 = vadd.f32 %v3684, %v3686
        %v3731 = vadd.f32 %v3730, %v3688
        %v3732 = vadd.f32 %v3731, %v3690
        %v3733 = vadd.f32 %v3732, %v3692
        %v3734 = vadd.f32 %v3733, %v3694
        %v3735 = vadd.f32 %v3734, %v3696
        %v3736 = vadd.f32 %v3735, %v3698
        %v3737 = vadd.f32 %v3736, %v3700
        %v3738 = vadd.f32 %v3737, %v3702
        %v3739 = vadd.f32 %v3738, %v3704
        %v3740 = vadd.f32 %v3739, %v3706
        %v3741 = vadd.f32 %v3740, %v3708
        %v3742 = vadd.f32 %v3741, %v3710
        %v3743 = vadd.f32 %v3742, %v3712
        %v3744 = vadd.f32 %v3743, %v3714
        %3745 = vst [vmem:[%s388] sm:$0xff] %v3729
        %3746 = vst [vmem:[%s388 + $0x8] sm:$0xff] %v3744
        %s3747 = sand.u32 %s233, 1
        %s3748 = scalar_lea.sflag [#allocation4], %s3747
        %s3749 = sand.u32 %s233, 1
        %s3750 = smul.addr %s3749, 256
        %s3751 = scalar_lea.vmem [#allocation5], %s3750
        %s3752 = sand.u32 %s259, 1
        %s3753 = scalar_lea.sflag [#allocation7], %s3752
        %s3754 = sand.u32 %s259, 1
        %s3755 = smul.addr %s3754, 16
        %s3756 = scalar_lea.vmem [#allocation6], %s3755
        // Predicated region
        $region61: #{tpu_custom_call.1} parent=55 // pred_check
          %p3757 = pneg %p243
        $region62: #{tpu_custom_call.1} parent=55 // pred_check_branch
          %3759 = sbr.rel (%p3757) target = $region64
        $region63: #{tpu_custom_call.1} parent=55 // pred_region
          %s3761 = ssub.s32 4096, 4096
          %3762 = vsyncadd %s3748, %s3761
          %s3763 = smul.addr %s31, 32
          %s3764 = smul.addr %s3763, 128
          %s3765 = scalar_lea.hbm %s9, %s3764
          %s3766 = sshll.u32 %s3751, 4
          %s3767 = int_to_ptr.vmem [resolvable:$true] %s3766
          %3772 = dma.vmem_to_hbm [thread:$0]  %s3767, 4096, %s3765, %s3748, 128, 128, 8
        $region64: #{tpu_custom_call.1} parent=55 // pred_fallthru
          _
        // Predicated region
        $region65: #{tpu_custom_call.1} parent=55 // pred_check
          %p3773 = pneg %p269
        $region66: #{tpu_custom_call.1} parent=55 // pred_check_branch
          %3775 = sbr.rel (%p3773) target = $region68
        $region67: #{tpu_custom_call.1} parent=55 // pred_region
          %s3777 = ssub.s32 256, 256
          %3778 = vsyncadd %s3753, %s3777
          %s3779 = smul.addr %s31, 2
          %s3780 = smul.addr %s3779, 128
          %s3781 = scalar_lea.hbm %s10, %s3780
          %s3782 = sshll.u32 %s3756, 4
          %s3783 = int_to_ptr.vmem [resolvable:$true] %s3782
          %3788 = dma.vmem_to_hbm [thread:$0]  %s3783, 256, %s3781, %s3753, 128, 128, 8
        $region68: #{tpu_custom_call.1} parent=55 // pred_fallthru
          _
      $region56: #{tpu_custom_call.1} parent=5 // pred_fallthru
        _
      %p3789 = scmp.le.s32.totalorder 2, %s26
      // Predicated region
      $region69: #{tpu_custom_call.1} parent=5 // pred_check
        %p3790 = pneg %p3789
      $region70: #{tpu_custom_call.1} parent=5 // pred_check_branch
        %3792 = sbr.rel (%p3790) target = $region72
      $region71: #{tpu_custom_call.1} parent=5 // pred_region
        %s3793 = ssub.s32 %s26, 2
        // Predicated region
        $region73: #{tpu_custom_call.1} parent=71 // pred_check
          %p3794 = pneg %p249
        $region74: #{tpu_custom_call.1} parent=71 // pred_check_branch
          %3796 = sbr.rel (%p3794) target = $region76
        $region75: #{tpu_custom_call.1} parent=71 // pred_region
          %s3797 = sand.u32 %s234, 1
          %s3798 = scalar_lea.sflag [#allocation4], %s3797
          %s3799 = sand.u32 %s234, 1
          %s3800 = smul.addr %s3799, 256
          %s3801 = scalar_lea.vmem [#allocation5], %s3800
          %3802 = dma.done %s3798, 4096
        $region76: #{tpu_custom_call.1} parent=71 // pred_fallthru
          _
        // Predicated region
        $region77: #{tpu_custom_call.1} parent=71 // pred_check
          %p3803 = pneg %p275
        $region78: #{tpu_custom_call.1} parent=71 // pred_check_branch
          %3805 = sbr.rel (%p3803) target = $region80
        $region79: #{tpu_custom_call.1} parent=71 // pred_region
          %s3806 = sand.u32 %s260, 1
          %s3807 = scalar_lea.sflag [#allocation7], %s3806
          %s3808 = sand.u32 %s260, 1
          %s3809 = smul.addr %s3808, 16
          %s3810 = scalar_lea.vmem [#allocation6], %s3809
          %3811 = dma.done %s3807, 256
        $region80: #{tpu_custom_call.1} parent=71 // pred_fallthru
          _
      $region72: #{tpu_custom_call.1} parent=5 // pred_fallthru
        _
    $region6: #{tpu_custom_call.1} parent=1 // loop_footer
      %s30 = sadd.s32 1, %s26
    $region7: #{tpu_custom_call.1} parent=1 // loop_footer_branch
      %25 = sbr.rel target = $region3
    $region8: #{tpu_custom_call.1} parent=1 // loop_exit
      _
    %3812 = vsyncpa [#allocation3], 1
    %s3813 = scalar_lea.sflag [#allocation3], 1
    %3814 = vsyncpa %s3813, 1
    %3815 = vsyncpa [#allocation4], 1
    %s3816 = scalar_lea.sflag [#allocation4], 1
    %3817 = vsyncpa %s3816, 1
    %3818 = vsyncpa [#allocation7], 1
    %s3819 = scalar_lea.sflag [#allocation7], 1
    %3820 = vsyncpa %s3819, 1

</llo_original>
